<compile_context>
chip_gen: v7x
topology: tpu7x:2x2x1
jax: 0.10.0
libtpu: 0.0.40
codegen_flags: <defaults>
</compile_context>

<pallas_src>
import functools
import math

import jax
import jax.numpy as jnp
from jax.experimental import pallas as pl
from jax.experimental.pallas import tpu as pltpu


def _sublayer1_kernel(x_ref, wq_ref, wkv_ref, wo_ref, bo_ref, gamma_ref,
                      beta_ref, o_ref, k_scr, v_scr, *, num_heads, eps, tq):
    # x_ref block : (1, S, H)  -- full sequence for one batch element.
    # o_ref block : (1, tq, H) -- one query tile.
    # k_scr/v_scr : (nh, S, hd) bf16 VMEM scratch, head-major K / V.
    qi = pl.program_id(1)
    S = x_ref.shape[1]
    H = x_ref.shape[2]
    hd = H // num_heads

    # --- K/V projection + head split, once per batch element (qi == 0) ------
    # bf16 operands on the MXU, f32 accumulation; head split / transpose done
    # here once instead of every query tile.
    @pl.when(qi == 0)
    def _():
        xb = x_ref[0].astype(jnp.bfloat16)                          # (S, H)
        kv = jnp.dot(xb, wkv_ref[...],
                     preferred_element_type=jnp.float32)            # (S, 2H) f32
        k = kv[:, :H]
        v = kv[:, H:]
        k_scr[...] = jnp.swapaxes(k.reshape(S, num_heads, hd),
                                  0, 1).astype(jnp.bfloat16)        # (nh, S, hd)
        v_scr[...] = jnp.swapaxes(v.reshape(S, num_heads, hd),
                                  0, 1).astype(jnp.bfloat16)        # (nh, S, hd)

    # --- current query tile: project only these Q rows ------------------------
    row0 = pl.multiple_of(qi * tq, tq)
    x_tile = x_ref[0, pl.ds(row0, tq), :]                           # (tq, H) f32
    # Wq already carries the 1/sqrt(hd) softmax scale (folded on the host).
    q = jnp.dot(x_tile.astype(jnp.bfloat16), wq_ref[...],
                preferred_element_type=jnp.float32)                 # (tq, H) f32
    q3 = jnp.swapaxes(q.reshape(tq, num_heads, hd),
                      0, 1).astype(jnp.bfloat16)                    # (nh, tq, hd)

    # --- head-batched scaled dot-product attention ----------------------------
    # TODO(synk): attention_mask=None path only; dropout is identity (eval).
    scores = jnp.einsum('hqd,hkd->hqk', q3, k_scr[...],
                        preferred_element_type=jnp.float32)         # (nh,tq,S) f32
    scores = scores - jnp.max(scores, axis=-1, keepdims=True)
    p = jnp.exp(scores)
    # Fused normalize + bf16 cast (single pass over the (nh, tq, S) tile);
    # denominator reciprocal goes to the EUP.
    p = (p * pl.reciprocal(jnp.sum(p, axis=-1, keepdims=True),
                           approx=True)).astype(jnp.bfloat16)
    ctx = jnp.einsum('hqk,hkd->hqd', p, v_scr[...],
                     preferred_element_type=jnp.float32)            # (nh, tq, hd)
    attn = jnp.swapaxes(ctx, 0, 1).reshape(tq, H)                   # (tq, H) f32

    # --- output projection (Linear with bias) ---------------------------------
    attn = jnp.dot(attn.astype(jnp.bfloat16), wo_ref[...],
                   preferred_element_type=jnp.float32) + bo_ref[...]  # (tq, H)

    # --- residual + LayerNorm (slp style: unbiased std, eps added to std) -----
    # All f32; the reciprocal is exact (one divide per row is essentially free).
    y = x_tile + attn
    mean = jnp.mean(y, axis=-1, keepdims=True)
    centered = y - mean
    var_unbiased = jnp.sum(centered * centered, axis=-1, keepdims=True) / (H - 1)
    inv = 1.0 / (jnp.sqrt(var_unbiased) + eps)                      # (tq, 1)
    out = gamma_ref[...] * (centered * inv) + beta_ref[...]

    o_ref[0] = out.astype(o_ref.dtype)


def sublayer1(x, wq, wk, wv, wo, bo, gamma, beta, *, num_heads=8, eps=1e-6,
              tq=None):
    B, S, H = x.shape
    assert H % num_heads == 0
    hd = H // num_heads
    if tq is None:
        # tq <= 128 keeps the materialized (nh, tq, S) scores modest on v7x's
        # 64 MiB VMEM; raise to 256 on v6e for more MXU M if desired.
        tq = S if S <= 128 else 128
    assert S % tq == 0
    n_q_tiles = S // tq

    # Fold the 1/sqrt(head_dim) softmax scale into Wq (exact: power of two for
    # hd = 16 / 64). K/V projections fused into one (H, 2H) matrix. All matmul
    # weights shipped in bf16 (half the DMA bytes / VMEM residency).
    scale = 1.0 / math.sqrt(hd)
    wq_b = (wq * scale).astype(jnp.bfloat16)                        # (H, H)
    wkv = jnp.concatenate([wk, wv], axis=1).astype(jnp.bfloat16)    # (H, 2H)
    wo_b = wo.astype(jnp.bfloat16)                                  # (H, H)
    bo2 = bo.reshape(1, H).astype(jnp.float32)
    gamma2 = gamma.reshape(1, H).astype(jnp.float32)
    beta2 = beta.reshape(1, H).astype(jnp.float32)

    kern = functools.partial(_sublayer1_kernel, num_heads=num_heads, eps=eps,
                             tq=tq)
    const = lambda b, qi: (0, 0)                  # resident weights / biases

    # Rough per-step VMEM working-set estimate; pass an explicit scoped-VMEM
    # limit only when it exceeds the conservative defaults (v5e 16 MiB /
    # v6e & v7x 32 MiB). Demo shapes stay on compiler defaults.
    vmem_est = (
        2 * S * H * 4                     # x block, double-buffered, f32
        + 2 * S * H * 2                   # K / V scratch, bf16
        + 2 * num_heads * tq * S * 4      # scores + exp temporaries, f32
        + num_heads * tq * S * 2          # p, bf16
        + 2 * tq * H * 4 * 2              # output block (dbl-buffered) + misc
        + (H * H + H * 2 * H + H * H) * 2 * 2  # bf16 weights, dbl-buffered
    )
    cp_kwargs = dict(dimension_semantics=("parallel", "arbitrary"))
    if vmem_est > (14 << 20):
        cp_kwargs["vmem_limit_bytes"] = int(min(vmem_est * 1.5, 100 << 20))

    return pl.pallas_call(
        kern,
        out_shape=jax.ShapeDtypeStruct((B, S, H), x.dtype),
        grid_spec=pltpu.PrefetchScalarGridSpec(
            num_scalar_prefetch=0,
            grid=(B, n_q_tiles),
            in_specs=[
                pl.BlockSpec((1, S, H), lambda b, qi: (b, 0, 0)),   # x (full seq)
                pl.BlockSpec((H, H), const),                        # Wq (pre-scaled)
                pl.BlockSpec((H, 2 * H), const),                    # fused Wk|Wv
                pl.BlockSpec((H, H), const),                        # Wo
                pl.BlockSpec((1, H), const),                        # bo
                pl.BlockSpec((1, H), const),                        # gamma
                pl.BlockSpec((1, H), const),                        # beta
            ],
            out_specs=pl.BlockSpec((1, tq, H), lambda b, qi: (b, qi, 0)),
            scratch_shapes=[
                pltpu.VMEM((num_heads, S, hd), jnp.bfloat16),       # K, head-major
                pltpu.VMEM((num_heads, S, hd), jnp.bfloat16),       # V, head-major
            ],
        ),
        compiler_params=pltpu.CompilerParams(**cp_kwargs),
    )(x, wq_b, wkv, wo_b, bo2, gamma2, beta2)


if __name__ == "__main__":
    # Small, module-consistent shapes: hidden=128, heads=8 (head_dim=16),
    # B=2, S=16. H=128 keeps the output block lane-dense.
    B, S, H, NH = 2, 16, 128, 8
    key = jax.random.PRNGKey(0)
    kx, kq, kk, kv, ko, kb = jax.random.split(key, 6)

    x = jax.random.normal(kx, (B, S, H), dtype=jnp.float32)

    # Deterministic parameter init (xavier-ish scaling). Weights are stored as
    # (H_in, H_out) so the kernel uses x @ W directly (equivalent to torch's
    # x @ weight.T with weight of shape (out, in)).
    w_scale = 1.0 / math.sqrt(H)
    wq = jax.random.normal(kq, (H, H), dtype=jnp.float32) * w_scale
    wk = jax.random.normal(kk, (H, H), dtype=jnp.float32) * w_scale
    wv = jax.random.normal(kv, (H, H), dtype=jnp.float32) * w_scale
    wo = jax.random.normal(ko, (H, H), dtype=jnp.float32) * w_scale
    bo = jax.random.normal(kb, (H,), dtype=jnp.float32) * 0.01
    gamma = jnp.ones((H,), dtype=jnp.float32)   # LayerNorm scale
    beta = jnp.zeros((H,), dtype=jnp.float32)   # LayerNorm shift

    out = sublayer1(x, wq, wk, wv, wo, bo, gamma, beta, num_heads=NH)
    out = jax.block_until_ready(out)
    assert out.shape == (B, S, H) and out.dtype == jnp.float32
    assert bool(jnp.all(jnp.isfinite(out)))
    print("KERNEL_OK")
</pallas_src>

<mosaic_0001>
module attributes {stable_mosaic.version = 11 : i64} {
  func.func @_sublayer1_kernel(%arg0: i32, %arg1: i32, %arg2: memref<1x16x128xf32, #tpu.memory_space<vmem>>, %arg3: memref<128x128xbf16, #tpu.memory_space<vmem>>, %arg4: memref<128x256xbf16, #tpu.memory_space<vmem>>, %arg5: memref<128x128xbf16, #tpu.memory_space<vmem>>, %arg6: memref<1x128xf32, #tpu.memory_space<vmem>>, %arg7: memref<1x128xf32, #tpu.memory_space<vmem>>, %arg8: memref<1x128xf32, #tpu.memory_space<vmem>>, %arg9: memref<1x16x128xf32, #tpu.memory_space<vmem>>, %arg10: memref<8x16x16xbf16, #tpu.memory_space<vmem>>, %arg11: memref<8x16x16xbf16, #tpu.memory_space<vmem>>) attributes {dimension_semantics = [#tpu.dimension_semantics<parallel>, #tpu.dimension_semantics<arbitrary>], iteration_bounds = array<i64: 2, 1>, scalar_prefetch = 0 : i64, scratch_operands = 2 : i64, tpu.core_type = #tpu.core_type<tc>, window_params = [{transform_indices = @transform_0, window_bounds = array<i64: 1, 16, 128>}, {pipeline_mode = #tpu.pipeline_mode<synchronous>, transform_indices = @transform_1, window_bounds = array<i64: 128, 128>}, {pipeline_mode = #tpu.pipeline_mode<synchronous>, transform_indices = @transform_2, window_bounds = array<i64: 128, 256>}, {pipeline_mode = #tpu.pipeline_mode<synchronous>, transform_indices = @transform_3, window_bounds = array<i64: 128, 128>}, {pipeline_mode = #tpu.pipeline_mode<synchronous>, transform_indices = @transform_4, window_bounds = array<i64: 1, 128>}, {pipeline_mode = #tpu.pipeline_mode<synchronous>, transform_indices = @transform_5, window_bounds = array<i64: 1, 128>}, {pipeline_mode = #tpu.pipeline_mode<synchronous>, transform_indices = @transform_6, window_bounds = array<i64: 1, 128>}, {transform_indices = @transform_7, window_bounds = array<i64: 1, 16, 128>}]} {
    %c0_i32 = arith.constant 0 : i32
    %0 = arith.cmpi eq, %arg1, %c0_i32 : i32
    %1 = arith.extui %0 : i1 to i32
    %c0_i32_0 = arith.constant 0 : i32
    %2 = arith.cmpi ne, %1, %c0_i32_0 : i32
    scf.if %2 {
      %c0_32 = arith.constant 0 : index
      %c0_33 = arith.constant 0 : index
      %c0_34 = arith.constant 0 : index
      %65 = vector.load %arg2[%c0_32, %c0_33, %c0_34] : memref<1x16x128xf32, #tpu.memory_space<vmem>>, vector<1x16x128xf32>
      %66 = vector.shape_cast %65 : vector<1x16x128xf32> to vector<16x128xf32>
      %67 = arith.truncf %66 : vector<16x128xf32> to vector<16x128xbf16>
      %c0_35 = arith.constant 0 : index
      %c0_36 = arith.constant 0 : index
      %68 = vector.load %arg4[%c0_35, %c0_36] : memref<128x256xbf16, #tpu.memory_space<vmem>>, vector<128x256xbf16>
      %cst_37 = arith.constant dense<0.000000e+00> : vector<16x256xf32>
      %69 = tpu.matmul %67, %68, %cst_37 {dimension_numbers = #tpu.dot_dimension_numbers<[1], [0], [0], [1], [0, 0, 1, 1], [], []>} : vector<16x128xbf16>, vector<128x256xbf16>, vector<16x256xf32> -> vector<16x256xf32>
      %70 = vector.extract_strided_slice %69 {offsets = [0, 0], sizes = [16, 128], strides = [1, 1]} : vector<16x256xf32> to vector<16x128xf32>
      %71 = vector.extract_strided_slice %69 {offsets = [0, 128], sizes = [16, 128], strides = [1, 1]} : vector<16x256xf32> to vector<16x128xf32>
      %72 = vector.shape_cast %70 : vector<16x128xf32> to vector<16x8x16xf32>
      %73 = tpu.transpose %72, [1, 0, 2] : vector<16x8x16xf32> -> vector<8x16x16xf32>
      %74 = arith.truncf %73 : vector<8x16x16xf32> to vector<8x16x16xbf16>
      %c0_38 = arith.constant 0 : index
      %c0_39 = arith.constant 0 : index
      %c0_40 = arith.constant 0 : index
      %75 = vector.load %arg10[%c0_38, %c0_39, %c0_40] : memref<8x16x16xbf16, #tpu.memory_space<vmem>>, vector<8x16x16xbf16>
      tpu.vector_store %arg10[%c0_38, %c0_39, %c0_40], %74 {strides = array<i32>} : memref<8x16x16xbf16, #tpu.memory_space<vmem>>, vector<8x16x16xbf16>,
      %76 = vector.shape_cast %71 : vector<16x128xf32> to vector<16x8x16xf32>
      %77 = tpu.transpose %76, [1, 0, 2] : vector<16x8x16xf32> -> vector<8x16x16xf32>
      %78 = arith.truncf %77 : vector<8x16x16xf32> to vector<8x16x16xbf16>
      %c0_41 = arith.constant 0 : index
      %c0_42 = arith.constant 0 : index
      %c0_43 = arith.constant 0 : index
      %79 = vector.load %arg11[%c0_41, %c0_42, %c0_43] : memref<8x16x16xbf16, #tpu.memory_space<vmem>>, vector<8x16x16xbf16>
      tpu.vector_store %arg11[%c0_41, %c0_42, %c0_43], %78 {strides = array<i32>} : memref<8x16x16xbf16, #tpu.memory_space<vmem>>, vector<8x16x16xbf16>,
    } else {
    }
    %c16_i32 = arith.constant 16 : i32
    %3 = arith.muli %arg1, %c16_i32 : i32
    %4 = tpu.assume_multiple %3, 16 : i32
    %c0 = arith.constant 0 : index
    %5 = arith.index_cast %4 : i32 to index
    %c0_1 = arith.constant 0 : index
    %6 = vector.load %arg2[%c0, %5, %c0_1] : memref<1x16x128xf32, #tpu.memory_space<vmem>>, vector<1x16x128xf32>
    %7 = vector.shape_cast %6 : vector<1x16x128xf32> to vector<16x128xf32>
    %8 = arith.truncf %7 : vector<16x128xf32> to vector<16x128xbf16>
    %c0_2 = arith.constant 0 : index
    %c0_3 = arith.constant 0 : index
    %9 = vector.load %arg3[%c0_2, %c0_3] : memref<128x128xbf16, #tpu.memory_space<vmem>>, vector<128x128xbf16>
    %cst = arith.constant dense<0.000000e+00> : vector<16x128xf32>
    %10 = tpu.matmul %8, %9, %cst {dimension_numbers = #tpu.dot_dimension_numbers<[1], [0], [0], [1], [0, 0, 1, 1], [], []>} : vector<16x128xbf16>, vector<128x128xbf16>, vector<16x128xf32> -> vector<16x128xf32>
    %11 = vector.shape_cast %10 : vector<16x128xf32> to vector<16x8x16xf32>
    %12 = tpu.transpose %11, [1, 0, 2] : vector<16x8x16xf32> -> vector<8x16x16xf32>
    %13 = arith.truncf %12 : vector<8x16x16xf32> to vector<8x16x16xbf16>
    %c0_4 = arith.constant 0 : index
    %c0_5 = arith.constant 0 : index
    %c0_6 = arith.constant 0 : index
    %14 = vector.load %arg10[%c0_4, %c0_5, %c0_6] : memref<8x16x16xbf16, #tpu.memory_space<vmem>>, vector<8x16x16xbf16>
    "tpu.trace_start"() <{level = 10 : i32, message = "hqd,hkd->hqk"}> : () -> ()
    %cst_7 = arith.constant dense<0.000000e+00> : vector<8x16x16xf32>
    %15 = tpu.matmul %13, %14, %cst_7 {dimension_numbers = #tpu.dot_dimension_numbers<[2], [2], [1], [1], [0, 0, 0, 1, 1, 1], [0], [0]>} : vector<8x16x16xbf16>, vector<8x16x16xbf16>, vector<8x16x16xf32> -> vector<8x16x16xf32>
    "tpu.trace_stop"() : () -> ()
    %cst_8 = arith.constant dense<0xFF800000> : vector<8x16xf32>
    %16 = vector.multi_reduction <maximumf>, %15, %cst_8 [2] : vector<8x16x16xf32> to vector<8x16xf32>
    %17 = vector.shape_cast %16 : vector<8x16xf32> to vector<8x16x1xf32>
    %18 = vector.broadcast %17 : vector<8x16x1xf32> to vector<8x16x16xf32>
    %19 = arith.subf %15, %18 : vector<8x16x16xf32>
    %20 = math.exp %19 : vector<8x16x16xf32>
    %cst_9 = arith.constant dense<0.000000e+00> : vector<8x16xf32>
    %21 = vector.multi_reduction <add>, %20, %cst_9 [2] : vector<8x16x16xf32> to vector<8x16xf32>
    %22 = vector.shape_cast %21 : vector<8x16xf32> to vector<8x16x1xf32>
    %23 = tpu.reciprocal %22 {approx = true} : vector<8x16x1xf32> -> vector<8x16x1xf32>
    %24 = vector.broadcast %23 : vector<8x16x1xf32> to vector<8x16x16xf32>
    %25 = arith.mulf %20, %24 : vector<8x16x16xf32>
    %26 = arith.truncf %25 : vector<8x16x16xf32> to vector<8x16x16xbf16>
    %c0_10 = arith.constant 0 : index
    %c0_11 = arith.constant 0 : index
    %c0_12 = arith.constant 0 : index
    %27 = vector.load %arg11[%c0_10, %c0_11, %c0_12] : memref<8x16x16xbf16, #tpu.memory_space<vmem>>, vector<8x16x16xbf16>
    "tpu.trace_start"() <{level = 10 : i32, message = "hqk,hkd->hqd"}> : () -> ()
    %cst_13 = arith.constant dense<0.000000e+00> : vector<8x16x16xf32>
    %28 = tpu.matmul %26, %27, %cst_13 {dimension_numbers = #tpu.dot_dimension_numbers<[2], [1], [1], [2], [0, 0, 0, 1, 1, 2], [0], [0]>} : vector<8x16x16xbf16>, vector<8x16x16xbf16>, vector<8x16x16xf32> -> vector<8x16x16xf32>
    "tpu.trace_stop"() : () -> ()
    %29 = tpu.transpose %28, [1, 0, 2] : vector<8x16x16xf32> -> vector<16x8x16xf32>
    %30 = vector.shape_cast %29 : vector<16x8x16xf32> to vector<16x128xf32>
    %31 = arith.truncf %30 : vector<16x128xf32> to vector<16x128xbf16>
    %c0_14 = arith.constant 0 : index
    %c0_15 = arith.constant 0 : index
    %32 = vector.load %arg5[%c0_14, %c0_15] : memref<128x128xbf16, #tpu.memory_space<vmem>>, vector<128x128xbf16>
    %cst_16 = arith.constant dense<0.000000e+00> : vector<16x128xf32>
    %33 = tpu.matmul %31, %32, %cst_16 {dimension_numbers = #tpu.dot_dimension_numbers<[1], [0], [0], [1], [0, 0, 1, 1], [], []>} : vector<16x128xbf16>, vector<128x128xbf16>, vector<16x128xf32> -> vector<16x128xf32>
    %c0_17 = arith.constant 0 : index
    %c0_18 = arith.constant 0 : index
    %34 = vector.load %arg6[%c0_17, %c0_18] : memref<1x128xf32, #tpu.memory_space<vmem>>, vector<1x128xf32>
    %35 = vector.broadcast %34 : vector<1x128xf32> to vector<16x128xf32>
    %36 = arith.addf %33, %35 : vector<16x128xf32>
    %37 = arith.addf %7, %36 : vector<16x128xf32>
    %cst_19 = arith.constant dense<0.000000e+00> : vector<16xf32>
    %38 = vector.multi_reduction <add>, %37, %cst_19 [1] : vector<16x128xf32> to vector<16xf32>
    %39 = vector.shape_cast %38 : vector<16xf32> to vector<16x1xf32>
    %cst_20 = arith.constant 1.280000e+02 : f32
    %40 = vector.broadcast %cst_20 : f32 to vector<16x1xf32>
    %41 = arith.divf %39, %40 : vector<16x1xf32>
    %42 = vector.broadcast %41 : vector<16x1xf32> to vector<16x128xf32>
    %43 = arith.subf %37, %42 : vector<16x128xf32>
    %44 = arith.mulf %43, %43 : vector<16x128xf32>
    %cst_21 = arith.constant dense<0.000000e+00> : vector<16xf32>
    %45 = vector.multi_reduction <add>, %44, %cst_21 [1] : vector<16x128xf32> to vector<16xf32>
    %46 = vector.shape_cast %45 : vector<16xf32> to vector<16x1xf32>
    %cst_22 = arith.constant 1.270000e+02 : f32
    %47 = vector.broadcast %cst_22 : f32 to vector<16x1xf32>
    %48 = arith.divf %46, %47 : vector<16x1xf32>
    %49 = math.sqrt %48 : vector<16x1xf32>
    %cst_23 = arith.constant 9.99999997E-7 : f32
    %50 = vector.broadcast %cst_23 : f32 to vector<16x1xf32>
    %51 = arith.addf %49, %50 : vector<16x1xf32>
    %cst_24 = arith.constant 1.000000e+00 : f32
    %52 = vector.broadcast %cst_24 : f32 to vector<16x1xf32>
    %53 = arith.divf %52, %51 : vector<16x1xf32>
    %c0_25 = arith.constant 0 : index
    %c0_26 = arith.constant 0 : index
    %54 = vector.load %arg7[%c0_25, %c0_26] : memref<1x128xf32, #tpu.memory_space<vmem>>, vector<1x128xf32>
    %55 = vector.broadcast %53 : vector<16x1xf32> to vector<16x128xf32>
    %56 = arith.mulf %43, %55 : vector<16x128xf32>
    %57 = vector.broadcast %54 : vector<1x128xf32> to vector<16x128xf32>
    %58 = arith.mulf %57, %56 : vector<16x128xf32>
    %c0_27 = arith.constant 0 : index
    %c0_28 = arith.constant 0 : index
    %59 = vector.load %arg8[%c0_27, %c0_28] : memref<1x128xf32, #tpu.memory_space<vmem>>, vector<1x128xf32>
    %60 = vector.broadcast %59 : vector<1x128xf32> to vector<16x128xf32>
    %61 = arith.addf %58, %60 : vector<16x128xf32>
    %c0_29 = arith.constant 0 : index
    %c0_30 = arith.constant 0 : index
    %c0_31 = arith.constant 0 : index
    %62 = vector.load %arg9[%c0_29, %c0_30, %c0_31] : memref<1x16x128xf32, #tpu.memory_space<vmem>>, vector<1x16x128xf32>
    %63 = vector.shape_cast %62 : vector<1x16x128xf32> to vector<16x128xf32>
    %64 = vector.shape_cast %61 : vector<16x128xf32> to vector<1x16x128xf32>
    tpu.vector_store %arg9[%c0_29, %c0_30, %c0_31], %64 {strides = array<i32>} : memref<1x16x128xf32, #tpu.memory_space<vmem>>, vector<1x16x128xf32>,
    return
  }
  func.func @transform_0(%arg0: i32, %arg1: i32) -> (i32, i32, i32) {
    %c0_i32 = arith.constant 0 : i32
    %c0_i32_0 = arith.constant 0 : i32
    %c0_i32_1 = arith.constant 0 : i32
    return %arg0, %c0_i32, %c0_i32_0 : i32, i32, i32
  }
  func.func @transform_1(%arg0: i32, %arg1: i32) -> (i32, i32) {
    %c0_i32 = arith.constant 0 : i32
    %c0_i32_0 = arith.constant 0 : i32
    %c0_i32_1 = arith.constant 0 : i32
    return %c0_i32, %c0_i32_0 : i32, i32
  }
  func.func @transform_2(%arg0: i32, %arg1: i32) -> (i32, i32) {
    %c0_i32 = arith.constant 0 : i32
    %c0_i32_0 = arith.constant 0 : i32
    %c0_i32_1 = arith.constant 0 : i32
    return %c0_i32, %c0_i32_0 : i32, i32
  }
  func.func @transform_3(%arg0: i32, %arg1: i32) -> (i32, i32) {
    %c0_i32 = arith.constant 0 : i32
    %c0_i32_0 = arith.constant 0 : i32
    %c0_i32_1 = arith.constant 0 : i32
    return %c0_i32, %c0_i32_0 : i32, i32
  }
  func.func @transform_4(%arg0: i32, %arg1: i32) -> (i32, i32) {
    %c0_i32 = arith.constant 0 : i32
    %c0_i32_0 = arith.constant 0 : i32
    %c0_i32_1 = arith.constant 0 : i32
    return %c0_i32, %c0_i32_0 : i32, i32
  }
  func.func @transform_5(%arg0: i32, %arg1: i32) -> (i32, i32) {
    %c0_i32 = arith.constant 0 : i32
    %c0_i32_0 = arith.constant 0 : i32
    %c0_i32_1 = arith.constant 0 : i32
    return %c0_i32, %c0_i32_0 : i32, i32
  }
  func.func @transform_6(%arg0: i32, %arg1: i32) -> (i32, i32) {
    %c0_i32 = arith.constant 0 : i32
    %c0_i32_0 = arith.constant 0 : i32
    %c0_i32_1 = arith.constant 0 : i32
    return %c0_i32, %c0_i32_0 : i32, i32
  }
  func.func @transform_7(%arg0: i32, %arg1: i32) -> (i32, i32, i32) {
    %c0_i32 = arith.constant 0 : i32
    %c0_i32_0 = arith.constant 0 : i32
    return %arg0, %arg1, %c0_i32 : i32, i32, i32
  }
}

</mosaic_0001>

<llo_original>
// kernel: tpu_custom_call.1
$region0: #{tpu_custom_call.1}
  #allocation0 [shape = 'u32[]', space=smem, size = 0x4, offset = 0x4, fixed_abs, tag = 'smem constant byte address 0x4 - core index']
  #allocation1 [shape = 'u32[144,128]{1,0:T(1,128)}', space=vmem, size = 0x12000, scoped, tag = 'internal scratch']
  #allocation2 [shape = 'bf16[8,16,16]{2,1,0:T(16,128)(2,1)}', space=vmem, size = 0x8000, scoped, tag = 'scratch operand']
  #allocation3 [shape = 'bf16[8,16,16]{2,1,0:T(16,128)(2,1)}', space=vmem, size = 0x8000, scoped, tag = 'scratch operand']
  %s0 = inlined_call_operand.hbm [shape: f32[2,16,128], index: 0, kind: input, shape index: {}]
  %s1 = inlined_call_operand.hbm [shape: bf16[128,128], index: 1, kind: input, shape index: {}]
  %s2 = inlined_call_operand.hbm [shape: bf16[128,256], index: 2, kind: input, shape index: {}]
  %s3 = inlined_call_operand.hbm [shape: bf16[128,128], index: 3, kind: input, shape index: {}]
  %s4 = inlined_call_operand.vmem [shape: f32[1,128], index: 4, kind: input, shape index: {}]
  %s5 = inlined_call_operand.vmem [shape: f32[1,128], index: 5, kind: input, shape index: {}]
  %s6 = inlined_call_operand.vmem [shape: f32[1,128], index: 6, kind: input, shape index: {}]
  %s7 = inlined_call_operand.hbm [shape: f32[2,16,128], index: 7, kind: output, shape index: {}]
  %s8 = sld [smem:[#allocation0]]
  $region81: #{tpu_custom_call.1} parent=0
    _
  %s10 = ssub.s32 1, %s8
  %s11 = scalar_select 0, %s10, %s8
  $region1: #{tpu_custom_call.1} parent=0
    #allocation4 [shape = 'u8[16384]{0}', space=vmem, size = 0x4000, scoped, tag = 'input window, operand 0']
    #allocation5 [shape = 's32[2]{0}', space=sflag, size = 0x8, scoped, tag = 'scoped memory for tpu_custom_call.1']
    #allocation6 [shape = 's32[2]{0}', space=sflag, size = 0x8, scoped, tag = 'scoped memory for tpu_custom_call.1']
    #allocation7 [shape = 'u8[32768]{0}', space=vmem, size = 0x8000, scoped, tag = 'input window, operand 1, single buffered']
    #allocation8 [shape = 's32[1]{0}', space=sflag, size = 0x4, scoped, tag = 'scoped memory for tpu_custom_call.1']
    #allocation9 [shape = 'u8[65536]{0}', space=vmem, size = 0x10000, scoped, tag = 'input window, operand 2, single buffered']
    #allocation10 [shape = 'u8[32768]{0}', space=vmem, size = 0x8000, scoped, tag = 'input window, operand 3, single buffered']
    #allocation11 [shape = 's32[1]{0}', space=sflag, size = 0x4, scoped, tag = 'scoped memory for tpu_custom_call.1']
    #allocation12 [shape = 'u8[16384]{0}', space=vmem, size = 0x4000, scoped, tag = 'output window, operand 0']
    %12 = vsyncpa [#allocation5], 0
    %s13 = scalar_lea.sflag [#allocation5], 1
    %14 = vsyncpa %s13, 0
    %15 = vsyncpa [#allocation8], 0
    %16 = vsyncpa [#allocation11], 0
    %17 = vsyncpa [#allocation6], 0
    %s18 = scalar_lea.sflag [#allocation6], 1
    %19 = vsyncpa %s18, 0
    loop: start=0, step=1, limit=4
    $region2: #{tpu_custom_call.1} parent=1 // loop_pre_header
      _
    $region3: #{tpu_custom_call.1} parent=1 // loop_header
      %s21 = sphi 0, %s25
      %p22 = scmp.ge.s32.totalorder %s21, 4
      %s28 = sphi 0, %s40
      %s29 = sphi 0, %s36
      %s30 = sphi 0, %s28
      %s31 = sphi 0, %s29
      %s32 = sphi 0, %s30
      %s33 = sphi 0, %s31
      %s43 = sphi 0, %s45
      %s46 = sphi 0, %s43
      %s47 = sphi 0, %s46
      %s63 = sphi 0, %s47
      %s67 = sphi 0, %s67
      %s69 = sphi 0, %s67
      %s70 = sphi 0, %s69
      %s84 = sphi 0, %s70
      %s88 = sphi 0, %s88
      %s90 = sphi 0, %s88
      %s91 = sphi 0, %s90
      %s105 = sphi 0, %s91
      %s109 = sphi 0, %s109
      %s111 = sphi 0, %s109
      %s112 = sphi 0, %s111
      %s126 = sphi 0, %s112
      %s130 = sphi 0, %s130
      %s132 = sphi 0, %s130
      %s133 = sphi 0, %s132
      %s147 = sphi 0, %s133
      %s151 = sphi 0, %s151
      %s153 = sphi 0, %s151
      %s154 = sphi 0, %s153
      %s168 = sphi 0, %s154
      %s172 = sphi 0, %s172
      %s174 = sphi 0, %s172
      %s175 = sphi 0, %s174
      %s189 = sphi 0, %s175
      %s197 = sphi 0, %s199
      %s200 = sphi 0, %s197
      %s201 = sphi 0, %s200
      %s217 = sphi 0, %s201
    $region4: #{tpu_custom_call.1} parent=1 // loop_header_branch
      %24 = sbr.rel (%p22) target = $region8
    $region5: #{tpu_custom_call.1} parent=1 // loop_body
      %s26 = ssub.s32 %s21, 1
      %s27 = ssub.s32 %s21, 2
      %s34 = sadd.s32 1, %s29
      %p35 = scmp.ge.s32.totalorder %s34, 1
      %s36 = scalar_select %p35, 0, %s34
      %s37 = sadd.s32 1, %s28
      %s38 = scalar_select %p35, %s37, %s28
      %p39 = scmp.ge.s32.totalorder %s38, 2
      %s40 = scalar_select %p39, 0, %s38
      %s41 = ssub.s32 %s28, %s40
      %p42 = scmp.eq.s32.totalorder %s41, 0
      %s44 = sadd.s32 %s43, 1
      %s45 = scalar_select %p42, %s43, %s44
      %p48 = pneg %p42
      %p49 = scmp.eq.s32.totalorder %s21, 1
      %p50 = por %p48, %p49
      %p51 = scmp.ne.s32.totalorder %s43, %s46
      %p52 = scmp.eq.s32.totalorder %s21, 0
      %p53 = por %p51, %p52
      %p54 = scmp.ne.s32.totalorder %s43, %s46
      %p55 = scmp.eq.s32.totalorder %s26, 1
      %p56 = por %p54, %p55
      %p57 = scmp.ne.s32.totalorder %s46, %s47
      %p58 = scmp.eq.s32.totalorder %s26, 0
      %p59 = por %p57, %p58
      %p60 = scmp.ne.s32.totalorder %s46, %s47
      %p61 = scmp.eq.s32.totalorder %s27, 1
      %p62 = por %p60, %p61
      %p64 = scmp.ne.s32.totalorder %s47, %s63
      %p65 = scmp.eq.s32.totalorder %s27, 0
      %p66 = por %p64, %p65
      %s68 = sadd.s32 %s67, 1
      %p71 = scmp.eq.s32.totalorder %s21, 1
      %p72 = scmp.ne.s32.totalorder %s67, %s69
      %p73 = scmp.eq.s32.totalorder %s21, 0
      %p74 = por %p72, %p73
      %p75 = scmp.ne.s32.totalorder %s67, %s69
      %p76 = scmp.eq.s32.totalorder %s26, 1
      %p77 = por %p75, %p76
      %p78 = scmp.ne.s32.totalorder %s69, %s70
      %p79 = scmp.eq.s32.totalorder %s26, 0
      %p80 = por %p78, %p79
      %p81 = scmp.ne.s32.totalorder %s69, %s70
      %p82 = scmp.eq.s32.totalorder %s27, 1
      %p83 = por %p81, %p82
      %p85 = scmp.ne.s32.totalorder %s70, %s84
      %p86 = scmp.eq.s32.totalorder %s27, 0
      %p87 = por %p85, %p86
      %s89 = sadd.s32 %s88, 1
      %p92 = scmp.eq.s32.totalorder %s21, 1
      %p93 = scmp.ne.s32.totalorder %s88, %s90
      %p94 = scmp.eq.s32.totalorder %s21, 0
      %p95 = por %p93, %p94
      %p96 = scmp.ne.s32.totalorder %s88, %s90
      %p97 = scmp.eq.s32.totalorder %s26, 1
      %p98 = por %p96, %p97
      %p99 = scmp.ne.s32.totalorder %s90, %s91
      %p100 = scmp.eq.s32.totalorder %s26, 0
      %p101 = por %p99, %p100
      %p102 = scmp.ne.s32.totalorder %s90, %s91
      %p103 = scmp.eq.s32.totalorder %s27, 1
      %p104 = por %p102, %p103
      %p106 = scmp.ne.s32.totalorder %s91, %s105
      %p107 = scmp.eq.s32.totalorder %s27, 0
      %p108 = por %p106, %p107
      %s110 = sadd.s32 %s109, 1
      %p113 = scmp.eq.s32.totalorder %s21, 1
      %p114 = scmp.ne.s32.totalorder %s109, %s111
      %p115 = scmp.eq.s32.totalorder %s21, 0
      %p116 = por %p114, %p115
      %p117 = scmp.ne.s32.totalorder %s109, %s111
      %p118 = scmp.eq.s32.totalorder %s26, 1
      %p119 = por %p117, %p118
      %p120 = scmp.ne.s32.totalorder %s111, %s112
      %p121 = scmp.eq.s32.totalorder %s26, 0
      %p122 = por %p120, %p121
      %p123 = scmp.ne.s32.totalorder %s111, %s112
      %p124 = scmp.eq.s32.totalorder %s27, 1
      %p125 = por %p123, %p124
      %p127 = scmp.ne.s32.totalorder %s112, %s126
      %p128 = scmp.eq.s32.totalorder %s27, 0
      %p129 = por %p127, %p128
      %s131 = sadd.s32 %s130, 1
      %p134 = scmp.eq.s32.totalorder %s21, 1
      %p135 = scmp.ne.s32.totalorder %s130, %s132
      %p136 = scmp.eq.s32.totalorder %s21, 0
      %p137 = por %p135, %p136
      %p138 = scmp.ne.s32.totalorder %s130, %s132
      %p139 = scmp.eq.s32.totalorder %s26, 1
      %p140 = por %p138, %p139
      %p141 = scmp.ne.s32.totalorder %s132, %s133
      %p142 = scmp.eq.s32.totalorder %s26, 0
      %p143 = por %p141, %p142
      %p144 = scmp.ne.s32.totalorder %s132, %s133
      %p145 = scmp.eq.s32.totalorder %s27, 1
      %p146 = por %p144, %p145
      %p148 = scmp.ne.s32.totalorder %s133, %s147
      %p149 = scmp.eq.s32.totalorder %s27, 0
      %p150 = por %p148, %p149
      %s152 = sadd.s32 %s151, 1
      %p155 = scmp.eq.s32.totalorder %s21, 1
      %p156 = scmp.ne.s32.totalorder %s151, %s153
      %p157 = scmp.eq.s32.totalorder %s21, 0
      %p158 = por %p156, %p157
      %p159 = scmp.ne.s32.totalorder %s151, %s153
      %p160 = scmp.eq.s32.totalorder %s26, 1
      %p161 = por %p159, %p160
      %p162 = scmp.ne.s32.totalorder %s153, %s154
      %p163 = scmp.eq.s32.totalorder %s26, 0
      %p164 = por %p162, %p163
      %p165 = scmp.ne.s32.totalorder %s153, %s154
      %p166 = scmp.eq.s32.totalorder %s27, 1
      %p167 = por %p165, %p166
      %p169 = scmp.ne.s32.totalorder %s154, %s168
      %p170 = scmp.eq.s32.totalorder %s27, 0
      %p171 = por %p169, %p170
      %s173 = sadd.s32 %s172, 1
      %p176 = scmp.eq.s32.totalorder %s21, 1
      %p177 = scmp.ne.s32.totalorder %s172, %s174
      %p178 = scmp.eq.s32.totalorder %s21, 0
      %p179 = por %p177, %p178
      %p180 = scmp.ne.s32.totalorder %s172, %s174
      %p181 = scmp.eq.s32.totalorder %s26, 1
      %p182 = por %p180, %p181
      %p183 = scmp.ne.s32.totalorder %s174, %s175
      %p184 = scmp.eq.s32.totalorder %s26, 0
      %p185 = por %p183, %p184
      %p186 = scmp.ne.s32.totalorder %s174, %s175
      %p187 = scmp.eq.s32.totalorder %s27, 1
      %p188 = por %p186, %p187
      %p190 = scmp.ne.s32.totalorder %s175, %s189
      %p191 = scmp.eq.s32.totalorder %s27, 0
      %p192 = por %p190, %p191
      %s193 = ssub.s32 %s28, %s40
      %s194 = ssub.s32 %s29, %s36
      %s195 = sor.u32 %s193, %s194
      %p196 = scmp.eq.s32.totalorder %s195, 0
      %s198 = sadd.s32 %s197, 1
      %s199 = scalar_select %p196, %s197, %s198
      %p202 = pneg %p196
      %p203 = scmp.eq.s32.totalorder %s21, 1
      %p204 = por %p202, %p203
      %p205 = scmp.ne.s32.totalorder %s197, %s200
      %p206 = scmp.eq.s32.totalorder %s21, 0
      %p207 = por %p205, %p206
      %p208 = scmp.ne.s32.totalorder %s197, %s200
      %p209 = scmp.eq.s32.totalorder %s26, 1
      %p210 = por %p208, %p209
      %p211 = scmp.ne.s32.totalorder %s200, %s201
      %p212 = scmp.eq.s32.totalorder %s26, 0
      %p213 = por %p211, %p212
      %p214 = scmp.ne.s32.totalorder %s200, %s201
      %p215 = scmp.eq.s32.totalorder %s27, 1
      %p216 = por %p214, %p215
      %p218 = scmp.ne.s32.totalorder %s201, %s217
      %p219 = scmp.eq.s32.totalorder %s27, 0
      %p220 = por %p218, %p219
      %p221 = scmp.le.s32.totalorder 1, %s21
      %p222 = scmp.lt.s32.totalorder %s21, 3
      %p223 = pnand %p221, %p222
      %p224 = pneg %p223
      // Predicated region
      $region9: #{tpu_custom_call.1} parent=5 // pred_check
        _
      $region10: #{tpu_custom_call.1} parent=5 // pred_check_branch
        %226 = sbr.rel (%p223) target = $region12
      $region11: #{tpu_custom_call.1} parent=5 // pred_region
        %s227 = ssub.s32 %s21, 1
        // Predicated region
        $region13: #{tpu_custom_call.1} parent=11 // pred_check
          %p228 = pneg %p80
        $region14: #{tpu_custom_call.1} parent=11 // pred_check_branch
          %230 = sbr.rel (%p228) target = $region16
        $region15: #{tpu_custom_call.1} parent=11 // pred_region
          %s232 = ssub.s32 1024, 1024
          %233 = vsyncadd [#allocation8], %s232
          %s234 = sshll.u32 [#allocation7], 4
          %s235 = int_to_ptr.vmem [resolvable:$true] %s234
          %240 = dma.hbm_to_vmem [thread:$0]  %s1, 1024, %s235, [#allocation8], 64, 64, 4
        $region16: #{tpu_custom_call.1} parent=11 // pred_fallthru
          _
        // Predicated region
        $region17: #{tpu_custom_call.1} parent=11 // pred_check
          %p241 = pneg %p101
        $region18: #{tpu_custom_call.1} parent=11 // pred_check_branch
          %243 = sbr.rel (%p241) target = $region20
        $region19: #{tpu_custom_call.1} parent=11 // pred_region
          %s245 = ssub.s32 2048, 2048
          %246 = vsyncadd [#allocation8], %s245
          %s247 = sshll.u32 [#allocation9], 4
          %s248 = int_to_ptr.vmem [resolvable:$true] %s247
          %253 = dma.hbm_to_vmem [thread:$0]  %s2, 2048, %s248, [#allocation8], 128, 128, 8
        $region20: #{tpu_custom_call.1} parent=11 // pred_fallthru
          _
        // Predicated region
        $region21: #{tpu_custom_call.1} parent=11 // pred_check
          %p254 = pneg %p122
        $region22: #{tpu_custom_call.1} parent=11 // pred_check_branch
          %256 = sbr.rel (%p254) target = $region24
        $region23: #{tpu_custom_call.1} parent=11 // pred_region
          %s258 = ssub.s32 1024, 1024
          %259 = vsyncadd [#allocation11], %s258
          %s260 = sshll.u32 [#allocation10], 4
          %s261 = int_to_ptr.vmem [resolvable:$true] %s260
          %266 = dma.hbm_to_vmem [thread:$0]  %s3, 1024, %s261, [#allocation11], 64, 64, 4
        $region24: #{tpu_custom_call.1} parent=11 // pred_fallthru
          _
        // Predicated region
        $region25: #{tpu_custom_call.1} parent=11 // pred_check
          %p267 = pneg %p143
        $region26: #{tpu_custom_call.1} parent=11 // pred_check_branch
          %269 = sbr.rel (%p267) target = $region28
        $region27: #{tpu_custom_call.1} parent=11 // pred_region
          _
        $region28: #{tpu_custom_call.1} parent=11 // pred_fallthru
          _
        // Predicated region
        $region29: #{tpu_custom_call.1} parent=11 // pred_check
          %p270 = pneg %p164
        $region30: #{tpu_custom_call.1} parent=11 // pred_check_branch
          %272 = sbr.rel (%p270) target = $region32
        $region31: #{tpu_custom_call.1} parent=11 // pred_region
          _
        $region32: #{tpu_custom_call.1} parent=11 // pred_fallthru
          _
        // Predicated region
        $region33: #{tpu_custom_call.1} parent=11 // pred_check
          %p273 = pneg %p185
        $region34: #{tpu_custom_call.1} parent=11 // pred_check_branch
          %275 = sbr.rel (%p273) target = $region36
        $region35: #{tpu_custom_call.1} parent=11 // pred_region
          _
        $region36: #{tpu_custom_call.1} parent=11 // pred_fallthru
          _
      $region12: #{tpu_custom_call.1} parent=5 // pred_fallthru
        _
      %p276 = scmp.lt.s32.totalorder %s21, 2
      // Predicated region
      $region37: #{tpu_custom_call.1} parent=5 // pred_check
        %p277 = pneg %p276
      $region38: #{tpu_custom_call.1} parent=5 // pred_check_branch
        %279 = sbr.rel (%p277) target = $region40
      $region39: #{tpu_custom_call.1} parent=5 // pred_region
        // Predicated region
        $region41: #{tpu_custom_call.1} parent=39 // pred_check
          %p280 = pneg %p53
        $region42: #{tpu_custom_call.1} parent=39 // pred_check_branch
          %282 = sbr.rel (%p280) target = $region44
        $region43: #{tpu_custom_call.1} parent=39 // pred_region
          %s283 = sand.u32 %s43, 1
          %s284 = scalar_lea.sflag [#allocation5], %s283
          %s285 = sand.u32 %s43, 1
          %s286 = smul.addr %s285, 16
          %s287 = scalar_lea.vmem [#allocation4], %s286
          %s289 = ssub.s32 256, 256
          %290 = vsyncadd %s284, %s289
          %s291 = smul.addr %s28, 2
          %s292 = smul.addr %s291, 128
          %s293 = scalar_lea.hbm %s0, %s292
          %s294 = sshll.u32 %s287, 4
          %s295 = int_to_ptr.vmem [resolvable:$true] %s294
          %300 = dma.hbm_to_vmem [thread:$0]  %s293, 256, %s295, %s284, 128, 128, 8
        $region44: #{tpu_custom_call.1} parent=39 // pred_fallthru
          _
      $region40: #{tpu_custom_call.1} parent=5 // pred_fallthru
        _
      %p301 = scmp.le.s32.totalorder 1, %s21
      %p302 = scmp.lt.s32.totalorder %s21, 3
      %p303 = pnand %p301, %p302
      %p304 = pneg %p303
      // Predicated region
      $region45: #{tpu_custom_call.1} parent=5 // pred_check
        _
      $region46: #{tpu_custom_call.1} parent=5 // pred_check_branch
        %306 = sbr.rel (%p303) target = $region48
      $region47: #{tpu_custom_call.1} parent=5 // pred_region
        %s307 = ssub.s32 %s21, 1
        %s308 = sand.u32 %s46, 1
        %s309 = scalar_lea.sflag [#allocation5], %s308
        %s310 = sand.u32 %s46, 1
        %s311 = smul.addr %s310, 16
        %s312 = scalar_lea.vmem [#allocation4], %s311
        // Predicated region
        $region49: #{tpu_custom_call.1} parent=47 // pred_check
          %p313 = pneg %p59
        $region50: #{tpu_custom_call.1} parent=47 // pred_check_branch
          %315 = sbr.rel (%p313) target = $region52
        $region51: #{tpu_custom_call.1} parent=47 // pred_region
          %316 = dma.done %s309, 256
        $region52: #{tpu_custom_call.1} parent=47 // pred_fallthru
          _
        // Predicated region
        $region53: #{tpu_custom_call.1} parent=47 // pred_check
          %p317 = pneg %p80
        $region54: #{tpu_custom_call.1} parent=47 // pred_check_branch
          %319 = sbr.rel (%p317) target = $region56
        $region55: #{tpu_custom_call.1} parent=47 // pred_region
          %320 = dma.done [#allocation8], 1024
        $region56: #{tpu_custom_call.1} parent=47 // pred_fallthru
          _
        // Predicated region
        $region57: #{tpu_custom_call.1} parent=47 // pred_check
          %p321 = pneg %p101
        $region58: #{tpu_custom_call.1} parent=47 // pred_check_branch
          %323 = sbr.rel (%p321) target = $region60
        $region59: #{tpu_custom_call.1} parent=47 // pred_region
          %324 = dma.done [#allocation8], 2048
        $region60: #{tpu_custom_call.1} parent=47 // pred_fallthru
          _
        // Predicated region
        $region61: #{tpu_custom_call.1} parent=47 // pred_check
          %p325 = pneg %p122
        $region62: #{tpu_custom_call.1} parent=47 // pred_check_branch
          %327 = sbr.rel (%p325) target = $region64
        $region63: #{tpu_custom_call.1} parent=47 // pred_region
          %328 = dma.done [#allocation11], 1024
        $region64: #{tpu_custom_call.1} parent=47 // pred_fallthru
          _
        %s329 = sand.u32 %s46, 1
        %s330 = scalar_lea.sflag [#allocation5], %s329
        %s331 = sand.u32 %s46, 1
        %s332 = smul.addr %s331, 16
        %s333 = scalar_lea.vmem [#allocation4], %s332
        %p334 = pneg %p59
        %p335 = pneg %p56
        %p336 = pneg %p80
        %p337 = pneg %p77
        %p338 = pneg %p101
        %p339 = pneg %p98
        %p340 = pneg %p122
        %p341 = pneg %p119
        %p342 = pneg %p143
        %p343 = pneg %p140
        %p344 = pneg %p164
        %p345 = pneg %p161
        %p346 = pneg %p185
        %p347 = pneg %p182
        %p348 = pneg %p213
        %p349 = pneg %p210
        %s350 = sand.u32 %s200, 1
        %s351 = scalar_lea.sflag [#allocation6], %s350
        %s352 = sand.u32 %s200, 1
        %s353 = smul.addr %s352, 16
        %s354 = scalar_lea.vmem [#allocation12], %s353
        %s355 = smul.u32 2, %s31
        %p357 = scmp.eq.s32.totalorder %s31, 0
        // Predicated region
        $region65: #{tpu_custom_call.1} parent=47 // pred_check
          %p358 = pneg %p357
        $region66: #{tpu_custom_call.1} parent=47 // pred_check_branch
          %360 = sbr.rel (%p358) target = $region68
        $region67: #{tpu_custom_call.1} parent=47 // pred_region
          %v361 = vld [vmem:[%s312] sm:$0xff]
          %v362 = vld [vmem:[%s312 + $0x8] sm:$0xff]
          %v363 = vpack.c.bf16 %v362, %v361
          %v364 = vld [vmem:[#allocation9] sm:$0xff]
          %v365 = vld [vmem:[#allocation9 + $0x8] sm:$0xff]
          %v366 = vld [vmem:[#allocation9 + $0x10] sm:$0xff]
          %v367 = vld [vmem:[#allocation9 + $0x18] sm:$0xff]
          %v368 = vld [vmem:[#allocation9 + $0x20] sm:$0xff]
          %v369 = vld [vmem:[#allocation9 + $0x28] sm:$0xff]
          %v370 = vld [vmem:[#allocation9 + $0x30] sm:$0xff]
          %v371 = vld [vmem:[#allocation9 + $0x38] sm:$0xff]
          %v372 = vld [vmem:[#allocation9 + $0x40] sm:$0xff]
          %v373 = vld [vmem:[#allocation9 + $0x48] sm:$0xff]
          %v374 = vld [vmem:[#allocation9 + $0x50] sm:$0xff]
          %v375 = vld [vmem:[#allocation9 + $0x58] sm:$0xff]
          %v376 = vld [vmem:[#allocation9 + $0x60] sm:$0xff]
          %v377 = vld [vmem:[#allocation9 + $0x68] sm:$0xff]
          %v378 = vld [vmem:[#allocation9 + $0x70] sm:$0xff]
          %v379 = vld [vmem:[#allocation9 + $0x78] sm:$0xff]
          %v396 = vunpack.c.l.b16 %v364
          %v397 = vunpack.c.h.b16 %v364
          %v398 = vunpack.c.l.b16 %v365
          %v399 = vunpack.c.h.b16 %v365
          %v400 = vunpack.c.l.b16 %v366
          %v401 = vunpack.c.h.b16 %v366
          %v402 = vunpack.c.l.b16 %v367
          %v403 = vunpack.c.h.b16 %v367
          %v404 = vunpack.c.l.b16 %v368
          %v405 = vunpack.c.h.b16 %v368
          %v406 = vunpack.c.l.b16 %v369
          %v407 = vunpack.c.h.b16 %v369
          %v408 = vunpack.c.l.b16 %v370
          %v409 = vunpack.c.h.b16 %v370
          %v410 = vunpack.c.l.b16 %v371
          %v411 = vunpack.c.h.b16 %v371
          %v412 = vunpack.c.l.b16 %v372
          %v413 = vunpack.c.h.b16 %v372
          %v414 = vunpack.c.l.b16 %v373
          %v415 = vunpack.c.h.b16 %v373
          %v416 = vunpack.c.l.b16 %v374
          %v417 = vunpack.c.h.b16 %v374
          %v418 = vunpack.c.l.b16 %v375
          %v419 = vunpack.c.h.b16 %v375
          %v420 = vunpack.c.l.b16 %v376
          %v421 = vunpack.c.h.b16 %v376
          %v422 = vunpack.c.l.b16 %v377
          %v423 = vunpack.c.h.b16 %v377
          %v424 = vunpack.c.l.b16 %v378
          %v425 = vunpack.c.h.b16 %v378
          %v426 = vunpack.c.l.b16 %v379
          %v427 = vunpack.c.h.b16 %v379
          %v428 = vpack.c.b16 %v398, %v396
          %v429 = vpack.c.b16 %v399, %v397
          %v430 = vpack.c.b16 %v402, %v400
          %v431 = vpack.c.b16 %v403, %v401
          %v432 = vpack.c.b16 %v406, %v404
          %v433 = vpack.c.b16 %v407, %v405
          %v434 = vpack.c.b16 %v410, %v408
          %v435 = vpack.c.b16 %v411, %v409
          %v436 = vpack.c.b16 %v414, %v412
          %v437 = vpack.c.b16 %v415, %v413
          %v438 = vpack.c.b16 %v418, %v416
          %v439 = vpack.c.b16 %v419, %v417
          %v440 = vpack.c.b16 %v422, %v420
          %v441 = vpack.c.b16 %v423, %v421
          %v442 = vpack.c.b16 %v426, %v424
          %v443 = vpack.c.b16 %v427, %v425
          %460 = vmatprep.subr.bf16.mxu0 %v429
          %461 = vmatpush1.bf16.msra.mxu0 %v428
          %462 = vmatprep.subr.bf16.mxu0 %v431
          %463 = vmatpush1.bf16.msra.mxu0 %v430
          %464 = vmatprep.subr.bf16.mxu0 %v433
          %465 = vmatpush1.bf16.msra.mxu0 %v432
          %466 = vmatprep.subr.bf16.mxu0 %v435
          %467 = vmatpush1.bf16.msra.mxu0 %v434
          %468 = vmatprep.subr.bf16.mxu0 %v437
          %469 = vmatpush1.bf16.msra.mxu0 %v436
          %470 = vmatprep.subr.bf16.mxu0 %v439
          %471 = vmatpush1.bf16.msra.mxu0 %v438
          %472 = vmatprep.subr.bf16.mxu0 %v441
          %473 = vmatpush1.bf16.msra.mxu0 %v440
          %474 = vmatprep.subr.bf16.mxu0 %v443
          %475 = vmatpush1.bf16.msra.mxu0 %v442
          %476 = vmatprep.subr.bf16.mxu0 0
          %477 = vmatpush1.bf16.msra.mxu0 0
          %478 = vmatprep.subr.bf16.mxu0 0
          %479 = vmatpush1.bf16.msra.mxu0 0
          %480 = vmatprep.subr.bf16.mxu0 0
          %481 = vmatpush1.bf16.msra.mxu0 0
          %482 = vmatprep.subr.bf16.mxu0 0
          %483 = vmatpush1.bf16.msra.mxu0 0
          %484 = vmatprep.subr.bf16.mxu0 0
          %485 = vmatpush1.bf16.msra.mxu0 0
          %486 = vmatprep.subr.bf16.mxu0 0
          %487 = vmatpush1.bf16.msra.mxu0 0
          %488 = vmatprep.subr.bf16.mxu0 0
          %489 = vmatpush1.bf16.msra.mxu0 0
          %490 = vmatprep.subr.bf16.mxu0 0
          %491 = vmatpush1.bf16.msra.mxu0 0
          %492 = vmatprep.mubr.bf16.mxu0 0
          %493 = vmatmul.mubr.bf16.gmra.mrb[0].mxu0 %v363
          %v494 = vpop.f32.mrb[0].mxu0
          %v495 = vadd.f32 0.0, %v494
          %v496 = vpop.f32.mrb[0].mxu0
          %v497 = vadd.f32 0.0, %v496
          %v498 = vpop.f32.mrb[0].mxu0
          %v499 = vadd.f32 0.0, %v498
          %v500 = vpop.f32.mrb[0].mxu0
          %v501 = vadd.f32 0.0, %v500
          %502 = vdwg.mxu0
          %505 = vrot.lane.b32.xlu0 %v495, 112
          %v506 = vpop.permute.xlu0 %505
          %507 = vrot.lane.b32.xlu0 %v499, 112
          %v508 = vpop.permute.xlu0 %507
          %511 = vrot.lane.b32.xlu0 %v495, 96
          %v512 = vpop.permute.xlu0 %511
          %513 = vrot.lane.b32.xlu0 %v499, 96
          %v514 = vpop.permute.xlu0 %513
          %517 = vrot.lane.b32.xlu0 %v495, 80
          %v518 = vpop.permute.xlu0 %517
          %519 = vrot.lane.b32.xlu0 %v499, 80
          %v520 = vpop.permute.xlu0 %519
          %523 = vrot.lane.b32.xlu0 %v495, 64
          %v524 = vpop.permute.xlu0 %523
          %525 = vrot.lane.b32.xlu0 %v499, 64
          %v526 = vpop.permute.xlu0 %525
          %529 = vrot.lane.b32.xlu0 %v495, 48
          %v530 = vpop.permute.xlu0 %529
          %531 = vrot.lane.b32.xlu0 %v499, 48
          %v532 = vpop.permute.xlu0 %531
          %535 = vrot.lane.b32.xlu0 %v495, 32
          %v536 = vpop.permute.xlu0 %535
          %537 = vrot.lane.b32.xlu0 %v499, 32
          %v538 = vpop.permute.xlu0 %537
          %541 = vrot.lane.b32.xlu0 %v495, 16
          %v542 = vpop.permute.xlu0 %541
          %543 = vrot.lane.b32.xlu0 %v499, 16
          %v544 = vpop.permute.xlu0 %543
          %v547 = vcombine.low %v495, %v512
          %v548 = vcombine.high %v495, %v512
          %v550 = vunpack.c.l.s4 1983009808
          %v551 = vunpack.c.0.s8 %v550
          %v552 = vlaneseq
          %v553 = vshrl.u32 %v552, 7
          %v554 = vsub.s32 %v551, %v553
          %v555 = vrot.slane %v547, %v554
          %v557 = vunpack.c.l.s4 1983009808
          %v558 = vunpack.c.0.s8 %v557
          %v559 = vlaneseq
          %v560 = vshrl.u32 %v559, 7
          %v561 = vsub.s32 %v558, %v560
          %v562 = vrot.slane %v548, %v561
          %v563 = vcombine.low %v506, %v518
          %v564 = vcombine.high %v506, %v518
          %v566 = vunpack.c.l.s4 1983009808
          %v567 = vunpack.c.0.s8 %v566
          %v568 = vlaneseq
          %v569 = vshrl.u32 %v568, 7
          %v570 = vsub.s32 %v567, %v569
          %v571 = vrot.slane %v563, %v570
          %v573 = vunpack.c.l.s4 1983009808
          %v574 = vunpack.c.0.s8 %v573
          %v575 = vlaneseq
          %v576 = vshrl.u32 %v575, 7
          %v577 = vsub.s32 %v574, %v576
          %v578 = vrot.slane %v564, %v577
          %v579 = vcombine.low %v524, %v536
          %v580 = vcombine.high %v524, %v536
          %v582 = vunpack.c.l.s4 1983009808
          %v583 = vunpack.c.0.s8 %v582
          %v584 = vlaneseq
          %v585 = vshrl.u32 %v584, 7
          %v586 = vsub.s32 %v583, %v585
          %v587 = vrot.slane %v579, %v586
          %v589 = vunpack.c.l.s4 1983009808
          %v590 = vunpack.c.0.s8 %v589
          %v591 = vlaneseq
          %v592 = vshrl.u32 %v591, 7
          %v593 = vsub.s32 %v590, %v592
          %v594 = vrot.slane %v580, %v593
          %v595 = vcombine.low %v530, %v542
          %v596 = vcombine.high %v530, %v542
          %v598 = vunpack.c.l.s4 1983009808
          %v599 = vunpack.c.0.s8 %v598
          %v600 = vlaneseq
          %v601 = vshrl.u32 %v600, 7
          %v602 = vsub.s32 %v599, %v601
          %v603 = vrot.slane %v595, %v602
          %v605 = vunpack.c.l.s4 1983009808
          %v606 = vunpack.c.0.s8 %v605
          %v607 = vlaneseq
          %v608 = vshrl.u32 %v607, 7
          %v609 = vsub.s32 %v606, %v608
          %v610 = vrot.slane %v596, %v609
          %v611 = vcombine.low %v555, %v571
          %v612 = vcombine.high %v555, %v571
          %v614 = vunpack.c.l.s4 1934713408
          %v615 = vunpack.c.0.s8 %v614
          %v616 = vlaneseq
          %v617 = vshrl.u32 %v616, 7
          %v618 = vsub.s32 %v615, %v617
          %v619 = vrot.slane %v611, %v618
          %v621 = vunpack.c.l.s4 1934713408
          %v622 = vunpack.c.0.s8 %v621
          %v623 = vlaneseq
          %v624 = vshrl.u32 %v623, 7
          %v625 = vsub.s32 %v622, %v624
          %v626 = vrot.slane %v612, %v625
          %v627 = vcombine.low %v562, %v578
          %v628 = vcombine.high %v562, %v578
          %v630 = vunpack.c.l.s4 1934713408
          %v631 = vunpack.c.0.s8 %v630
          %v632 = vlaneseq
          %v633 = vshrl.u32 %v632, 7
          %v634 = vsub.s32 %v631, %v633
          %v635 = vrot.slane %v627, %v634
          %v637 = vunpack.c.l.s4 1934713408
          %v638 = vunpack.c.0.s8 %v637
          %v639 = vlaneseq
          %v640 = vshrl.u32 %v639, 7
          %v641 = vsub.s32 %v638, %v640
          %v642 = vrot.slane %v628, %v641
          %v643 = vcombine.low %v587, %v603
          %v644 = vcombine.high %v587, %v603
          %v646 = vunpack.c.l.s4 1934713408
          %v647 = vunpack.c.0.s8 %v646
          %v648 = vlaneseq
          %v649 = vshrl.u32 %v648, 7
          %v650 = vsub.s32 %v647, %v649
          %v651 = vrot.slane %v643, %v650
          %v653 = vunpack.c.l.s4 1934713408
          %v654 = vunpack.c.0.s8 %v653
          %v655 = vlaneseq
          %v656 = vshrl.u32 %v655, 7
          %v657 = vsub.s32 %v654, %v656
          %v658 = vrot.slane %v644, %v657
          %v659 = vcombine.low %v594, %v610
          %v660 = vcombine.high %v594, %v610
          %v662 = vunpack.c.l.s4 1934713408
          %v663 = vunpack.c.0.s8 %v662
          %v664 = vlaneseq
          %v665 = vshrl.u32 %v664, 7
          %v666 = vsub.s32 %v663, %v665
          %v667 = vrot.slane %v659, %v666
          %v669 = vunpack.c.l.s4 1934713408
          %v670 = vunpack.c.0.s8 %v669
          %v671 = vlaneseq
          %v672 = vshrl.u32 %v671, 7
          %v673 = vsub.s32 %v670, %v672
          %v674 = vrot.slane %v660, %v673
          %v675 = vcombine.low %v619, %v651
          %v676 = vcombine.high %v619, %v651
          %v677 = vcombine.low %v626, %v658
          %v678 = vcombine.high %v626, %v658
          %v679 = vcombine.low %v635, %v667
          %v680 = vcombine.high %v635, %v667
          %v681 = vcombine.low %v642, %v674
          %v682 = vcombine.high %v642, %v674
          %v683 = vcombine.low %v499, %v514
          %v684 = vcombine.high %v499, %v514
          %v686 = vunpack.c.l.s4 1983009808
          %v687 = vunpack.c.0.s8 %v686
          %v688 = vlaneseq
          %v689 = vshrl.u32 %v688, 7
          %v690 = vsub.s32 %v687, %v689
          %v691 = vrot.slane %v683, %v690
          %v693 = vunpack.c.l.s4 1983009808
          %v694 = vunpack.c.0.s8 %v693
          %v695 = vlaneseq
          %v696 = vshrl.u32 %v695, 7
          %v697 = vsub.s32 %v694, %v696
          %v698 = vrot.slane %v684, %v697
          %v699 = vcombine.low %v508, %v520
          %v700 = vcombine.high %v508, %v520
          %v702 = vunpack.c.l.s4 1983009808
          %v703 = vunpack.c.0.s8 %v702
          %v704 = vlaneseq
          %v705 = vshrl.u32 %v704, 7
          %v706 = vsub.s32 %v703, %v705
          %v707 = vrot.slane %v699, %v706
          %v709 = vunpack.c.l.s4 1983009808
          %v710 = vunpack.c.0.s8 %v709
          %v711 = vlaneseq
          %v712 = vshrl.u32 %v711, 7
          %v713 = vsub.s32 %v710, %v712
          %v714 = vrot.slane %v700, %v713
          %v715 = vcombine.low %v526, %v538
          %v716 = vcombine.high %v526, %v538
          %v718 = vunpack.c.l.s4 1983009808
          %v719 = vunpack.c.0.s8 %v718
          %v720 = vlaneseq
          %v721 = vshrl.u32 %v720, 7
          %v722 = vsub.s32 %v719, %v721
          %v723 = vrot.slane %v715, %v722
          %v725 = vunpack.c.l.s4 1983009808
          %v726 = vunpack.c.0.s8 %v725
          %v727 = vlaneseq
          %v728 = vshrl.u32 %v727, 7
          %v729 = vsub.s32 %v726, %v728
          %v730 = vrot.slane %v716, %v729
          %v731 = vcombine.low %v532, %v544
          %v732 = vcombine.high %v532, %v544
          %v734 = vunpack.c.l.s4 1983009808
          %v735 = vunpack.c.0.s8 %v734
          %v736 = vlaneseq
          %v737 = vshrl.u32 %v736, 7
          %v738 = vsub.s32 %v735, %v737
          %v739 = vrot.slane %v731, %v738
          %v741 = vunpack.c.l.s4 1983009808
          %v742 = vunpack.c.0.s8 %v741
          %v743 = vlaneseq
          %v744 = vshrl.u32 %v743, 7
          %v745 = vsub.s32 %v742, %v744
          %v746 = vrot.slane %v732, %v745
          %v747 = vcombine.low %v691, %v707
          %v748 = vcombine.high %v691, %v707
          %v750 = vunpack.c.l.s4 1934713408
          %v751 = vunpack.c.0.s8 %v750
          %v752 = vlaneseq
          %v753 = vshrl.u32 %v752, 7
          %v754 = vsub.s32 %v751, %v753
          %v755 = vrot.slane %v747, %v754
          %v757 = vunpack.c.l.s4 1934713408
          %v758 = vunpack.c.0.s8 %v757
          %v759 = vlaneseq
          %v760 = vshrl.u32 %v759, 7
          %v761 = vsub.s32 %v758, %v760
          %v762 = vrot.slane %v748, %v761
          %v763 = vcombine.low %v698, %v714
          %v764 = vcombine.high %v698, %v714
          %v766 = vunpack.c.l.s4 1934713408
          %v767 = vunpack.c.0.s8 %v766
          %v768 = vlaneseq
          %v769 = vshrl.u32 %v768, 7
          %v770 = vsub.s32 %v767, %v769
          %v771 = vrot.slane %v763, %v770
          %v773 = vunpack.c.l.s4 1934713408
          %v774 = vunpack.c.0.s8 %v773
          %v775 = vlaneseq
          %v776 = vshrl.u32 %v775, 7
          %v777 = vsub.s32 %v774, %v776
          %v778 = vrot.slane %v764, %v777
          %v779 = vcombine.low %v723, %v739
          %v780 = vcombine.high %v723, %v739
          %v782 = vunpack.c.l.s4 1934713408
          %v783 = vunpack.c.0.s8 %v782
          %v784 = vlaneseq
          %v785 = vshrl.u32 %v784, 7
          %v786 = vsub.s32 %v783, %v785
          %v787 = vrot.slane %v779, %v786
          %v789 = vunpack.c.l.s4 1934713408
          %v790 = vunpack.c.0.s8 %v789
          %v791 = vlaneseq
          %v792 = vshrl.u32 %v791, 7
          %v793 = vsub.s32 %v790, %v792
          %v794 = vrot.slane %v780, %v793
          %v795 = vcombine.low %v730, %v746
          %v796 = vcombine.high %v730, %v746
          %v798 = vunpack.c.l.s4 1934713408
          %v799 = vunpack.c.0.s8 %v798
          %v800 = vlaneseq
          %v801 = vshrl.u32 %v800, 7
          %v802 = vsub.s32 %v799, %v801
          %v803 = vrot.slane %v795, %v802
          %v805 = vunpack.c.l.s4 1934713408
          %v806 = vunpack.c.0.s8 %v805
          %v807 = vlaneseq
          %v808 = vshrl.u32 %v807, 7
          %v809 = vsub.s32 %v806, %v808
          %v810 = vrot.slane %v796, %v809
          %v811 = vcombine.low %v755, %v787
          %v812 = vcombine.high %v755, %v787
          %v813 = vcombine.low %v762, %v794
          %v814 = vcombine.high %v762, %v794
          %v815 = vcombine.low %v771, %v803
          %v816 = vcombine.high %v771, %v803
          %v817 = vcombine.low %v778, %v810
          %v818 = vcombine.high %v778, %v810
          %v819 = vcombine.low %v675, %v677
          %v820 = vcombine.high %v675, %v677
          %v822 = vunpack.c.l.s4 1983009808
          %v823 = vunpack.c.0.s8 %v822
          %v824 = vlaneseq
          %v825 = vshrl.u32 %v824, 7
          %v826 = vsub.s32 %v823, %v825
          %v827 = vrot.slane %v819, %v826
          %v829 = vunpack.c.l.s4 1983009808
          %v830 = vunpack.c.0.s8 %v829
          %v831 = vlaneseq
          %v832 = vshrl.u32 %v831, 7
          %v833 = vsub.s32 %v830, %v832
          %v834 = vrot.slane %v820, %v833
          %v835 = vcombine.low %v676, %v678
          %v836 = vcombine.high %v676, %v678
          %v838 = vunpack.c.l.s4 1983009808
          %v839 = vunpack.c.0.s8 %v838
          %v840 = vlaneseq
          %v841 = vshrl.u32 %v840, 7
          %v842 = vsub.s32 %v839, %v841
          %v843 = vrot.slane %v835, %v842
          %v845 = vunpack.c.l.s4 1983009808
          %v846 = vunpack.c.0.s8 %v845
          %v847 = vlaneseq
          %v848 = vshrl.u32 %v847, 7
          %v849 = vsub.s32 %v846, %v848
          %v850 = vrot.slane %v836, %v849
          %v851 = vcombine.low %v679, %v681
          %v852 = vcombine.high %v679, %v681
          %v854 = vunpack.c.l.s4 1983009808
          %v855 = vunpack.c.0.s8 %v854
          %v856 = vlaneseq
          %v857 = vshrl.u32 %v856, 7
          %v858 = vsub.s32 %v855, %v857
          %v859 = vrot.slane %v851, %v858
          %v861 = vunpack.c.l.s4 1983009808
          %v862 = vunpack.c.0.s8 %v861
          %v863 = vlaneseq
          %v864 = vshrl.u32 %v863, 7
          %v865 = vsub.s32 %v862, %v864
          %v866 = vrot.slane %v852, %v865
          %v867 = vcombine.low %v680, %v682
          %v868 = vcombine.high %v680, %v682
          %v870 = vunpack.c.l.s4 1983009808
          %v871 = vunpack.c.0.s8 %v870
          %v872 = vlaneseq
          %v873 = vshrl.u32 %v872, 7
          %v874 = vsub.s32 %v871, %v873
          %v875 = vrot.slane %v867, %v874
          %v877 = vunpack.c.l.s4 1983009808
          %v878 = vunpack.c.0.s8 %v877
          %v879 = vlaneseq
          %v880 = vshrl.u32 %v879, 7
          %v881 = vsub.s32 %v878, %v880
          %v882 = vrot.slane %v868, %v881
          %v883 = vcombine.low %v827, %v843
          %v884 = vcombine.high %v827, %v843
          %v886 = vunpack.c.l.s4 1934713408
          %v887 = vunpack.c.0.s8 %v886
          %v888 = vlaneseq
          %v889 = vshrl.u32 %v888, 7
          %v890 = vsub.s32 %v887, %v889
          %v891 = vrot.slane %v883, %v890
          %v893 = vunpack.c.l.s4 1934713408
          %v894 = vunpack.c.0.s8 %v893
          %v895 = vlaneseq
          %v896 = vshrl.u32 %v895, 7
          %v897 = vsub.s32 %v894, %v896
          %v898 = vrot.slane %v884, %v897
          %v899 = vcombine.low %v834, %v850
          %v900 = vcombine.high %v834, %v850
          %v902 = vunpack.c.l.s4 1934713408
          %v903 = vunpack.c.0.s8 %v902
          %v904 = vlaneseq
          %v905 = vshrl.u32 %v904, 7
          %v906 = vsub.s32 %v903, %v905
          %v907 = vrot.slane %v899, %v906
          %v909 = vunpack.c.l.s4 1934713408
          %v910 = vunpack.c.0.s8 %v909
          %v911 = vlaneseq
          %v912 = vshrl.u32 %v911, 7
          %v913 = vsub.s32 %v910, %v912
          %v914 = vrot.slane %v900, %v913
          %v915 = vcombine.low %v859, %v875
          %v916 = vcombine.high %v859, %v875
          %v918 = vunpack.c.l.s4 1934713408
          %v919 = vunpack.c.0.s8 %v918
          %v920 = vlaneseq
          %v921 = vshrl.u32 %v920, 7
          %v922 = vsub.s32 %v919, %v921
          %v923 = vrot.slane %v915, %v922
          %v925 = vunpack.c.l.s4 1934713408
          %v926 = vunpack.c.0.s8 %v925
          %v927 = vlaneseq
          %v928 = vshrl.u32 %v927, 7
          %v929 = vsub.s32 %v926, %v928
          %v930 = vrot.slane %v916, %v929
          %v931 = vcombine.low %v866, %v882
          %v932 = vcombine.high %v866, %v882
          %v934 = vunpack.c.l.s4 1934713408
          %v935 = vunpack.c.0.s8 %v934
          %v936 = vlaneseq
          %v937 = vshrl.u32 %v936, 7
          %v938 = vsub.s32 %v935, %v937
          %v939 = vrot.slane %v931, %v938
          %v941 = vunpack.c.l.s4 1934713408
          %v942 = vunpack.c.0.s8 %v941
          %v943 = vlaneseq
          %v944 = vshrl.u32 %v943, 7
          %v945 = vsub.s32 %v942, %v944
          %v946 = vrot.slane %v932, %v945
          %v947 = vcombine.low %v891, %v923
          %v948 = vcombine.high %v891, %v923
          %v949 = vcombine.low %v898, %v930
          %v950 = vcombine.high %v898, %v930
          %v951 = vcombine.low %v907, %v939
          %v952 = vcombine.high %v907, %v939
          %v953 = vcombine.low %v914, %v946
          %v954 = vcombine.high %v914, %v946
          %v955 = vcombine.low %v811, %v813
          %v956 = vcombine.high %v811, %v813
          %v958 = vunpack.c.l.s4 1983009808
          %v959 = vunpack.c.0.s8 %v958
          %v960 = vlaneseq
          %v961 = vshrl.u32 %v960, 7
          %v962 = vsub.s32 %v959, %v961
          %v963 = vrot.slane %v955, %v962
          %v965 = vunpack.c.l.s4 1983009808
          %v966 = vunpack.c.0.s8 %v965
          %v967 = vlaneseq
          %v968 = vshrl.u32 %v967, 7
          %v969 = vsub.s32 %v966, %v968
          %v970 = vrot.slane %v956, %v969
          %v971 = vcombine.low %v812, %v814
          %v972 = vcombine.high %v812, %v814
          %v974 = vunpack.c.l.s4 1983009808
          %v975 = vunpack.c.0.s8 %v974
          %v976 = vlaneseq
          %v977 = vshrl.u32 %v976, 7
          %v978 = vsub.s32 %v975, %v977
          %v979 = vrot.slane %v971, %v978
          %v981 = vunpack.c.l.s4 1983009808
          %v982 = vunpack.c.0.s8 %v981
          %v983 = vlaneseq
          %v984 = vshrl.u32 %v983, 7
          %v985 = vsub.s32 %v982, %v984
          %v986 = vrot.slane %v972, %v985
          %v987 = vcombine.low %v815, %v817
          %v988 = vcombine.high %v815, %v817
          %v990 = vunpack.c.l.s4 1983009808
          %v991 = vunpack.c.0.s8 %v990
          %v992 = vlaneseq
          %v993 = vshrl.u32 %v992, 7
          %v994 = vsub.s32 %v991, %v993
          %v995 = vrot.slane %v987, %v994
          %v997 = vunpack.c.l.s4 1983009808
          %v998 = vunpack.c.0.s8 %v997
          %v999 = vlaneseq
          %v1000 = vshrl.u32 %v999, 7
          %v1001 = vsub.s32 %v998, %v1000
          %v1002 = vrot.slane %v988, %v1001
          %v1003 = vcombine.low %v816, %v818
          %v1004 = vcombine.high %v816, %v818
          %v1006 = vunpack.c.l.s4 1983009808
          %v1007 = vunpack.c.0.s8 %v1006
          %v1008 = vlaneseq
          %v1009 = vshrl.u32 %v1008, 7
          %v1010 = vsub.s32 %v1007, %v1009
          %v1011 = vrot.slane %v1003, %v1010
          %v1013 = vunpack.c.l.s4 1983009808
          %v1014 = vunpack.c.0.s8 %v1013
          %v1015 = vlaneseq
          %v1016 = vshrl.u32 %v1015, 7
          %v1017 = vsub.s32 %v1014, %v1016
          %v1018 = vrot.slane %v1004, %v1017
          %v1019 = vcombine.low %v963, %v979
          %v1020 = vcombine.high %v963, %v979
          %v1022 = vunpack.c.l.s4 1934713408
          %v1023 = vunpack.c.0.s8 %v1022
          %v1024 = vlaneseq
          %v1025 = vshrl.u32 %v1024, 7
          %v1026 = vsub.s32 %v1023, %v1025
          %v1027 = vrot.slane %v1019, %v1026
          %v1029 = vunpack.c.l.s4 1934713408
          %v1030 = vunpack.c.0.s8 %v1029
          %v1031 = vlaneseq
          %v1032 = vshrl.u32 %v1031, 7
          %v1033 = vsub.s32 %v1030, %v1032
          %v1034 = vrot.slane %v1020, %v1033
          %v1035 = vcombine.low %v970, %v986
          %v1036 = vcombine.high %v970, %v986
          %v1038 = vunpack.c.l.s4 1934713408
          %v1039 = vunpack.c.0.s8 %v1038
          %v1040 = vlaneseq
          %v1041 = vshrl.u32 %v1040, 7
          %v1042 = vsub.s32 %v1039, %v1041
          %v1043 = vrot.slane %v1035, %v1042
          %v1045 = vunpack.c.l.s4 1934713408
          %v1046 = vunpack.c.0.s8 %v1045
          %v1047 = vlaneseq
          %v1048 = vshrl.u32 %v1047, 7
          %v1049 = vsub.s32 %v1046, %v1048
          %v1050 = vrot.slane %v1036, %v1049
          %v1051 = vcombine.low %v995, %v1011
          %v1052 = vcombine.high %v995, %v1011
          %v1054 = vunpack.c.l.s4 1934713408
          %v1055 = vunpack.c.0.s8 %v1054
          %v1056 = vlaneseq
          %v1057 = vshrl.u32 %v1056, 7
          %v1058 = vsub.s32 %v1055, %v1057
          %v1059 = vrot.slane %v1051, %v1058
          %v1061 = vunpack.c.l.s4 1934713408
          %v1062 = vunpack.c.0.s8 %v1061
          %v1063 = vlaneseq
          %v1064 = vshrl.u32 %v1063, 7
          %v1065 = vsub.s32 %v1062, %v1064
          %v1066 = vrot.slane %v1052, %v1065
          %v1067 = vcombine.low %v1002, %v1018
          %v1068 = vcombine.high %v1002, %v1018
          %v1070 = vunpack.c.l.s4 1934713408
          %v1071 = vunpack.c.0.s8 %v1070
          %v1072 = vlaneseq
          %v1073 = vshrl.u32 %v1072, 7
          %v1074 = vsub.s32 %v1071, %v1073
          %v1075 = vrot.slane %v1067, %v1074
          %v1077 = vunpack.c.l.s4 1934713408
          %v1078 = vunpack.c.0.s8 %v1077
          %v1079 = vlaneseq
          %v1080 = vshrl.u32 %v1079, 7
          %v1081 = vsub.s32 %v1078, %v1080
          %v1082 = vrot.slane %v1068, %v1081
          %v1083 = vcombine.low %v1027, %v1059
          %v1084 = vcombine.high %v1027, %v1059
          %v1085 = vcombine.low %v1034, %v1066
          %v1086 = vcombine.high %v1034, %v1066
          %v1087 = vcombine.low %v1043, %v1075
          %v1088 = vcombine.high %v1043, %v1075
          %v1089 = vcombine.low %v1050, %v1082
          %v1090 = vcombine.high %v1050, %v1082
          %v1091 = vpack.c.bf16 %v1083, %v947
          %v1092 = vpack.c.bf16 %v1084, %v948
          %v1093 = vpack.c.bf16 %v1085, %v949
          %v1094 = vpack.c.bf16 %v1086, %v950
          %v1095 = vpack.c.bf16 %v1087, %v951
          %v1096 = vpack.c.bf16 %v1088, %v952
          %v1097 = vpack.c.bf16 %v1089, %v953
          %v1098 = vpack.c.bf16 %v1090, %v954
          %vm1099 = vcmask 130048
          %1100 = vst.msk [vmem:[#allocation2] sm:$0xff] %vm1099, %v1091
          %1101 = vst.msk [vmem:[#allocation2 + $0x8] sm:$0xff] %vm1099, %v1092
          %1102 = vst.msk [vmem:[#allocation2 + $0x10] sm:$0xff] %vm1099, %v1093
          %1103 = vst.msk [vmem:[#allocation2 + $0x18] sm:$0xff] %vm1099, %v1094
          %1104 = vst.msk [vmem:[#allocation2 + $0x20] sm:$0xff] %vm1099, %v1095
          %1105 = vst.msk [vmem:[#allocation2 + $0x28] sm:$0xff] %vm1099, %v1096
          %1106 = vst.msk [vmem:[#allocation2 + $0x30] sm:$0xff] %vm1099, %v1097
          %1107 = vst.msk [vmem:[#allocation2 + $0x38] sm:$0xff] %vm1099, %v1098
          %1110 = vrot.lane.b32.xlu0 %v497, 112
          %v1111 = vpop.permute.xlu0 %1110
          %1112 = vrot.lane.b32.xlu0 %v501, 112
          %v1113 = vpop.permute.xlu0 %1112
          %1116 = vrot.lane.b32.xlu0 %v497, 96
          %v1117 = vpop.permute.xlu0 %1116
          %1118 = vrot.lane.b32.xlu0 %v501, 96
          %v1119 = vpop.permute.xlu0 %1118
          %1122 = vrot.lane.b32.xlu0 %v497, 80
          %v1123 = vpop.permute.xlu0 %1122
          %1124 = vrot.lane.b32.xlu0 %v501, 80
          %v1125 = vpop.permute.xlu0 %1124
          %1128 = vrot.lane.b32.xlu0 %v497, 64
          %v1129 = vpop.permute.xlu0 %1128
          %1130 = vrot.lane.b32.xlu0 %v501, 64
          %v1131 = vpop.permute.xlu0 %1130
          %1134 = vrot.lane.b32.xlu0 %v497, 48
          %v1135 = vpop.permute.xlu0 %1134
          %1136 = vrot.lane.b32.xlu0 %v501, 48
          %v1137 = vpop.permute.xlu0 %1136
          %1140 = vrot.lane.b32.xlu0 %v497, 32
          %v1141 = vpop.permute.xlu0 %1140
          %1142 = vrot.lane.b32.xlu0 %v501, 32
          %v1143 = vpop.permute.xlu0 %1142
          %1146 = vrot.lane.b32.xlu0 %v497, 16
          %v1147 = vpop.permute.xlu0 %1146
          %1148 = vrot.lane.b32.xlu0 %v501, 16
          %v1149 = vpop.permute.xlu0 %1148
          %v1152 = vcombine.low %v497, %v1117
          %v1153 = vcombine.high %v497, %v1117
          %v1155 = vunpack.c.l.s4 1983009808
          %v1156 = vunpack.c.0.s8 %v1155
          %v1157 = vlaneseq
          %v1158 = vshrl.u32 %v1157, 7
          %v1159 = vsub.s32 %v1156, %v1158
          %v1160 = vrot.slane %v1152, %v1159
          %v1162 = vunpack.c.l.s4 1983009808
          %v1163 = vunpack.c.0.s8 %v1162
          %v1164 = vlaneseq
          %v1165 = vshrl.u32 %v1164, 7
          %v1166 = vsub.s32 %v1163, %v1165
          %v1167 = vrot.slane %v1153, %v1166
          %v1168 = vcombine.low %v1111, %v1123
          %v1169 = vcombine.high %v1111, %v1123
          %v1171 = vunpack.c.l.s4 1983009808
          %v1172 = vunpack.c.0.s8 %v1171
          %v1173 = vlaneseq
          %v1174 = vshrl.u32 %v1173, 7
          %v1175 = vsub.s32 %v1172, %v1174
          %v1176 = vrot.slane %v1168, %v1175
          %v1178 = vunpack.c.l.s4 1983009808
          %v1179 = vunpack.c.0.s8 %v1178
          %v1180 = vlaneseq
          %v1181 = vshrl.u32 %v1180, 7
          %v1182 = vsub.s32 %v1179, %v1181
          %v1183 = vrot.slane %v1169, %v1182
          %v1184 = vcombine.low %v1129, %v1141
          %v1185 = vcombine.high %v1129, %v1141
          %v1187 = vunpack.c.l.s4 1983009808
          %v1188 = vunpack.c.0.s8 %v1187
          %v1189 = vlaneseq
          %v1190 = vshrl.u32 %v1189, 7
          %v1191 = vsub.s32 %v1188, %v1190
          %v1192 = vrot.slane %v1184, %v1191
          %v1194 = vunpack.c.l.s4 1983009808
          %v1195 = vunpack.c.0.s8 %v1194
          %v1196 = vlaneseq
          %v1197 = vshrl.u32 %v1196, 7
          %v1198 = vsub.s32 %v1195, %v1197
          %v1199 = vrot.slane %v1185, %v1198
          %v1200 = vcombine.low %v1135, %v1147
          %v1201 = vcombine.high %v1135, %v1147
          %v1203 = vunpack.c.l.s4 1983009808
          %v1204 = vunpack.c.0.s8 %v1203
          %v1205 = vlaneseq
          %v1206 = vshrl.u32 %v1205, 7
          %v1207 = vsub.s32 %v1204, %v1206
          %v1208 = vrot.slane %v1200, %v1207
          %v1210 = vunpack.c.l.s4 1983009808
          %v1211 = vunpack.c.0.s8 %v1210
          %v1212 = vlaneseq
          %v1213 = vshrl.u32 %v1212, 7
          %v1214 = vsub.s32 %v1211, %v1213
          %v1215 = vrot.slane %v1201, %v1214
          %v1216 = vcombine.low %v1160, %v1176
          %v1217 = vcombine.high %v1160, %v1176
          %v1219 = vunpack.c.l.s4 1934713408
          %v1220 = vunpack.c.0.s8 %v1219
          %v1221 = vlaneseq
          %v1222 = vshrl.u32 %v1221, 7
          %v1223 = vsub.s32 %v1220, %v1222
          %v1224 = vrot.slane %v1216, %v1223
          %v1226 = vunpack.c.l.s4 1934713408
          %v1227 = vunpack.c.0.s8 %v1226
          %v1228 = vlaneseq
          %v1229 = vshrl.u32 %v1228, 7
          %v1230 = vsub.s32 %v1227, %v1229
          %v1231 = vrot.slane %v1217, %v1230
          %v1232 = vcombine.low %v1167, %v1183
          %v1233 = vcombine.high %v1167, %v1183
          %v1235 = vunpack.c.l.s4 1934713408
          %v1236 = vunpack.c.0.s8 %v1235
          %v1237 = vlaneseq
          %v1238 = vshrl.u32 %v1237, 7
          %v1239 = vsub.s32 %v1236, %v1238
          %v1240 = vrot.slane %v1232, %v1239
          %v1242 = vunpack.c.l.s4 1934713408
          %v1243 = vunpack.c.0.s8 %v1242
          %v1244 = vlaneseq
          %v1245 = vshrl.u32 %v1244, 7
          %v1246 = vsub.s32 %v1243, %v1245
          %v1247 = vrot.slane %v1233, %v1246
          %v1248 = vcombine.low %v1192, %v1208
          %v1249 = vcombine.high %v1192, %v1208
          %v1251 = vunpack.c.l.s4 1934713408
          %v1252 = vunpack.c.0.s8 %v1251
          %v1253 = vlaneseq
          %v1254 = vshrl.u32 %v1253, 7
          %v1255 = vsub.s32 %v1252, %v1254
          %v1256 = vrot.slane %v1248, %v1255
          %v1258 = vunpack.c.l.s4 1934713408
          %v1259 = vunpack.c.0.s8 %v1258
          %v1260 = vlaneseq
          %v1261 = vshrl.u32 %v1260, 7
          %v1262 = vsub.s32 %v1259, %v1261
          %v1263 = vrot.slane %v1249, %v1262
          %v1264 = vcombine.low %v1199, %v1215
          %v1265 = vcombine.high %v1199, %v1215
          %v1267 = vunpack.c.l.s4 1934713408
          %v1268 = vunpack.c.0.s8 %v1267
          %v1269 = vlaneseq
          %v1270 = vshrl.u32 %v1269, 7
          %v1271 = vsub.s32 %v1268, %v1270
          %v1272 = vrot.slane %v1264, %v1271
          %v1274 = vunpack.c.l.s4 1934713408
          %v1275 = vunpack.c.0.s8 %v1274
          %v1276 = vlaneseq
          %v1277 = vshrl.u32 %v1276, 7
          %v1278 = vsub.s32 %v1275, %v1277
          %v1279 = vrot.slane %v1265, %v1278
          %v1280 = vcombine.low %v1224, %v1256
          %v1281 = vcombine.high %v1224, %v1256
          %v1282 = vcombine.low %v1231, %v1263
          %v1283 = vcombine.high %v1231, %v1263
          %v1284 = vcombine.low %v1240, %v1272
          %v1285 = vcombine.high %v1240, %v1272
          %v1286 = vcombine.low %v1247, %v1279
          %v1287 = vcombine.high %v1247, %v1279
          %v1288 = vcombine.low %v501, %v1119
          %v1289 = vcombine.high %v501, %v1119
          %v1291 = vunpack.c.l.s4 1983009808
          %v1292 = vunpack.c.0.s8 %v1291
          %v1293 = vlaneseq
          %v1294 = vshrl.u32 %v1293, 7
          %v1295 = vsub.s32 %v1292, %v1294
          %v1296 = vrot.slane %v1288, %v1295
          %v1298 = vunpack.c.l.s4 1983009808
          %v1299 = vunpack.c.0.s8 %v1298
          %v1300 = vlaneseq
          %v1301 = vshrl.u32 %v1300, 7
          %v1302 = vsub.s32 %v1299, %v1301
          %v1303 = vrot.slane %v1289, %v1302
          %v1304 = vcombine.low %v1113, %v1125
          %v1305 = vcombine.high %v1113, %v1125
          %v1307 = vunpack.c.l.s4 1983009808
          %v1308 = vunpack.c.0.s8 %v1307
          %v1309 = vlaneseq
          %v1310 = vshrl.u32 %v1309, 7
          %v1311 = vsub.s32 %v1308, %v1310
          %v1312 = vrot.slane %v1304, %v1311
          %v1314 = vunpack.c.l.s4 1983009808
          %v1315 = vunpack.c.0.s8 %v1314
          %v1316 = vlaneseq
          %v1317 = vshrl.u32 %v1316, 7
          %v1318 = vsub.s32 %v1315, %v1317
          %v1319 = vrot.slane %v1305, %v1318
          %v1320 = vcombine.low %v1131, %v1143
          %v1321 = vcombine.high %v1131, %v1143
          %v1323 = vunpack.c.l.s4 1983009808
          %v1324 = vunpack.c.0.s8 %v1323
          %v1325 = vlaneseq
          %v1326 = vshrl.u32 %v1325, 7
          %v1327 = vsub.s32 %v1324, %v1326
          %v1328 = vrot.slane %v1320, %v1327
          %v1330 = vunpack.c.l.s4 1983009808
          %v1331 = vunpack.c.0.s8 %v1330
          %v1332 = vlaneseq
          %v1333 = vshrl.u32 %v1332, 7
          %v1334 = vsub.s32 %v1331, %v1333
          %v1335 = vrot.slane %v1321, %v1334
          %v1336 = vcombine.low %v1137, %v1149
          %v1337 = vcombine.high %v1137, %v1149
          %v1339 = vunpack.c.l.s4 1983009808
          %v1340 = vunpack.c.0.s8 %v1339
          %v1341 = vlaneseq
          %v1342 = vshrl.u32 %v1341, 7
          %v1343 = vsub.s32 %v1340, %v1342
          %v1344 = vrot.slane %v1336, %v1343
          %v1346 = vunpack.c.l.s4 1983009808
          %v1347 = vunpack.c.0.s8 %v1346
          %v1348 = vlaneseq
          %v1349 = vshrl.u32 %v1348, 7
          %v1350 = vsub.s32 %v1347, %v1349
          %v1351 = vrot.slane %v1337, %v1350
          %v1352 = vcombine.low %v1296, %v1312
          %v1353 = vcombine.high %v1296, %v1312
          %v1355 = vunpack.c.l.s4 1934713408
          %v1356 = vunpack.c.0.s8 %v1355
          %v1357 = vlaneseq
          %v1358 = vshrl.u32 %v1357, 7
          %v1359 = vsub.s32 %v1356, %v1358
          %v1360 = vrot.slane %v1352, %v1359
          %v1362 = vunpack.c.l.s4 1934713408
          %v1363 = vunpack.c.0.s8 %v1362
          %v1364 = vlaneseq
          %v1365 = vshrl.u32 %v1364, 7
          %v1366 = vsub.s32 %v1363, %v1365
          %v1367 = vrot.slane %v1353, %v1366
          %v1368 = vcombine.low %v1303, %v1319
          %v1369 = vcombine.high %v1303, %v1319
          %v1371 = vunpack.c.l.s4 1934713408
          %v1372 = vunpack.c.0.s8 %v1371
          %v1373 = vlaneseq
          %v1374 = vshrl.u32 %v1373, 7
          %v1375 = vsub.s32 %v1372, %v1374
          %v1376 = vrot.slane %v1368, %v1375
          %v1378 = vunpack.c.l.s4 1934713408
          %v1379 = vunpack.c.0.s8 %v1378
          %v1380 = vlaneseq
          %v1381 = vshrl.u32 %v1380, 7
          %v1382 = vsub.s32 %v1379, %v1381
          %v1383 = vrot.slane %v1369, %v1382
          %v1384 = vcombine.low %v1328, %v1344
          %v1385 = vcombine.high %v1328, %v1344
          %v1387 = vunpack.c.l.s4 1934713408
          %v1388 = vunpack.c.0.s8 %v1387
          %v1389 = vlaneseq
          %v1390 = vshrl.u32 %v1389, 7
          %v1391 = vsub.s32 %v1388, %v1390
          %v1392 = vrot.slane %v1384, %v1391
          %v1394 = vunpack.c.l.s4 1934713408
          %v1395 = vunpack.c.0.s8 %v1394
          %v1396 = vlaneseq
          %v1397 = vshrl.u32 %v1396, 7
          %v1398 = vsub.s32 %v1395, %v1397
          %v1399 = vrot.slane %v1385, %v1398
          %v1400 = vcombine.low %v1335, %v1351
          %v1401 = vcombine.high %v1335, %v1351
          %v1403 = vunpack.c.l.s4 1934713408
          %v1404 = vunpack.c.0.s8 %v1403
          %v1405 = vlaneseq
          %v1406 = vshrl.u32 %v1405, 7
          %v1407 = vsub.s32 %v1404, %v1406
          %v1408 = vrot.slane %v1400, %v1407
          %v1410 = vunpack.c.l.s4 1934713408
          %v1411 = vunpack.c.0.s8 %v1410
          %v1412 = vlaneseq
          %v1413 = vshrl.u32 %v1412, 7
          %v1414 = vsub.s32 %v1411, %v1413
          %v1415 = vrot.slane %v1401, %v1414
          %v1416 = vcombine.low %v1360, %v1392
          %v1417 = vcombine.high %v1360, %v1392
          %v1418 = vcombine.low %v1367, %v1399
          %v1419 = vcombine.high %v1367, %v1399
          %v1420 = vcombine.low %v1376, %v1408
          %v1421 = vcombine.high %v1376, %v1408
          %v1422 = vcombine.low %v1383, %v1415
          %v1423 = vcombine.high %v1383, %v1415
          %v1424 = vcombine.low %v1280, %v1282
          %v1425 = vcombine.high %v1280, %v1282
          %v1427 = vunpack.c.l.s4 1983009808
          %v1428 = vunpack.c.0.s8 %v1427
          %v1429 = vlaneseq
          %v1430 = vshrl.u32 %v1429, 7
          %v1431 = vsub.s32 %v1428, %v1430
          %v1432 = vrot.slane %v1424, %v1431
          %v1434 = vunpack.c.l.s4 1983009808
          %v1435 = vunpack.c.0.s8 %v1434
          %v1436 = vlaneseq
          %v1437 = vshrl.u32 %v1436, 7
          %v1438 = vsub.s32 %v1435, %v1437
          %v1439 = vrot.slane %v1425, %v1438
          %v1440 = vcombine.low %v1281, %v1283
          %v1441 = vcombine.high %v1281, %v1283
          %v1443 = vunpack.c.l.s4 1983009808
          %v1444 = vunpack.c.0.s8 %v1443
          %v1445 = vlaneseq
          %v1446 = vshrl.u32 %v1445, 7
          %v1447 = vsub.s32 %v1444, %v1446
          %v1448 = vrot.slane %v1440, %v1447
          %v1450 = vunpack.c.l.s4 1983009808
          %v1451 = vunpack.c.0.s8 %v1450
          %v1452 = vlaneseq
          %v1453 = vshrl.u32 %v1452, 7
          %v1454 = vsub.s32 %v1451, %v1453
          %v1455 = vrot.slane %v1441, %v1454
          %v1456 = vcombine.low %v1284, %v1286
          %v1457 = vcombine.high %v1284, %v1286
          %v1459 = vunpack.c.l.s4 1983009808
          %v1460 = vunpack.c.0.s8 %v1459
          %v1461 = vlaneseq
          %v1462 = vshrl.u32 %v1461, 7
          %v1463 = vsub.s32 %v1460, %v1462
          %v1464 = vrot.slane %v1456, %v1463
          %v1466 = vunpack.c.l.s4 1983009808
          %v1467 = vunpack.c.0.s8 %v1466
          %v1468 = vlaneseq
          %v1469 = vshrl.u32 %v1468, 7
          %v1470 = vsub.s32 %v1467, %v1469
          %v1471 = vrot.slane %v1457, %v1470
          %v1472 = vcombine.low %v1285, %v1287
          %v1473 = vcombine.high %v1285, %v1287
          %v1475 = vunpack.c.l.s4 1983009808
          %v1476 = vunpack.c.0.s8 %v1475
          %v1477 = vlaneseq
          %v1478 = vshrl.u32 %v1477, 7
          %v1479 = vsub.s32 %v1476, %v1478
          %v1480 = vrot.slane %v1472, %v1479
          %v1482 = vunpack.c.l.s4 1983009808
          %v1483 = vunpack.c.0.s8 %v1482
          %v1484 = vlaneseq
          %v1485 = vshrl.u32 %v1484, 7
          %v1486 = vsub.s32 %v1483, %v1485
          %v1487 = vrot.slane %v1473, %v1486
          %v1488 = vcombine.low %v1432, %v1448
          %v1489 = vcombine.high %v1432, %v1448
          %v1491 = vunpack.c.l.s4 1934713408
          %v1492 = vunpack.c.0.s8 %v1491
          %v1493 = vlaneseq
          %v1494 = vshrl.u32 %v1493, 7
          %v1495 = vsub.s32 %v1492, %v1494
          %v1496 = vrot.slane %v1488, %v1495
          %v1498 = vunpack.c.l.s4 1934713408
          %v1499 = vunpack.c.0.s8 %v1498
          %v1500 = vlaneseq
          %v1501 = vshrl.u32 %v1500, 7
          %v1502 = vsub.s32 %v1499, %v1501
          %v1503 = vrot.slane %v1489, %v1502
          %v1504 = vcombine.low %v1439, %v1455
          %v1505 = vcombine.high %v1439, %v1455
          %v1507 = vunpack.c.l.s4 1934713408
          %v1508 = vunpack.c.0.s8 %v1507
          %v1509 = vlaneseq
          %v1510 = vshrl.u32 %v1509, 7
          %v1511 = vsub.s32 %v1508, %v1510
          %v1512 = vrot.slane %v1504, %v1511
          %v1514 = vunpack.c.l.s4 1934713408
          %v1515 = vunpack.c.0.s8 %v1514
          %v1516 = vlaneseq
          %v1517 = vshrl.u32 %v1516, 7
          %v1518 = vsub.s32 %v1515, %v1517
          %v1519 = vrot.slane %v1505, %v1518
          %v1520 = vcombine.low %v1464, %v1480
          %v1521 = vcombine.high %v1464, %v1480
          %v1523 = vunpack.c.l.s4 1934713408
          %v1524 = vunpack.c.0.s8 %v1523
          %v1525 = vlaneseq
          %v1526 = vshrl.u32 %v1525, 7
          %v1527 = vsub.s32 %v1524, %v1526
          %v1528 = vrot.slane %v1520, %v1527
          %v1530 = vunpack.c.l.s4 1934713408
          %v1531 = vunpack.c.0.s8 %v1530
          %v1532 = vlaneseq
          %v1533 = vshrl.u32 %v1532, 7
          %v1534 = vsub.s32 %v1531, %v1533
          %v1535 = vrot.slane %v1521, %v1534
          %v1536 = vcombine.low %v1471, %v1487
          %v1537 = vcombine.high %v1471, %v1487
          %v1539 = vunpack.c.l.s4 1934713408
          %v1540 = vunpack.c.0.s8 %v1539
          %v1541 = vlaneseq
          %v1542 = vshrl.u32 %v1541, 7
          %v1543 = vsub.s32 %v1540, %v1542
          %v1544 = vrot.slane %v1536, %v1543
          %v1546 = vunpack.c.l.s4 1934713408
          %v1547 = vunpack.c.0.s8 %v1546
          %v1548 = vlaneseq
          %v1549 = vshrl.u32 %v1548, 7
          %v1550 = vsub.s32 %v1547, %v1549
          %v1551 = vrot.slane %v1537, %v1550
          %v1552 = vcombine.low %v1496, %v1528
          %v1553 = vcombine.high %v1496, %v1528
          %v1554 = vcombine.low %v1503, %v1535
          %v1555 = vcombine.high %v1503, %v1535
          %v1556 = vcombine.low %v1512, %v1544
          %v1557 = vcombine.high %v1512, %v1544
          %v1558 = vcombine.low %v1519, %v1551
          %v1559 = vcombine.high %v1519, %v1551
          %v1560 = vcombine.low %v1416, %v1418
          %v1561 = vcombine.high %v1416, %v1418
          %v1563 = vunpack.c.l.s4 1983009808
          %v1564 = vunpack.c.0.s8 %v1563
          %v1565 = vlaneseq
          %v1566 = vshrl.u32 %v1565, 7
          %v1567 = vsub.s32 %v1564, %v1566
          %v1568 = vrot.slane %v1560, %v1567
          %v1570 = vunpack.c.l.s4 1983009808
          %v1571 = vunpack.c.0.s8 %v1570
          %v1572 = vlaneseq
          %v1573 = vshrl.u32 %v1572, 7
          %v1574 = vsub.s32 %v1571, %v1573
          %v1575 = vrot.slane %v1561, %v1574
          %v1576 = vcombine.low %v1417, %v1419
          %v1577 = vcombine.high %v1417, %v1419
          %v1579 = vunpack.c.l.s4 1983009808
          %v1580 = vunpack.c.0.s8 %v1579
          %v1581 = vlaneseq
          %v1582 = vshrl.u32 %v1581, 7
          %v1583 = vsub.s32 %v1580, %v1582
          %v1584 = vrot.slane %v1576, %v1583
          %v1586 = vunpack.c.l.s4 1983009808
          %v1587 = vunpack.c.0.s8 %v1586
          %v1588 = vlaneseq
          %v1589 = vshrl.u32 %v1588, 7
          %v1590 = vsub.s32 %v1587, %v1589
          %v1591 = vrot.slane %v1577, %v1590
          %v1592 = vcombine.low %v1420, %v1422
          %v1593 = vcombine.high %v1420, %v1422
          %v1595 = vunpack.c.l.s4 1983009808
          %v1596 = vunpack.c.0.s8 %v1595
          %v1597 = vlaneseq
          %v1598 = vshrl.u32 %v1597, 7
          %v1599 = vsub.s32 %v1596, %v1598
          %v1600 = vrot.slane %v1592, %v1599
          %v1602 = vunpack.c.l.s4 1983009808
          %v1603 = vunpack.c.0.s8 %v1602
          %v1604 = vlaneseq
          %v1605 = vshrl.u32 %v1604, 7
          %v1606 = vsub.s32 %v1603, %v1605
          %v1607 = vrot.slane %v1593, %v1606
          %v1608 = vcombine.low %v1421, %v1423
          %v1609 = vcombine.high %v1421, %v1423
          %v1611 = vunpack.c.l.s4 1983009808
          %v1612 = vunpack.c.0.s8 %v1611
          %v1613 = vlaneseq
          %v1614 = vshrl.u32 %v1613, 7
          %v1615 = vsub.s32 %v1612, %v1614
          %v1616 = vrot.slane %v1608, %v1615
          %v1618 = vunpack.c.l.s4 1983009808
          %v1619 = vunpack.c.0.s8 %v1618
          %v1620 = vlaneseq
          %v1621 = vshrl.u32 %v1620, 7
          %v1622 = vsub.s32 %v1619, %v1621
          %v1623 = vrot.slane %v1609, %v1622
          %v1624 = vcombine.low %v1568, %v1584
          %v1625 = vcombine.high %v1568, %v1584
          %v1627 = vunpack.c.l.s4 1934713408
          %v1628 = vunpack.c.0.s8 %v1627
          %v1629 = vlaneseq
          %v1630 = vshrl.u32 %v1629, 7
          %v1631 = vsub.s32 %v1628, %v1630
          %v1632 = vrot.slane %v1624, %v1631
          %v1634 = vunpack.c.l.s4 1934713408
          %v1635 = vunpack.c.0.s8 %v1634
          %v1636 = vlaneseq
          %v1637 = vshrl.u32 %v1636, 7
          %v1638 = vsub.s32 %v1635, %v1637
          %v1639 = vrot.slane %v1625, %v1638
          %v1640 = vcombine.low %v1575, %v1591
          %v1641 = vcombine.high %v1575, %v1591
          %v1643 = vunpack.c.l.s4 1934713408
          %v1644 = vunpack.c.0.s8 %v1643
          %v1645 = vlaneseq
          %v1646 = vshrl.u32 %v1645, 7
          %v1647 = vsub.s32 %v1644, %v1646
          %v1648 = vrot.slane %v1640, %v1647
          %v1650 = vunpack.c.l.s4 1934713408
          %v1651 = vunpack.c.0.s8 %v1650
          %v1652 = vlaneseq
          %v1653 = vshrl.u32 %v1652, 7
          %v1654 = vsub.s32 %v1651, %v1653
          %v1655 = vrot.slane %v1641, %v1654
          %v1656 = vcombine.low %v1600, %v1616
          %v1657 = vcombine.high %v1600, %v1616
          %v1659 = vunpack.c.l.s4 1934713408
          %v1660 = vunpack.c.0.s8 %v1659
          %v1661 = vlaneseq
          %v1662 = vshrl.u32 %v1661, 7
          %v1663 = vsub.s32 %v1660, %v1662
          %v1664 = vrot.slane %v1656, %v1663
          %v1666 = vunpack.c.l.s4 1934713408
          %v1667 = vunpack.c.0.s8 %v1666
          %v1668 = vlaneseq
          %v1669 = vshrl.u32 %v1668, 7
          %v1670 = vsub.s32 %v1667, %v1669
          %v1671 = vrot.slane %v1657, %v1670
          %v1672 = vcombine.low %v1607, %v1623
          %v1673 = vcombine.high %v1607, %v1623
          %v1675 = vunpack.c.l.s4 1934713408
          %v1676 = vunpack.c.0.s8 %v1675
          %v1677 = vlaneseq
          %v1678 = vshrl.u32 %v1677, 7
          %v1679 = vsub.s32 %v1676, %v1678
          %v1680 = vrot.slane %v1672, %v1679
          %v1682 = vunpack.c.l.s4 1934713408
          %v1683 = vunpack.c.0.s8 %v1682
          %v1684 = vlaneseq
          %v1685 = vshrl.u32 %v1684, 7
          %v1686 = vsub.s32 %v1683, %v1685
          %v1687 = vrot.slane %v1673, %v1686
          %v1688 = vcombine.low %v1632, %v1664
          %v1689 = vcombine.high %v1632, %v1664
          %v1690 = vcombine.low %v1639, %v1671
          %v1691 = vcombine.high %v1639, %v1671
          %v1692 = vcombine.low %v1648, %v1680
          %v1693 = vcombine.high %v1648, %v1680
          %v1694 = vcombine.low %v1655, %v1687
          %v1695 = vcombine.high %v1655, %v1687
          %v1696 = vpack.c.bf16 %v1688, %v1552
          %v1697 = vpack.c.bf16 %v1689, %v1553
          %v1698 = vpack.c.bf16 %v1690, %v1554
          %v1699 = vpack.c.bf16 %v1691, %v1555
          %v1700 = vpack.c.bf16 %v1692, %v1556
          %v1701 = vpack.c.bf16 %v1693, %v1557
          %v1702 = vpack.c.bf16 %v1694, %v1558
          %v1703 = vpack.c.bf16 %v1695, %v1559
          %1704 = vst.msk [vmem:[#allocation3] sm:$0xff] %vm1099, %v1696
          %1705 = vst.msk [vmem:[#allocation3 + $0x8] sm:$0xff] %vm1099, %v1697
          %1706 = vst.msk [vmem:[#allocation3 + $0x10] sm:$0xff] %vm1099, %v1698
          %1707 = vst.msk [vmem:[#allocation3 + $0x18] sm:$0xff] %vm1099, %v1699
          %1708 = vst.msk [vmem:[#allocation3 + $0x20] sm:$0xff] %vm1099, %v1700
          %1709 = vst.msk [vmem:[#allocation3 + $0x28] sm:$0xff] %vm1099, %v1701
          %1710 = vst.msk [vmem:[#allocation3 + $0x30] sm:$0xff] %vm1099, %v1702
          %1711 = vst.msk [vmem:[#allocation3 + $0x38] sm:$0xff] %vm1099, %v1703
        $region68: #{tpu_custom_call.1} parent=47 // pred_fallthru
          _
        %s1712 = smul.u32 %s31, 16
        %s1713 = scalar_lea.vmem %s312, %s1712 [#allocation4]
        %v1714 = vld [vmem:[%s1713] sm:$0xff]
        %v1715 = vld [vmem:[%s1713 + $0x8] sm:$0xff]
        %v1716 = vpack.c.bf16 %v1715, %v1714
        %v1717 = vld [vmem:[#allocation7] sm:$0xf]
        %v1718 = vld [vmem:[#allocation7 + $0x4] sm:$0xf]
        %v1719 = vld [vmem:[#allocation7 + $0x8] sm:$0xf]
        %v1720 = vld [vmem:[#allocation7 + $0xc] sm:$0xf]
        %v1721 = vld [vmem:[#allocation7 + $0x10] sm:$0xf]
        %v1722 = vld [vmem:[#allocation7 + $0x14] sm:$0xf]
        %v1723 = vld [vmem:[#allocation7 + $0x18] sm:$0xf]
        %v1724 = vld [vmem:[#allocation7 + $0x1c] sm:$0xf]
        %v1725 = vld [vmem:[#allocation7 + $0x20] sm:$0xf]
        %v1726 = vld [vmem:[#allocation7 + $0x24] sm:$0xf]
        %v1727 = vld [vmem:[#allocation7 + $0x28] sm:$0xf]
        %v1728 = vld [vmem:[#allocation7 + $0x2c] sm:$0xf]
        %v1729 = vld [vmem:[#allocation7 + $0x30] sm:$0xf]
        %v1730 = vld [vmem:[#allocation7 + $0x34] sm:$0xf]
        %v1731 = vld [vmem:[#allocation7 + $0x38] sm:$0xf]
        %v1732 = vld [vmem:[#allocation7 + $0x3c] sm:$0xf]
        %v1749 = vunpack.c.l.b16 %v1717
        %v1750 = vunpack.c.l.b16 %v1718
        %v1751 = vunpack.c.l.b16 %v1719
        %v1752 = vunpack.c.l.b16 %v1720
        %v1753 = vunpack.c.l.b16 %v1721
        %v1754 = vunpack.c.l.b16 %v1722
        %v1755 = vunpack.c.l.b16 %v1723
        %v1756 = vunpack.c.l.b16 %v1724
        %v1757 = vunpack.c.l.b16 %v1725
        %v1758 = vunpack.c.l.b16 %v1726
        %v1759 = vunpack.c.l.b16 %v1727
        %v1760 = vunpack.c.l.b16 %v1728
        %v1761 = vunpack.c.l.b16 %v1729
        %v1762 = vunpack.c.l.b16 %v1730
        %v1763 = vunpack.c.l.b16 %v1731
        %v1764 = vunpack.c.l.b16 %v1732
        %v1765 = vpack.c.b16 %v1750, %v1749
        %v1766 = vpack.c.b16 %v1752, %v1751
        %v1767 = vpack.c.b16 %v1754, %v1753
        %v1768 = vpack.c.b16 %v1756, %v1755
        %v1769 = vpack.c.b16 %v1758, %v1757
        %v1770 = vpack.c.b16 %v1760, %v1759
        %v1771 = vpack.c.b16 %v1762, %v1761
        %v1772 = vpack.c.b16 %v1764, %v1763
        %1781 = vmatprep.subr.bf16.mxu0 0
        %1782 = vmatpush1.bf16.msra.mxu0 %v1765
        %1783 = vmatprep.subr.bf16.mxu0 0
        %1784 = vmatpush1.bf16.msra.mxu0 %v1766
        %1785 = vmatprep.subr.bf16.mxu0 0
        %1786 = vmatpush1.bf16.msra.mxu0 %v1767
        %1787 = vmatprep.subr.bf16.mxu0 0
        %1788 = vmatpush1.bf16.msra.mxu0 %v1768
        %1789 = vmatprep.subr.bf16.mxu0 0
        %1790 = vmatpush1.bf16.msra.mxu0 %v1769
        %1791 = vmatprep.subr.bf16.mxu0 0
        %1792 = vmatpush1.bf16.msra.mxu0 %v1770
        %1793 = vmatprep.subr.bf16.mxu0 0
        %1794 = vmatpush1.bf16.msra.mxu0 %v1771
        %1795 = vmatprep.subr.bf16.mxu0 0
        %1796 = vmatpush1.bf16.msra.mxu0 %v1772
        %1797 = vmatprep.subr.bf16.mxu0 0
        %1798 = vmatpush1.bf16.msra.mxu0 0
        %1799 = vmatprep.subr.bf16.mxu0 0
        %1800 = vmatpush1.bf16.msra.mxu0 0
        %1801 = vmatprep.subr.bf16.mxu0 0
        %1802 = vmatpush1.bf16.msra.mxu0 0
        %1803 = vmatprep.subr.bf16.mxu0 0
        %1804 = vmatpush1.bf16.msra.mxu0 0
        %1805 = vmatprep.subr.bf16.mxu0 0
        %1806 = vmatpush1.bf16.msra.mxu0 0
        %1807 = vmatprep.subr.bf16.mxu0 0
        %1808 = vmatpush1.bf16.msra.mxu0 0
        %1809 = vmatprep.subr.bf16.mxu0 0
        %1810 = vmatpush1.bf16.msra.mxu0 0
        %1811 = vmatprep.subr.bf16.mxu0 0
        %1812 = vmatpush1.bf16.msra.mxu0 0
        %1813 = vmatprep.mubr.bf16.mxu0 0
        %1814 = vmatmul.mubr.bf16.gmra.mrb[0].mxu0 %v1716
        %v1815 = vpop.f32.mrb[0].mxu0
        %v1816 = vadd.f32 0.0, %v1815
        %v1817 = vpop.f32.mrb[0].mxu0
        %v1818 = vpop.f32.mrb[0].mxu0
        %v1819 = vadd.f32 0.0, %v1818
        %v1820 = vpop.f32.mrb[0].mxu0
        %1821 = vdwg.mxu0
        %1824 = vrot.lane.b32.xlu0 %v1816, 112
        %v1825 = vpop.permute.xlu0 %1824
        %1826 = vrot.lane.b32.xlu0 %v1819, 112
        %v1827 = vpop.permute.xlu0 %1826
        %1830 = vrot.lane.b32.xlu0 %v1816, 96
        %v1831 = vpop.permute.xlu0 %1830
        %1832 = vrot.lane.b32.xlu0 %v1819, 96
        %v1833 = vpop.permute.xlu0 %1832
        %1836 = vrot.lane.b32.xlu0 %v1816, 80
        %v1837 = vpop.permute.xlu0 %1836
        %1838 = vrot.lane.b32.xlu0 %v1819, 80
        %v1839 = vpop.permute.xlu0 %1838
        %1842 = vrot.lane.b32.xlu0 %v1816, 64
        %v1843 = vpop.permute.xlu0 %1842
        %1844 = vrot.lane.b32.xlu0 %v1819, 64
        %v1845 = vpop.permute.xlu0 %1844
        %1848 = vrot.lane.b32.xlu0 %v1816, 48
        %v1849 = vpop.permute.xlu0 %1848
        %1850 = vrot.lane.b32.xlu0 %v1819, 48
        %v1851 = vpop.permute.xlu0 %1850
        %1854 = vrot.lane.b32.xlu0 %v1816, 32
        %v1855 = vpop.permute.xlu0 %1854
        %1856 = vrot.lane.b32.xlu0 %v1819, 32
        %v1857 = vpop.permute.xlu0 %1856
        %1860 = vrot.lane.b32.xlu0 %v1816, 16
        %v1861 = vpop.permute.xlu0 %1860
        %1862 = vrot.lane.b32.xlu0 %v1819, 16
        %v1863 = vpop.permute.xlu0 %1862
        %v1866 = vcombine.low %v1816, %v1831
        %v1867 = vcombine.high %v1816, %v1831
        %v1869 = vunpack.c.l.s4 1983009808
        %v1870 = vunpack.c.0.s8 %v1869
        %v1871 = vlaneseq
        %v1872 = vshrl.u32 %v1871, 7
        %v1873 = vsub.s32 %v1870, %v1872
        %v1874 = vrot.slane %v1866, %v1873
        %v1876 = vunpack.c.l.s4 1983009808
        %v1877 = vunpack.c.0.s8 %v1876
        %v1878 = vlaneseq
        %v1879 = vshrl.u32 %v1878, 7
        %v1880 = vsub.s32 %v1877, %v1879
        %v1881 = vrot.slane %v1867, %v1880
        %v1882 = vcombine.low %v1825, %v1837
        %v1883 = vcombine.high %v1825, %v1837
        %v1885 = vunpack.c.l.s4 1983009808
        %v1886 = vunpack.c.0.s8 %v1885
        %v1887 = vlaneseq
        %v1888 = vshrl.u32 %v1887, 7
        %v1889 = vsub.s32 %v1886, %v1888
        %v1890 = vrot.slane %v1882, %v1889
        %v1892 = vunpack.c.l.s4 1983009808
        %v1893 = vunpack.c.0.s8 %v1892
        %v1894 = vlaneseq
        %v1895 = vshrl.u32 %v1894, 7
        %v1896 = vsub.s32 %v1893, %v1895
        %v1897 = vrot.slane %v1883, %v1896
        %v1898 = vcombine.low %v1843, %v1855
        %v1899 = vcombine.high %v1843, %v1855
        %v1901 = vunpack.c.l.s4 1983009808
        %v1902 = vunpack.c.0.s8 %v1901
        %v1903 = vlaneseq
        %v1904 = vshrl.u32 %v1903, 7
        %v1905 = vsub.s32 %v1902, %v1904
        %v1906 = vrot.slane %v1898, %v1905
        %v1908 = vunpack.c.l.s4 1983009808
        %v1909 = vunpack.c.0.s8 %v1908
        %v1910 = vlaneseq
        %v1911 = vshrl.u32 %v1910, 7
        %v1912 = vsub.s32 %v1909, %v1911
        %v1913 = vrot.slane %v1899, %v1912
        %v1914 = vcombine.low %v1849, %v1861
        %v1915 = vcombine.high %v1849, %v1861
        %v1917 = vunpack.c.l.s4 1983009808
        %v1918 = vunpack.c.0.s8 %v1917
        %v1919 = vlaneseq
        %v1920 = vshrl.u32 %v1919, 7
        %v1921 = vsub.s32 %v1918, %v1920
        %v1922 = vrot.slane %v1914, %v1921
        %v1924 = vunpack.c.l.s4 1983009808
        %v1925 = vunpack.c.0.s8 %v1924
        %v1926 = vlaneseq
        %v1927 = vshrl.u32 %v1926, 7
        %v1928 = vsub.s32 %v1925, %v1927
        %v1929 = vrot.slane %v1915, %v1928
        %v1930 = vcombine.low %v1874, %v1890
        %v1931 = vcombine.high %v1874, %v1890
        %v1933 = vunpack.c.l.s4 1934713408
        %v1934 = vunpack.c.0.s8 %v1933
        %v1935 = vlaneseq
        %v1936 = vshrl.u32 %v1935, 7
        %v1937 = vsub.s32 %v1934, %v1936
        %v1938 = vrot.slane %v1930, %v1937
        %v1940 = vunpack.c.l.s4 1934713408
        %v1941 = vunpack.c.0.s8 %v1940
        %v1942 = vlaneseq
        %v1943 = vshrl.u32 %v1942, 7
        %v1944 = vsub.s32 %v1941, %v1943
        %v1945 = vrot.slane %v1931, %v1944
        %v1946 = vcombine.low %v1881, %v1897
        %v1947 = vcombine.high %v1881, %v1897
        %v1949 = vunpack.c.l.s4 1934713408
        %v1950 = vunpack.c.0.s8 %v1949
        %v1951 = vlaneseq
        %v1952 = vshrl.u32 %v1951, 7
        %v1953 = vsub.s32 %v1950, %v1952
        %v1954 = vrot.slane %v1946, %v1953
        %v1956 = vunpack.c.l.s4 1934713408
        %v1957 = vunpack.c.0.s8 %v1956
        %v1958 = vlaneseq
        %v1959 = vshrl.u32 %v1958, 7
        %v1960 = vsub.s32 %v1957, %v1959
        %v1961 = vrot.slane %v1947, %v1960
        %v1962 = vcombine.low %v1906, %v1922
        %v1963 = vcombine.high %v1906, %v1922
        %v1965 = vunpack.c.l.s4 1934713408
        %v1966 = vunpack.c.0.s8 %v1965
        %v1967 = vlaneseq
        %v1968 = vshrl.u32 %v1967, 7
        %v1969 = vsub.s32 %v1966, %v1968
        %v1970 = vrot.slane %v1962, %v1969
        %v1972 = vunpack.c.l.s4 1934713408
        %v1973 = vunpack.c.0.s8 %v1972
        %v1974 = vlaneseq
        %v1975 = vshrl.u32 %v1974, 7
        %v1976 = vsub.s32 %v1973, %v1975
        %v1977 = vrot.slane %v1963, %v1976
        %v1978 = vcombine.low %v1913, %v1929
        %v1979 = vcombine.high %v1913, %v1929
        %v1981 = vunpack.c.l.s4 1934713408
        %v1982 = vunpack.c.0.s8 %v1981
        %v1983 = vlaneseq
        %v1984 = vshrl.u32 %v1983, 7
        %v1985 = vsub.s32 %v1982, %v1984
        %v1986 = vrot.slane %v1978, %v1985
        %v1988 = vunpack.c.l.s4 1934713408
        %v1989 = vunpack.c.0.s8 %v1988
        %v1990 = vlaneseq
        %v1991 = vshrl.u32 %v1990, 7
        %v1992 = vsub.s32 %v1989, %v1991
        %v1993 = vrot.slane %v1979, %v1992
        %v1994 = vcombine.low %v1938, %v1970
        %v1995 = vcombine.high %v1938, %v1970
        %v1996 = vcombine.low %v1945, %v1977
        %v1997 = vcombine.high %v1945, %v1977
        %v1998 = vcombine.low %v1954, %v1986
        %v1999 = vcombine.high %v1954, %v1986
        %v2000 = vcombine.low %v1961, %v1993
        %v2001 = vcombine.high %v1961, %v1993
        %v2002 = vcombine.low %v1819, %v1833
        %v2003 = vcombine.high %v1819, %v1833
        %v2005 = vunpack.c.l.s4 1983009808
        %v2006 = vunpack.c.0.s8 %v2005
        %v2007 = vlaneseq
        %v2008 = vshrl.u32 %v2007, 7
        %v2009 = vsub.s32 %v2006, %v2008
        %v2010 = vrot.slane %v2002, %v2009
        %v2012 = vunpack.c.l.s4 1983009808
        %v2013 = vunpack.c.0.s8 %v2012
        %v2014 = vlaneseq
        %v2015 = vshrl.u32 %v2014, 7
        %v2016 = vsub.s32 %v2013, %v2015
        %v2017 = vrot.slane %v2003, %v2016
        %v2018 = vcombine.low %v1827, %v1839
        %v2019 = vcombine.high %v1827, %v1839
        %v2021 = vunpack.c.l.s4 1983009808
        %v2022 = vunpack.c.0.s8 %v2021
        %v2023 = vlaneseq
        %v2024 = vshrl.u32 %v2023, 7
        %v2025 = vsub.s32 %v2022, %v2024
        %v2026 = vrot.slane %v2018, %v2025
        %v2028 = vunpack.c.l.s4 1983009808
        %v2029 = vunpack.c.0.s8 %v2028
        %v2030 = vlaneseq
        %v2031 = vshrl.u32 %v2030, 7
        %v2032 = vsub.s32 %v2029, %v2031
        %v2033 = vrot.slane %v2019, %v2032
        %v2034 = vcombine.low %v1845, %v1857
        %v2035 = vcombine.high %v1845, %v1857
        %v2037 = vunpack.c.l.s4 1983009808
        %v2038 = vunpack.c.0.s8 %v2037
        %v2039 = vlaneseq
        %v2040 = vshrl.u32 %v2039, 7
        %v2041 = vsub.s32 %v2038, %v2040
        %v2042 = vrot.slane %v2034, %v2041
        %v2044 = vunpack.c.l.s4 1983009808
        %v2045 = vunpack.c.0.s8 %v2044
        %v2046 = vlaneseq
        %v2047 = vshrl.u32 %v2046, 7
        %v2048 = vsub.s32 %v2045, %v2047
        %v2049 = vrot.slane %v2035, %v2048
        %v2050 = vcombine.low %v1851, %v1863
        %v2051 = vcombine.high %v1851, %v1863
        %v2053 = vunpack.c.l.s4 1983009808
        %v2054 = vunpack.c.0.s8 %v2053
        %v2055 = vlaneseq
        %v2056 = vshrl.u32 %v2055, 7
        %v2057 = vsub.s32 %v2054, %v2056
        %v2058 = vrot.slane %v2050, %v2057
        %v2060 = vunpack.c.l.s4 1983009808
        %v2061 = vunpack.c.0.s8 %v2060
        %v2062 = vlaneseq
        %v2063 = vshrl.u32 %v2062, 7
        %v2064 = vsub.s32 %v2061, %v2063
        %v2065 = vrot.slane %v2051, %v2064
        %v2066 = vcombine.low %v2010, %v2026
        %v2067 = vcombine.high %v2010, %v2026
        %v2069 = vunpack.c.l.s4 1934713408
        %v2070 = vunpack.c.0.s8 %v2069
        %v2071 = vlaneseq
        %v2072 = vshrl.u32 %v2071, 7
        %v2073 = vsub.s32 %v2070, %v2072
        %v2074 = vrot.slane %v2066, %v2073
        %v2076 = vunpack.c.l.s4 1934713408
        %v2077 = vunpack.c.0.s8 %v2076
        %v2078 = vlaneseq
        %v2079 = vshrl.u32 %v2078, 7
        %v2080 = vsub.s32 %v2077, %v2079
        %v2081 = vrot.slane %v2067, %v2080
        %v2082 = vcombine.low %v2017, %v2033
        %v2083 = vcombine.high %v2017, %v2033
        %v2085 = vunpack.c.l.s4 1934713408
        %v2086 = vunpack.c.0.s8 %v2085
        %v2087 = vlaneseq
        %v2088 = vshrl.u32 %v2087, 7
        %v2089 = vsub.s32 %v2086, %v2088
        %v2090 = vrot.slane %v2082, %v2089
        %v2092 = vunpack.c.l.s4 1934713408
        %v2093 = vunpack.c.0.s8 %v2092
        %v2094 = vlaneseq
        %v2095 = vshrl.u32 %v2094, 7
        %v2096 = vsub.s32 %v2093, %v2095
        %v2097 = vrot.slane %v2083, %v2096
        %v2098 = vcombine.low %v2042, %v2058
        %v2099 = vcombine.high %v2042, %v2058
        %v2101 = vunpack.c.l.s4 1934713408
        %v2102 = vunpack.c.0.s8 %v2101
        %v2103 = vlaneseq
        %v2104 = vshrl.u32 %v2103, 7
        %v2105 = vsub.s32 %v2102, %v2104
        %v2106 = vrot.slane %v2098, %v2105
        %v2108 = vunpack.c.l.s4 1934713408
        %v2109 = vunpack.c.0.s8 %v2108
        %v2110 = vlaneseq
        %v2111 = vshrl.u32 %v2110, 7
        %v2112 = vsub.s32 %v2109, %v2111
        %v2113 = vrot.slane %v2099, %v2112
        %v2114 = vcombine.low %v2049, %v2065
        %v2115 = vcombine.high %v2049, %v2065
        %v2117 = vunpack.c.l.s4 1934713408
        %v2118 = vunpack.c.0.s8 %v2117
        %v2119 = vlaneseq
        %v2120 = vshrl.u32 %v2119, 7
        %v2121 = vsub.s32 %v2118, %v2120
        %v2122 = vrot.slane %v2114, %v2121
        %v2124 = vunpack.c.l.s4 1934713408
        %v2125 = vunpack.c.0.s8 %v2124
        %v2126 = vlaneseq
        %v2127 = vshrl.u32 %v2126, 7
        %v2128 = vsub.s32 %v2125, %v2127
        %v2129 = vrot.slane %v2115, %v2128
        %v2130 = vcombine.low %v2074, %v2106
        %v2131 = vcombine.high %v2074, %v2106
        %v2132 = vcombine.low %v2081, %v2113
        %v2133 = vcombine.high %v2081, %v2113
        %v2134 = vcombine.low %v2090, %v2122
        %v2135 = vcombine.high %v2090, %v2122
        %v2136 = vcombine.low %v2097, %v2129
        %v2137 = vcombine.high %v2097, %v2129
        %v2138 = vcombine.low %v1994, %v1996
        %v2139 = vcombine.high %v1994, %v1996
        %v2141 = vunpack.c.l.s4 1983009808
        %v2142 = vunpack.c.0.s8 %v2141
        %v2143 = vlaneseq
        %v2144 = vshrl.u32 %v2143, 7
        %v2145 = vsub.s32 %v2142, %v2144
        %v2146 = vrot.slane %v2138, %v2145
        %v2148 = vunpack.c.l.s4 1983009808
        %v2149 = vunpack.c.0.s8 %v2148
        %v2150 = vlaneseq
        %v2151 = vshrl.u32 %v2150, 7
        %v2152 = vsub.s32 %v2149, %v2151
        %v2153 = vrot.slane %v2139, %v2152
        %v2154 = vcombine.low %v1995, %v1997
        %v2155 = vcombine.high %v1995, %v1997
        %v2157 = vunpack.c.l.s4 1983009808
        %v2158 = vunpack.c.0.s8 %v2157
        %v2159 = vlaneseq
        %v2160 = vshrl.u32 %v2159, 7
        %v2161 = vsub.s32 %v2158, %v2160
        %v2162 = vrot.slane %v2154, %v2161
        %v2164 = vunpack.c.l.s4 1983009808
        %v2165 = vunpack.c.0.s8 %v2164
        %v2166 = vlaneseq
        %v2167 = vshrl.u32 %v2166, 7
        %v2168 = vsub.s32 %v2165, %v2167
        %v2169 = vrot.slane %v2155, %v2168
        %v2170 = vcombine.low %v1998, %v2000
        %v2171 = vcombine.high %v1998, %v2000
        %v2173 = vunpack.c.l.s4 1983009808
        %v2174 = vunpack.c.0.s8 %v2173
        %v2175 = vlaneseq
        %v2176 = vshrl.u32 %v2175, 7
        %v2177 = vsub.s32 %v2174, %v2176
        %v2178 = vrot.slane %v2170, %v2177
        %v2180 = vunpack.c.l.s4 1983009808
        %v2181 = vunpack.c.0.s8 %v2180
        %v2182 = vlaneseq
        %v2183 = vshrl.u32 %v2182, 7
        %v2184 = vsub.s32 %v2181, %v2183
        %v2185 = vrot.slane %v2171, %v2184
        %v2186 = vcombine.low %v1999, %v2001
        %v2187 = vcombine.high %v1999, %v2001
        %v2189 = vunpack.c.l.s4 1983009808
        %v2190 = vunpack.c.0.s8 %v2189
        %v2191 = vlaneseq
        %v2192 = vshrl.u32 %v2191, 7
        %v2193 = vsub.s32 %v2190, %v2192
        %v2194 = vrot.slane %v2186, %v2193
        %v2196 = vunpack.c.l.s4 1983009808
        %v2197 = vunpack.c.0.s8 %v2196
        %v2198 = vlaneseq
        %v2199 = vshrl.u32 %v2198, 7
        %v2200 = vsub.s32 %v2197, %v2199
        %v2201 = vrot.slane %v2187, %v2200
        %v2202 = vcombine.low %v2146, %v2162
        %v2203 = vcombine.high %v2146, %v2162
        %v2205 = vunpack.c.l.s4 1934713408
        %v2206 = vunpack.c.0.s8 %v2205
        %v2207 = vlaneseq
        %v2208 = vshrl.u32 %v2207, 7
        %v2209 = vsub.s32 %v2206, %v2208
        %v2210 = vrot.slane %v2202, %v2209
        %v2212 = vunpack.c.l.s4 1934713408
        %v2213 = vunpack.c.0.s8 %v2212
        %v2214 = vlaneseq
        %v2215 = vshrl.u32 %v2214, 7
        %v2216 = vsub.s32 %v2213, %v2215
        %v2217 = vrot.slane %v2203, %v2216
        %v2218 = vcombine.low %v2153, %v2169
        %v2219 = vcombine.high %v2153, %v2169
        %v2221 = vunpack.c.l.s4 1934713408
        %v2222 = vunpack.c.0.s8 %v2221
        %v2223 = vlaneseq
        %v2224 = vshrl.u32 %v2223, 7
        %v2225 = vsub.s32 %v2222, %v2224
        %v2226 = vrot.slane %v2218, %v2225
        %v2228 = vunpack.c.l.s4 1934713408
        %v2229 = vunpack.c.0.s8 %v2228
        %v2230 = vlaneseq
        %v2231 = vshrl.u32 %v2230, 7
        %v2232 = vsub.s32 %v2229, %v2231
        %v2233 = vrot.slane %v2219, %v2232
        %v2234 = vcombine.low %v2178, %v2194
        %v2235 = vcombine.high %v2178, %v2194
        %v2237 = vunpack.c.l.s4 1934713408
        %v2238 = vunpack.c.0.s8 %v2237
        %v2239 = vlaneseq
        %v2240 = vshrl.u32 %v2239, 7
        %v2241 = vsub.s32 %v2238, %v2240
        %v2242 = vrot.slane %v2234, %v2241
        %v2244 = vunpack.c.l.s4 1934713408
        %v2245 = vunpack.c.0.s8 %v2244
        %v2246 = vlaneseq
        %v2247 = vshrl.u32 %v2246, 7
        %v2248 = vsub.s32 %v2245, %v2247
        %v2249 = vrot.slane %v2235, %v2248
        %v2250 = vcombine.low %v2185, %v2201
        %v2251 = vcombine.high %v2185, %v2201
        %v2253 = vunpack.c.l.s4 1934713408
        %v2254 = vunpack.c.0.s8 %v2253
        %v2255 = vlaneseq
        %v2256 = vshrl.u32 %v2255, 7
        %v2257 = vsub.s32 %v2254, %v2256
        %v2258 = vrot.slane %v2250, %v2257
        %v2260 = vunpack.c.l.s4 1934713408
        %v2261 = vunpack.c.0.s8 %v2260
        %v2262 = vlaneseq
        %v2263 = vshrl.u32 %v2262, 7
        %v2264 = vsub.s32 %v2261, %v2263
        %v2265 = vrot.slane %v2251, %v2264
        %v2266 = vcombine.low %v2210, %v2242
        %v2267 = vcombine.high %v2210, %v2242
        %v2268 = vcombine.low %v2217, %v2249
        %v2269 = vcombine.high %v2217, %v2249
        %v2270 = vcombine.low %v2226, %v2258
        %v2271 = vcombine.high %v2226, %v2258
        %v2272 = vcombine.low %v2233, %v2265
        %v2273 = vcombine.high %v2233, %v2265
        %v2274 = vcombine.low %v2130, %v2132
        %v2275 = vcombine.high %v2130, %v2132
        %v2277 = vunpack.c.l.s4 1983009808
        %v2278 = vunpack.c.0.s8 %v2277
        %v2279 = vlaneseq
        %v2280 = vshrl.u32 %v2279, 7
        %v2281 = vsub.s32 %v2278, %v2280
        %v2282 = vrot.slane %v2274, %v2281
        %v2284 = vunpack.c.l.s4 1983009808
        %v2285 = vunpack.c.0.s8 %v2284
        %v2286 = vlaneseq
        %v2287 = vshrl.u32 %v2286, 7
        %v2288 = vsub.s32 %v2285, %v2287
        %v2289 = vrot.slane %v2275, %v2288
        %v2290 = vcombine.low %v2131, %v2133
        %v2291 = vcombine.high %v2131, %v2133
        %v2293 = vunpack.c.l.s4 1983009808
        %v2294 = vunpack.c.0.s8 %v2293
        %v2295 = vlaneseq
        %v2296 = vshrl.u32 %v2295, 7
        %v2297 = vsub.s32 %v2294, %v2296
        %v2298 = vrot.slane %v2290, %v2297
        %v2300 = vunpack.c.l.s4 1983009808
        %v2301 = vunpack.c.0.s8 %v2300
        %v2302 = vlaneseq
        %v2303 = vshrl.u32 %v2302, 7
        %v2304 = vsub.s32 %v2301, %v2303
        %v2305 = vrot.slane %v2291, %v2304
        %v2306 = vcombine.low %v2134, %v2136
        %v2307 = vcombine.high %v2134, %v2136
        %v2309 = vunpack.c.l.s4 1983009808
        %v2310 = vunpack.c.0.s8 %v2309
        %v2311 = vlaneseq
        %v2312 = vshrl.u32 %v2311, 7
        %v2313 = vsub.s32 %v2310, %v2312
        %v2314 = vrot.slane %v2306, %v2313
        %v2316 = vunpack.c.l.s4 1983009808
        %v2317 = vunpack.c.0.s8 %v2316
        %v2318 = vlaneseq
        %v2319 = vshrl.u32 %v2318, 7
        %v2320 = vsub.s32 %v2317, %v2319
        %v2321 = vrot.slane %v2307, %v2320
        %v2322 = vcombine.low %v2135, %v2137
        %v2323 = vcombine.high %v2135, %v2137
        %v2325 = vunpack.c.l.s4 1983009808
        %v2326 = vunpack.c.0.s8 %v2325
        %v2327 = vlaneseq
        %v2328 = vshrl.u32 %v2327, 7
        %v2329 = vsub.s32 %v2326, %v2328
        %v2330 = vrot.slane %v2322, %v2329
        %v2332 = vunpack.c.l.s4 1983009808
        %v2333 = vunpack.c.0.s8 %v2332
        %v2334 = vlaneseq
        %v2335 = vshrl.u32 %v2334, 7
        %v2336 = vsub.s32 %v2333, %v2335
        %v2337 = vrot.slane %v2323, %v2336
        %v2338 = vcombine.low %v2282, %v2298
        %v2339 = vcombine.high %v2282, %v2298
        %v2341 = vunpack.c.l.s4 1934713408
        %v2342 = vunpack.c.0.s8 %v2341
        %v2343 = vlaneseq
        %v2344 = vshrl.u32 %v2343, 7
        %v2345 = vsub.s32 %v2342, %v2344
        %v2346 = vrot.slane %v2338, %v2345
        %v2348 = vunpack.c.l.s4 1934713408
        %v2349 = vunpack.c.0.s8 %v2348
        %v2350 = vlaneseq
        %v2351 = vshrl.u32 %v2350, 7
        %v2352 = vsub.s32 %v2349, %v2351
        %v2353 = vrot.slane %v2339, %v2352
        %v2354 = vcombine.low %v2289, %v2305
        %v2355 = vcombine.high %v2289, %v2305
        %v2357 = vunpack.c.l.s4 1934713408
        %v2358 = vunpack.c.0.s8 %v2357
        %v2359 = vlaneseq
        %v2360 = vshrl.u32 %v2359, 7
        %v2361 = vsub.s32 %v2358, %v2360
        %v2362 = vrot.slane %v2354, %v2361
        %v2364 = vunpack.c.l.s4 1934713408
        %v2365 = vunpack.c.0.s8 %v2364
        %v2366 = vlaneseq
        %v2367 = vshrl.u32 %v2366, 7
        %v2368 = vsub.s32 %v2365, %v2367
        %v2369 = vrot.slane %v2355, %v2368
        %v2370 = vcombine.low %v2314, %v2330
        %v2371 = vcombine.high %v2314, %v2330
        %v2373 = vunpack.c.l.s4 1934713408
        %v2374 = vunpack.c.0.s8 %v2373
        %v2375 = vlaneseq
        %v2376 = vshrl.u32 %v2375, 7
        %v2377 = vsub.s32 %v2374, %v2376
        %v2378 = vrot.slane %v2370, %v2377
        %v2380 = vunpack.c.l.s4 1934713408
        %v2381 = vunpack.c.0.s8 %v2380
        %v2382 = vlaneseq
        %v2383 = vshrl.u32 %v2382, 7
        %v2384 = vsub.s32 %v2381, %v2383
        %v2385 = vrot.slane %v2371, %v2384
        %v2386 = vcombine.low %v2321, %v2337
        %v2387 = vcombine.high %v2321, %v2337
        %v2389 = vunpack.c.l.s4 1934713408
        %v2390 = vunpack.c.0.s8 %v2389
        %v2391 = vlaneseq
        %v2392 = vshrl.u32 %v2391, 7
        %v2393 = vsub.s32 %v2390, %v2392
        %v2394 = vrot.slane %v2386, %v2393
        %v2396 = vunpack.c.l.s4 1934713408
        %v2397 = vunpack.c.0.s8 %v2396
        %v2398 = vlaneseq
        %v2399 = vshrl.u32 %v2398, 7
        %v2400 = vsub.s32 %v2397, %v2399
        %v2401 = vrot.slane %v2387, %v2400
        %v2402 = vcombine.low %v2346, %v2378
        %v2403 = vcombine.high %v2346, %v2378
        %v2404 = vcombine.low %v2353, %v2385
        %v2405 = vcombine.high %v2353, %v2385
        %v2406 = vcombine.low %v2362, %v2394
        %v2407 = vcombine.high %v2362, %v2394
        %v2408 = vcombine.low %v2369, %v2401
        %v2409 = vcombine.high %v2369, %v2401
        %v2410 = vpack.c.bf16 %v2402, %v2266
        %v2411 = vpack.c.bf16 %v2403, %v2267
        %v2412 = vpack.c.bf16 %v2404, %v2268
        %v2413 = vpack.c.bf16 %v2405, %v2269
        %v2414 = vpack.c.bf16 %v2406, %v2270
        %v2415 = vpack.c.bf16 %v2407, %v2271
        %v2416 = vpack.c.bf16 %v2408, %v2272
        %v2417 = vpack.c.bf16 %v2409, %v2273
        %v2418 = vld [vmem:[#allocation2] sm:$0xff]
        %v2419 = vld [vmem:[#allocation2 + $0x8] sm:$0xff]
        %v2420 = vld [vmem:[#allocation2 + $0x10] sm:$0xff]
        %v2421 = vld [vmem:[#allocation2 + $0x18] sm:$0xff]
        %v2422 = vld [vmem:[#allocation2 + $0x20] sm:$0xff]
        %v2423 = vld [vmem:[#allocation2 + $0x28] sm:$0xff]
        %v2424 = vld [vmem:[#allocation2 + $0x30] sm:$0xff]
        %v2425 = vld [vmem:[#allocation2 + $0x38] sm:$0xff]
        %vm2426 = vcmask 130048
        %v2428 = vsel %vm2426, %v2410, 0
        %v2431 = vsel %vm2426, %v2418, 0
        %2433 = vmatprep.subr.bf16.mxu0 0
        %2434 = vmatpush1.bf16.xpose.msra.mxu0 %v2431
        %2435 = vmatprep.subr.bf16.mxu0 0
        %2436 = vmatpush1.bf16.xpose.msra.mxu0 0
        %2437 = vmatprep.subr.bf16.mxu0 0
        %2438 = vmatpush1.bf16.xpose.msra.mxu0 0
        %2439 = vmatprep.subr.bf16.mxu0 0
        %2440 = vmatpush1.bf16.xpose.msra.mxu0 0
        %2441 = vmatprep.subr.bf16.mxu0 0
        %2442 = vmatpush1.bf16.xpose.msra.mxu0 0
        %2443 = vmatprep.subr.bf16.mxu0 0
        %2444 = vmatpush1.bf16.xpose.msra.mxu0 0
        %2445 = vmatprep.subr.bf16.mxu0 0
        %2446 = vmatpush1.bf16.xpose.msra.mxu0 0
        %2447 = vmatprep.subr.bf16.mxu0 0
        %2448 = vmatpush1.bf16.xpose.msra.mxu0 0
        %2449 = vmatprep.subr.bf16.mxu0 0
        %2450 = vmatpush1.bf16.xpose.msra.mxu0 0
        %2451 = vmatprep.subr.bf16.mxu0 0
        %2452 = vmatpush1.bf16.xpose.msra.mxu0 0
        %2453 = vmatprep.subr.bf16.mxu0 0
        %2454 = vmatpush1.bf16.xpose.msra.mxu0 0
        %2455 = vmatprep.subr.bf16.mxu0 0
        %2456 = vmatpush1.bf16.xpose.msra.mxu0 0
        %2457 = vmatprep.subr.bf16.mxu0 0
        %2458 = vmatpush1.bf16.xpose.msra.mxu0 0
        %2459 = vmatprep.subr.bf16.mxu0 0
        %2460 = vmatpush1.bf16.xpose.msra.mxu0 0
        %2461 = vmatprep.subr.bf16.mxu0 0
        %2462 = vmatpush1.bf16.xpose.msra.mxu0 0
        %2463 = vmatprep.subr.bf16.mxu0 0
        %2464 = vmatpush1.bf16.xpose.msra.mxu0 0
        %2465 = vmatprep.mubr.bf16.mxu0 0
        %2466 = vmatmul.mubr.bf16.gmra.mrb[0].mxu0 %v2428
        %v2467 = vpop.f32.mrb[0].mxu0
        %v2468 = vadd.f32 0.0, %v2467
        %v2469 = vpop.f32.mrb[0].mxu0
        %v2470 = vpop.f32.mrb[0].mxu0
        %v2471 = vadd.f32 0.0, %v2470
        %v2472 = vpop.f32.mrb[0].mxu0
        %2473 = vdwg.mxu0
        %v2475 = vsel %vm2426, %v2411, 0
        %v2478 = vsel %vm2426, %v2419, 0
        %2480 = vmatprep.subr.bf16.mxu0 0
        %2481 = vmatpush1.bf16.xpose.msra.mxu0 %v2478
        %2482 = vmatprep.subr.bf16.mxu0 0
        %2483 = vmatpush1.bf16.xpose.msra.mxu0 0
        %2484 = vmatprep.subr.bf16.mxu0 0
        %2485 = vmatpush1.bf16.xpose.msra.mxu0 0
        %2486 = vmatprep.subr.bf16.mxu0 0
        %2487 = vmatpush1.bf16.xpose.msra.mxu0 0
        %2488 = vmatprep.subr.bf16.mxu0 0
        %2489 = vmatpush1.bf16.xpose.msra.mxu0 0
        %2490 = vmatprep.subr.bf16.mxu0 0
        %2491 = vmatpush1.bf16.xpose.msra.mxu0 0
        %2492 = vmatprep.subr.bf16.mxu0 0
        %2493 = vmatpush1.bf16.xpose.msra.mxu0 0
        %2494 = vmatprep.subr.bf16.mxu0 0
        %2495 = vmatpush1.bf16.xpose.msra.mxu0 0
        %2496 = vmatprep.subr.bf16.mxu0 0
        %2497 = vmatpush1.bf16.xpose.msra.mxu0 0
        %2498 = vmatprep.subr.bf16.mxu0 0
        %2499 = vmatpush1.bf16.xpose.msra.mxu0 0
        %2500 = vmatprep.subr.bf16.mxu0 0
        %2501 = vmatpush1.bf16.xpose.msra.mxu0 0
        %2502 = vmatprep.subr.bf16.mxu0 0
        %2503 = vmatpush1.bf16.xpose.msra.mxu0 0
        %2504 = vmatprep.subr.bf16.mxu0 0
        %2505 = vmatpush1.bf16.xpose.msra.mxu0 0
        %2506 = vmatprep.subr.bf16.mxu0 0
        %2507 = vmatpush1.bf16.xpose.msra.mxu0 0
        %2508 = vmatprep.subr.bf16.mxu0 0
        %2509 = vmatpush1.bf16.xpose.msra.mxu0 0
        %2510 = vmatprep.subr.bf16.mxu0 0
        %2511 = vmatpush1.bf16.xpose.msra.mxu0 0
        %2512 = vmatprep.mubr.bf16.mxu0 0
        %2513 = vmatmul.mubr.bf16.gmra.mrb[0].mxu0 %v2475
        %v2514 = vpop.f32.mrb[0].mxu0
        %v2515 = vadd.f32 0.0, %v2514
        %v2516 = vpop.f32.mrb[0].mxu0
        %v2517 = vpop.f32.mrb[0].mxu0
        %v2518 = vadd.f32 0.0, %v2517
        %v2519 = vpop.f32.mrb[0].mxu0
        %2520 = vdwg.mxu0
        %v2522 = vsel %vm2426, %v2412, 0
        %v2525 = vsel %vm2426, %v2420, 0
        %2527 = vmatprep.subr.bf16.mxu0 0
        %2528 = vmatpush1.bf16.xpose.msra.mxu0 %v2525
        %2529 = vmatprep.subr.bf16.mxu0 0
        %2530 = vmatpush1.bf16.xpose.msra.mxu0 0
        %2531 = vmatprep.subr.bf16.mxu0 0
        %2532 = vmatpush1.bf16.xpose.msra.mxu0 0
        %2533 = vmatprep.subr.bf16.mxu0 0
        %2534 = vmatpush1.bf16.xpose.msra.mxu0 0
        %2535 = vmatprep.subr.bf16.mxu0 0
        %2536 = vmatpush1.bf16.xpose.msra.mxu0 0
        %2537 = vmatprep.subr.bf16.mxu0 0
        %2538 = vmatpush1.bf16.xpose.msra.mxu0 0
        %2539 = vmatprep.subr.bf16.mxu0 0
        %2540 = vmatpush1.bf16.xpose.msra.mxu0 0
        %2541 = vmatprep.subr.bf16.mxu0 0
        %2542 = vmatpush1.bf16.xpose.msra.mxu0 0
        %2543 = vmatprep.subr.bf16.mxu0 0
        %2544 = vmatpush1.bf16.xpose.msra.mxu0 0
        %2545 = vmatprep.subr.bf16.mxu0 0
        %2546 = vmatpush1.bf16.xpose.msra.mxu0 0
        %2547 = vmatprep.subr.bf16.mxu0 0
        %2548 = vmatpush1.bf16.xpose.msra.mxu0 0
        %2549 = vmatprep.subr.bf16.mxu0 0
        %2550 = vmatpush1.bf16.xpose.msra.mxu0 0
        %2551 = vmatprep.subr.bf16.mxu0 0
        %2552 = vmatpush1.bf16.xpose.msra.mxu0 0
        %2553 = vmatprep.subr.bf16.mxu0 0
        %2554 = vmatpush1.bf16.xpose.msra.mxu0 0
        %2555 = vmatprep.subr.bf16.mxu0 0
        %2556 = vmatpush1.bf16.xpose.msra.mxu0 0
        %2557 = vmatprep.subr.bf16.mxu0 0
        %2558 = vmatpush1.bf16.xpose.msra.mxu0 0
        %2559 = vmatprep.mubr.bf16.mxu0 0
        %2560 = vmatmul.mubr.bf16.gmra.mrb[0].mxu0 %v2522
        %v2561 = vpop.f32.mrb[0].mxu0
        %v2562 = vadd.f32 0.0, %v2561
        %v2563 = vpop.f32.mrb[0].mxu0
        %v2564 = vpop.f32.mrb[0].mxu0
        %v2565 = vadd.f32 0.0, %v2564
        %v2566 = vpop.f32.mrb[0].mxu0
        %2567 = vdwg.mxu0
        %v2569 = vsel %vm2426, %v2413, 0
        %v2572 = vsel %vm2426, %v2421, 0
        %2574 = vmatprep.subr.bf16.mxu0 0
        %2575 = vmatpush1.bf16.xpose.msra.mxu0 %v2572
        %2576 = vmatprep.subr.bf16.mxu0 0
        %2577 = vmatpush1.bf16.xpose.msra.mxu0 0
        %2578 = vmatprep.subr.bf16.mxu0 0
        %2579 = vmatpush1.bf16.xpose.msra.mxu0 0
        %2580 = vmatprep.subr.bf16.mxu0 0
        %2581 = vmatpush1.bf16.xpose.msra.mxu0 0
        %2582 = vmatprep.subr.bf16.mxu0 0
        %2583 = vmatpush1.bf16.xpose.msra.mxu0 0
        %2584 = vmatprep.subr.bf16.mxu0 0
        %2585 = vmatpush1.bf16.xpose.msra.mxu0 0
        %2586 = vmatprep.subr.bf16.mxu0 0
        %2587 = vmatpush1.bf16.xpose.msra.mxu0 0
        %2588 = vmatprep.subr.bf16.mxu0 0
        %2589 = vmatpush1.bf16.xpose.msra.mxu0 0
        %2590 = vmatprep.subr.bf16.mxu0 0
        %2591 = vmatpush1.bf16.xpose.msra.mxu0 0
        %2592 = vmatprep.subr.bf16.mxu0 0
        %2593 = vmatpush1.bf16.xpose.msra.mxu0 0
        %2594 = vmatprep.subr.bf16.mxu0 0
        %2595 = vmatpush1.bf16.xpose.msra.mxu0 0
        %2596 = vmatprep.subr.bf16.mxu0 0
        %2597 = vmatpush1.bf16.xpose.msra.mxu0 0
        %2598 = vmatprep.subr.bf16.mxu0 0
        %2599 = vmatpush1.bf16.xpose.msra.mxu0 0
        %2600 = vmatprep.subr.bf16.mxu0 0
        %2601 = vmatpush1.bf16.xpose.msra.mxu0 0
        %2602 = vmatprep.subr.bf16.mxu0 0
        %2603 = vmatpush1.bf16.xpose.msra.mxu0 0
        %2604 = vmatprep.subr.bf16.mxu0 0
        %2605 = vmatpush1.bf16.xpose.msra.mxu0 0
        %2606 = vmatprep.mubr.bf16.mxu0 0
        %2607 = vmatmul.mubr.bf16.gmra.mrb[0].mxu0 %v2569
        %v2608 = vpop.f32.mrb[0].mxu0
        %v2609 = vadd.f32 0.0, %v2608
        %v2610 = vpop.f32.mrb[0].mxu0
        %v2611 = vpop.f32.mrb[0].mxu0
        %v2612 = vadd.f32 0.0, %v2611
        %v2613 = vpop.f32.mrb[0].mxu0
        %2614 = vdwg.mxu0
        %v2616 = vsel %vm2426, %v2414, 0
        %v2619 = vsel %vm2426, %v2422, 0
        %2621 = vmatprep.subr.bf16.mxu0 0
        %2622 = vmatpush1.bf16.xpose.msra.mxu0 %v2619
        %2623 = vmatprep.subr.bf16.mxu0 0
        %2624 = vmatpush1.bf16.xpose.msra.mxu0 0
        %2625 = vmatprep.subr.bf16.mxu0 0
        %2626 = vmatpush1.bf16.xpose.msra.mxu0 0
        %2627 = vmatprep.subr.bf16.mxu0 0
        %2628 = vmatpush1.bf16.xpose.msra.mxu0 0
        %2629 = vmatprep.subr.bf16.mxu0 0
        %2630 = vmatpush1.bf16.xpose.msra.mxu0 0
        %2631 = vmatprep.subr.bf16.mxu0 0
        %2632 = vmatpush1.bf16.xpose.msra.mxu0 0
        %2633 = vmatprep.subr.bf16.mxu0 0
        %2634 = vmatpush1.bf16.xpose.msra.mxu0 0
        %2635 = vmatprep.subr.bf16.mxu0 0
        %2636 = vmatpush1.bf16.xpose.msra.mxu0 0
        %2637 = vmatprep.subr.bf16.mxu0 0
        %2638 = vmatpush1.bf16.xpose.msra.mxu0 0
        %2639 = vmatprep.subr.bf16.mxu0 0
        %2640 = vmatpush1.bf16.xpose.msra.mxu0 0
        %2641 = vmatprep.subr.bf16.mxu0 0
        %2642 = vmatpush1.bf16.xpose.msra.mxu0 0
        %2643 = vmatprep.subr.bf16.mxu0 0
        %2644 = vmatpush1.bf16.xpose.msra.mxu0 0
        %2645 = vmatprep.subr.bf16.mxu0 0
        %2646 = vmatpush1.bf16.xpose.msra.mxu0 0
        %2647 = vmatprep.subr.bf16.mxu0 0
        %2648 = vmatpush1.bf16.xpose.msra.mxu0 0
        %2649 = vmatprep.subr.bf16.mxu0 0
        %2650 = vmatpush1.bf16.xpose.msra.mxu0 0
        %2651 = vmatprep.subr.bf16.mxu0 0
        %2652 = vmatpush1.bf16.xpose.msra.mxu0 0
        %2653 = vmatprep.mubr.bf16.mxu0 0
        %2654 = vmatmul.mubr.bf16.gmra.mrb[0].mxu0 %v2616
        %v2655 = vpop.f32.mrb[0].mxu0
        %v2656 = vadd.f32 0.0, %v2655
        %v2657 = vpop.f32.mrb[0].mxu0
        %v2658 = vpop.f32.mrb[0].mxu0
        %v2659 = vadd.f32 0.0, %v2658
        %v2660 = vpop.f32.mrb[0].mxu0
        %2661 = vdwg.mxu0
        %v2663 = vsel %vm2426, %v2415, 0
        %v2666 = vsel %vm2426, %v2423, 0
        %2668 = vmatprep.subr.bf16.mxu0 0
        %2669 = vmatpush1.bf16.xpose.msra.mxu0 %v2666
        %2670 = vmatprep.subr.bf16.mxu0 0
        %2671 = vmatpush1.bf16.xpose.msra.mxu0 0
        %2672 = vmatprep.subr.bf16.mxu0 0
        %2673 = vmatpush1.bf16.xpose.msra.mxu0 0
        %2674 = vmatprep.subr.bf16.mxu0 0
        %2675 = vmatpush1.bf16.xpose.msra.mxu0 0
        %2676 = vmatprep.subr.bf16.mxu0 0
        %2677 = vmatpush1.bf16.xpose.msra.mxu0 0
        %2678 = vmatprep.subr.bf16.mxu0 0
        %2679 = vmatpush1.bf16.xpose.msra.mxu0 0
        %2680 = vmatprep.subr.bf16.mxu0 0
        %2681 = vmatpush1.bf16.xpose.msra.mxu0 0
        %2682 = vmatprep.subr.bf16.mxu0 0
        %2683 = vmatpush1.bf16.xpose.msra.mxu0 0
        %2684 = vmatprep.subr.bf16.mxu0 0
        %2685 = vmatpush1.bf16.xpose.msra.mxu0 0
        %2686 = vmatprep.subr.bf16.mxu0 0
        %2687 = vmatpush1.bf16.xpose.msra.mxu0 0
        %2688 = vmatprep.subr.bf16.mxu0 0
        %2689 = vmatpush1.bf16.xpose.msra.mxu0 0
        %2690 = vmatprep.subr.bf16.mxu0 0
        %2691 = vmatpush1.bf16.xpose.msra.mxu0 0
        %2692 = vmatprep.subr.bf16.mxu0 0
        %2693 = vmatpush1.bf16.xpose.msra.mxu0 0
        %2694 = vmatprep.subr.bf16.mxu0 0
        %2695 = vmatpush1.bf16.xpose.msra.mxu0 0
        %2696 = vmatprep.subr.bf16.mxu0 0
        %2697 = vmatpush1.bf16.xpose.msra.mxu0 0
        %2698 = vmatprep.subr.bf16.mxu0 0
        %2699 = vmatpush1.bf16.xpose.msra.mxu0 0
        %2700 = vmatprep.mubr.bf16.mxu0 0
        %2701 = vmatmul.mubr.bf16.gmra.mrb[0].mxu0 %v2663
        %v2702 = vpop.f32.mrb[0].mxu0
        %v2703 = vadd.f32 0.0, %v2702
        %v2704 = vpop.f32.mrb[0].mxu0
        %v2705 = vpop.f32.mrb[0].mxu0
        %v2706 = vadd.f32 0.0, %v2705
        %v2707 = vpop.f32.mrb[0].mxu0
        %2708 = vdwg.mxu0
        %v2710 = vsel %vm2426, %v2416, 0
        %v2713 = vsel %vm2426, %v2424, 0
        %2715 = vmatprep.subr.bf16.mxu0 0
        %2716 = vmatpush1.bf16.xpose.msra.mxu0 %v2713
        %2717 = vmatprep.subr.bf16.mxu0 0
        %2718 = vmatpush1.bf16.xpose.msra.mxu0 0
        %2719 = vmatprep.subr.bf16.mxu0 0
        %2720 = vmatpush1.bf16.xpose.msra.mxu0 0
        %2721 = vmatprep.subr.bf16.mxu0 0
        %2722 = vmatpush1.bf16.xpose.msra.mxu0 0
        %2723 = vmatprep.subr.bf16.mxu0 0
        %2724 = vmatpush1.bf16.xpose.msra.mxu0 0
        %2725 = vmatprep.subr.bf16.mxu0 0
        %2726 = vmatpush1.bf16.xpose.msra.mxu0 0
        %2727 = vmatprep.subr.bf16.mxu0 0
        %2728 = vmatpush1.bf16.xpose.msra.mxu0 0
        %2729 = vmatprep.subr.bf16.mxu0 0
        %2730 = vmatpush1.bf16.xpose.msra.mxu0 0
        %2731 = vmatprep.subr.bf16.mxu0 0
        %2732 = vmatpush1.bf16.xpose.msra.mxu0 0
        %2733 = vmatprep.subr.bf16.mxu0 0
        %2734 = vmatpush1.bf16.xpose.msra.mxu0 0
        %2735 = vmatprep.subr.bf16.mxu0 0
        %2736 = vmatpush1.bf16.xpose.msra.mxu0 0
        %2737 = vmatprep.subr.bf16.mxu0 0
        %2738 = vmatpush1.bf16.xpose.msra.mxu0 0
        %2739 = vmatprep.subr.bf16.mxu0 0
        %2740 = vmatpush1.bf16.xpose.msra.mxu0 0
        %2741 = vmatprep.subr.bf16.mxu0 0
        %2742 = vmatpush1.bf16.xpose.msra.mxu0 0
        %2743 = vmatprep.subr.bf16.mxu0 0
        %2744 = vmatpush1.bf16.xpose.msra.mxu0 0
        %2745 = vmatprep.subr.bf16.mxu0 0
        %2746 = vmatpush1.bf16.xpose.msra.mxu0 0
        %2747 = vmatprep.mubr.bf16.mxu0 0
        %2748 = vmatmul.mubr.bf16.gmra.mrb[0].mxu0 %v2710
        %v2749 = vpop.f32.mrb[0].mxu0
        %v2750 = vadd.f32 0.0, %v2749
        %v2751 = vpop.f32.mrb[0].mxu0
        %v2752 = vpop.f32.mrb[0].mxu0
        %v2753 = vadd.f32 0.0, %v2752
        %v2754 = vpop.f32.mrb[0].mxu0
        %2755 = vdwg.mxu0
        %v2757 = vsel %vm2426, %v2417, 0
        %v2760 = vsel %vm2426, %v2425, 0
        %2762 = vmatprep.subr.bf16.mxu0 0
        %2763 = vmatpush1.bf16.xpose.msra.mxu0 %v2760
        %2764 = vmatprep.subr.bf16.mxu0 0
        %2765 = vmatpush1.bf16.xpose.msra.mxu0 0
        %2766 = vmatprep.subr.bf16.mxu0 0
        %2767 = vmatpush1.bf16.xpose.msra.mxu0 0
        %2768 = vmatprep.subr.bf16.mxu0 0
        %2769 = vmatpush1.bf16.xpose.msra.mxu0 0
        %2770 = vmatprep.subr.bf16.mxu0 0
        %2771 = vmatpush1.bf16.xpose.msra.mxu0 0
        %2772 = vmatprep.subr.bf16.mxu0 0
        %2773 = vmatpush1.bf16.xpose.msra.mxu0 0
        %2774 = vmatprep.subr.bf16.mxu0 0
        %2775 = vmatpush1.bf16.xpose.msra.mxu0 0
        %2776 = vmatprep.subr.bf16.mxu0 0
        %2777 = vmatpush1.bf16.xpose.msra.mxu0 0
        %2778 = vmatprep.subr.bf16.mxu0 0
        %2779 = vmatpush1.bf16.xpose.msra.mxu0 0
        %2780 = vmatprep.subr.bf16.mxu0 0
        %2781 = vmatpush1.bf16.xpose.msra.mxu0 0
        %2782 = vmatprep.subr.bf16.mxu0 0
        %2783 = vmatpush1.bf16.xpose.msra.mxu0 0
        %2784 = vmatprep.subr.bf16.mxu0 0
        %2785 = vmatpush1.bf16.xpose.msra.mxu0 0
        %2786 = vmatprep.subr.bf16.mxu0 0
        %2787 = vmatpush1.bf16.xpose.msra.mxu0 0
        %2788 = vmatprep.subr.bf16.mxu0 0
        %2789 = vmatpush1.bf16.xpose.msra.mxu0 0
        %2790 = vmatprep.subr.bf16.mxu0 0
        %2791 = vmatpush1.bf16.xpose.msra.mxu0 0
        %2792 = vmatprep.subr.bf16.mxu0 0
        %2793 = vmatpush1.bf16.xpose.msra.mxu0 0
        %2794 = vmatprep.mubr.bf16.mxu0 0
        %2795 = vmatmul.mubr.bf16.gmra.mrb[0].mxu0 %v2757
        %v2796 = vpop.f32.mrb[0].mxu0
        %v2797 = vadd.f32 0.0, %v2796
        %v2798 = vpop.f32.mrb[0].mxu0
        %v2799 = vpop.f32.mrb[0].mxu0
        %v2800 = vadd.f32 0.0, %v2799
        %v2801 = vpop.f32.mrb[0].mxu0
        %2802 = vdwg.mxu0
        %v2803 = vsel %vm2426, %v2468, -inf
        %2804 = vmax.xlane.f32.xlu0 %v2803
        %v2805 = vpop.xlane.xlu0 %2804
        %v2806 = vsel %vm2426, %v2471, -inf
        %2807 = vmax.xlane.f32.xlu0 %v2806
        %v2808 = vpop.xlane.xlu0 %2807
        %v2809 = vsel %vm2426, %v2515, -inf
        %2810 = vmax.xlane.f32.xlu0 %v2809
        %v2811 = vpop.xlane.xlu0 %2810
        %v2812 = vsel %vm2426, %v2518, -inf
        %2813 = vmax.xlane.f32.xlu0 %v2812
        %v2814 = vpop.xlane.xlu0 %2813
        %v2815 = vsel %vm2426, %v2562, -inf
        %2816 = vmax.xlane.f32.xlu0 %v2815
        %v2817 = vpop.xlane.xlu0 %2816
        %v2818 = vsel %vm2426, %v2565, -inf
        %2819 = vmax.xlane.f32.xlu0 %v2818
        %v2820 = vpop.xlane.xlu0 %2819
        %v2821 = vsel %vm2426, %v2609, -inf
        %2822 = vmax.xlane.f32.xlu0 %v2821
        %v2823 = vpop.xlane.xlu0 %2822
        %v2824 = vsel %vm2426, %v2612, -inf
        %2825 = vmax.xlane.f32.xlu0 %v2824
        %v2826 = vpop.xlane.xlu0 %2825
        %v2827 = vsel %vm2426, %v2656, -inf
        %2828 = vmax.xlane.f32.xlu0 %v2827
        %v2829 = vpop.xlane.xlu0 %2828
        %v2830 = vsel %vm2426, %v2659, -inf
        %2831 = vmax.xlane.f32.xlu0 %v2830
        %v2832 = vpop.xlane.xlu0 %2831
        %v2833 = vsel %vm2426, %v2703, -inf
        %2834 = vmax.xlane.f32.xlu0 %v2833
        %v2835 = vpop.xlane.xlu0 %2834
        %v2836 = vsel %vm2426, %v2706, -inf
        %2837 = vmax.xlane.f32.xlu0 %v2836
        %v2838 = vpop.xlane.xlu0 %2837
        %v2839 = vsel %vm2426, %v2750, -inf
        %2840 = vmax.xlane.f32.xlu0 %v2839
        %v2841 = vpop.xlane.xlu0 %2840
        %v2842 = vsel %vm2426, %v2753, -inf
        %2843 = vmax.xlane.f32.xlu0 %v2842
        %v2844 = vpop.xlane.xlu0 %2843
        %v2845 = vsel %vm2426, %v2797, -inf
        %2846 = vmax.xlane.f32.xlu0 %v2845
        %v2847 = vpop.xlane.xlu0 %2846
        %v2848 = vsel %vm2426, %v2800, -inf
        %2849 = vmax.xlane.f32.xlu0 %v2848
        %v2850 = vpop.xlane.xlu0 %2849
        %v2851 = vsub.f32 %v2468, %v2805
        %v2852 = vsub.f32 %v2471, %v2808
        %v2853 = vsub.f32 %v2515, %v2811
        %v2854 = vsub.f32 %v2518, %v2814
        %v2855 = vsub.f32 %v2562, %v2817
        %v2856 = vsub.f32 %v2565, %v2820
        %v2857 = vsub.f32 %v2609, %v2823
        %v2858 = vsub.f32 %v2612, %v2826
        %v2859 = vsub.f32 %v2656, %v2829
        %v2860 = vsub.f32 %v2659, %v2832
        %v2861 = vsub.f32 %v2703, %v2835
        %v2862 = vsub.f32 %v2706, %v2838
        %v2863 = vsub.f32 %v2750, %v2841
        %v2864 = vsub.f32 %v2753, %v2844
        %v2865 = vsub.f32 %v2797, %v2847
        %v2866 = vsub.f32 %v2800, %v2850
        %v2867 = vmul.f32 %v2851, 1.442695
        %v2868 = vpow.pop %v2867
        %v2869 = vmul.f32 %v2852, 1.442695
        %v2870 = vpow.pop %v2869
        %v2871 = vmul.f32 %v2853, 1.442695
        %v2872 = vpow.pop %v2871
        %v2873 = vmul.f32 %v2854, 1.442695
        %v2874 = vpow.pop %v2873
        %v2875 = vmul.f32 %v2855, 1.442695
        %v2876 = vpow.pop %v2875
        %v2877 = vmul.f32 %v2856, 1.442695
        %v2878 = vpow.pop %v2877
        %v2879 = vmul.f32 %v2857, 1.442695
        %v2880 = vpow.pop %v2879
        %v2881 = vmul.f32 %v2858, 1.442695
        %v2882 = vpow.pop %v2881
        %v2883 = vmul.f32 %v2859, 1.442695
        %v2884 = vpow.pop %v2883
        %v2885 = vmul.f32 %v2860, 1.442695
        %v2886 = vpow.pop %v2885
        %v2887 = vmul.f32 %v2861, 1.442695
        %v2888 = vpow.pop %v2887
        %v2889 = vmul.f32 %v2862, 1.442695
        %v2890 = vpow.pop %v2889
        %v2891 = vmul.f32 %v2863, 1.442695
        %v2892 = vpow.pop %v2891
        %v2893 = vmul.f32 %v2864, 1.442695
        %v2894 = vpow.pop %v2893
        %v2895 = vmul.f32 %v2865, 1.442695
        %v2896 = vpow.pop %v2895
        %v2897 = vmul.f32 %v2866, 1.442695
        %v2898 = vpow.pop %v2897
        %v2899 = vsel %vm2426, %v2868, 0.0
        %2900 = vadd.xlane.f32.xlu0 %v2899
        %v2901 = vpop.xlane.xlu0 %2900
        %v2902 = vsel %vm2426, %v2870, 0.0
        %2903 = vadd.xlane.f32.xlu0 %v2902
        %v2904 = vpop.xlane.xlu0 %2903
        %v2905 = vsel %vm2426, %v2872, 0.0
        %2906 = vadd.xlane.f32.xlu0 %v2905
        %v2907 = vpop.xlane.xlu0 %2906
        %v2908 = vsel %vm2426, %v2874, 0.0
        %2909 = vadd.xlane.f32.xlu0 %v2908
        %v2910 = vpop.xlane.xlu0 %2909
        %v2911 = vsel %vm2426, %v2876, 0.0
        %2912 = vadd.xlane.f32.xlu0 %v2911
        %v2913 = vpop.xlane.xlu0 %2912
        %v2914 = vsel %vm2426, %v2878, 0.0
        %2915 = vadd.xlane.f32.xlu0 %v2914
        %v2916 = vpop.xlane.xlu0 %2915
        %v2917 = vsel %vm2426, %v2880, 0.0
        %2918 = vadd.xlane.f32.xlu0 %v2917
        %v2919 = vpop.xlane.xlu0 %2918
        %v2920 = vsel %vm2426, %v2882, 0.0
        %2921 = vadd.xlane.f32.xlu0 %v2920
        %v2922 = vpop.xlane.xlu0 %2921
        %v2923 = vsel %vm2426, %v2884, 0.0
        %2924 = vadd.xlane.f32.xlu0 %v2923
        %v2925 = vpop.xlane.xlu0 %2924
        %v2926 = vsel %vm2426, %v2886, 0.0
        %2927 = vadd.xlane.f32.xlu0 %v2926
        %v2928 = vpop.xlane.xlu0 %2927
        %v2929 = vsel %vm2426, %v2888, 0.0
        %2930 = vadd.xlane.f32.xlu0 %v2929
        %v2931 = vpop.xlane.xlu0 %2930
        %v2932 = vsel %vm2426, %v2890, 0.0
        %2933 = vadd.xlane.f32.xlu0 %v2932
        %v2934 = vpop.xlane.xlu0 %2933
        %v2935 = vsel %vm2426, %v2892, 0.0
        %2936 = vadd.xlane.f32.xlu0 %v2935
        %v2937 = vpop.xlane.xlu0 %2936
        %v2938 = vsel %vm2426, %v2894, 0.0
        %2939 = vadd.xlane.f32.xlu0 %v2938
        %v2940 = vpop.xlane.xlu0 %2939
        %v2941 = vsel %vm2426, %v2896, 0.0
        %2942 = vadd.xlane.f32.xlu0 %v2941
        %v2943 = vpop.xlane.xlu0 %2942
        %v2944 = vsel %vm2426, %v2898, 0.0
        %2945 = vadd.xlane.f32.xlu0 %v2944
        %v2946 = vpop.xlane.xlu0 %2945
        %v2947 = vrcp.pop %v2901
        %v2948 = vrcp.pop %v2904
        %v2949 = vrcp.pop %v2907
        %v2950 = vrcp.pop %v2910
        %v2951 = vrcp.pop %v2913
        %v2952 = vrcp.pop %v2916
        %v2953 = vrcp.pop %v2919
        %v2954 = vrcp.pop %v2922
        %v2955 = vrcp.pop %v2925
        %v2956 = vrcp.pop %v2928
        %v2957 = vrcp.pop %v2931
        %v2958 = vrcp.pop %v2934
        %v2959 = vrcp.pop %v2937
        %v2960 = vrcp.pop %v2940
        %v2961 = vrcp.pop %v2943
        %v2962 = vrcp.pop %v2946
        %v2963 = vmul.f32 %v2868, %v2947
        %v2964 = vmul.f32 %v2870, %v2948
        %v2965 = vmul.f32 %v2872, %v2949
        %v2966 = vmul.f32 %v2874, %v2950
        %v2967 = vmul.f32 %v2876, %v2951
        %v2968 = vmul.f32 %v2878, %v2952
        %v2969 = vmul.f32 %v2880, %v2953
        %v2970 = vmul.f32 %v2882, %v2954
        %v2971 = vmul.f32 %v2884, %v2955
        %v2972 = vmul.f32 %v2886, %v2956
        %v2973 = vmul.f32 %v2888, %v2957
        %v2974 = vmul.f32 %v2890, %v2958
        %v2975 = vmul.f32 %v2892, %v2959
        %v2976 = vmul.f32 %v2894, %v2960
        %v2977 = vmul.f32 %v2896, %v2961
        %v2978 = vmul.f32 %v2898, %v2962
        %v2979 = vpack.c.bf16 %v2964, %v2963
        %v2980 = vpack.c.bf16 %v2966, %v2965
        %v2981 = vpack.c.bf16 %v2968, %v2967
        %v2982 = vpack.c.bf16 %v2970, %v2969
        %v2983 = vpack.c.bf16 %v2972, %v2971
        %v2984 = vpack.c.bf16 %v2974, %v2973
        %v2985 = vpack.c.bf16 %v2976, %v2975
        %v2986 = vpack.c.bf16 %v2978, %v2977
        %v2987 = vld [vmem:[#allocation3] sm:$0xff]
        %v2988 = vld [vmem:[#allocation3 + $0x8] sm:$0xff]
        %v2989 = vld [vmem:[#allocation3 + $0x10] sm:$0xff]
        %v2990 = vld [vmem:[#allocation3 + $0x18] sm:$0xff]
        %v2991 = vld [vmem:[#allocation3 + $0x20] sm:$0xff]
        %v2992 = vld [vmem:[#allocation3 + $0x28] sm:$0xff]
        %v2993 = vld [vmem:[#allocation3 + $0x30] sm:$0xff]
        %v2994 = vld [vmem:[#allocation3 + $0x38] sm:$0xff]
        %v2996 = vsel %vm2426, %v2979, 0
        %2998 = vmatprep.subr.bf16.mxu0 0
        %2999 = vmatpush1.bf16.msra.mxu0 %v2987
        %3000 = vmatprep.subr.bf16.mxu0 0
        %3001 = vmatpush1.bf16.msra.mxu0 0
        %3002 = vmatprep.subr.bf16.mxu0 0
        %3003 = vmatpush1.bf16.msra.mxu0 0
        %3004 = vmatprep.subr.bf16.mxu0 0
        %3005 = vmatpush1.bf16.msra.mxu0 0
        %3006 = vmatprep.subr.bf16.mxu0 0
        %3007 = vmatpush1.bf16.msra.mxu0 0
        %3008 = vmatprep.subr.bf16.mxu0 0
        %3009 = vmatpush1.bf16.msra.mxu0 0
        %3010 = vmatprep.subr.bf16.mxu0 0
        %3011 = vmatpush1.bf16.msra.mxu0 0
        %3012 = vmatprep.subr.bf16.mxu0 0
        %3013 = vmatpush1.bf16.msra.mxu0 0
        %3014 = vmatprep.subr.bf16.mxu0 0
        %3015 = vmatpush1.bf16.msra.mxu0 0
        %3016 = vmatprep.subr.bf16.mxu0 0
        %3017 = vmatpush1.bf16.msra.mxu0 0
        %3018 = vmatprep.subr.bf16.mxu0 0
        %3019 = vmatpush1.bf16.msra.mxu0 0
        %3020 = vmatprep.subr.bf16.mxu0 0
        %3021 = vmatpush1.bf16.msra.mxu0 0
        %3022 = vmatprep.subr.bf16.mxu0 0
        %3023 = vmatpush1.bf16.msra.mxu0 0
        %3024 = vmatprep.subr.bf16.mxu0 0
        %3025 = vmatpush1.bf16.msra.mxu0 0
        %3026 = vmatprep.subr.bf16.mxu0 0
        %3027 = vmatpush1.bf16.msra.mxu0 0
        %3028 = vmatprep.subr.bf16.mxu0 0
        %3029 = vmatpush1.bf16.msra.mxu0 0
        %3030 = vmatprep.mubr.bf16.mxu0 0
        %3031 = vmatmul.mubr.bf16.gmra.mrb[0].mxu0 %v2996
        %v3032 = vpop.f32.mrb[0].mxu0
        %v3033 = vadd.f32 0.0, %v3032
        %v3034 = vpop.f32.mrb[0].mxu0
        %v3035 = vpop.f32.mrb[0].mxu0
        %v3036 = vadd.f32 0.0, %v3035
        %v3037 = vpop.f32.mrb[0].mxu0
        %3038 = vdwg.mxu0
        %v3040 = vsel %vm2426, %v2980, 0
        %3042 = vmatprep.subr.bf16.mxu0 0
        %3043 = vmatpush1.bf16.msra.mxu0 %v2988
        %3044 = vmatprep.subr.bf16.mxu0 0
        %3045 = vmatpush1.bf16.msra.mxu0 0
        %3046 = vmatprep.subr.bf16.mxu0 0
        %3047 = vmatpush1.bf16.msra.mxu0 0
        %3048 = vmatprep.subr.bf16.mxu0 0
        %3049 = vmatpush1.bf16.msra.mxu0 0
        %3050 = vmatprep.subr.bf16.mxu0 0
        %3051 = vmatpush1.bf16.msra.mxu0 0
        %3052 = vmatprep.subr.bf16.mxu0 0
        %3053 = vmatpush1.bf16.msra.mxu0 0
        %3054 = vmatprep.subr.bf16.mxu0 0
        %3055 = vmatpush1.bf16.msra.mxu0 0
        %3056 = vmatprep.subr.bf16.mxu0 0
        %3057 = vmatpush1.bf16.msra.mxu0 0
        %3058 = vmatprep.subr.bf16.mxu0 0
        %3059 = vmatpush1.bf16.msra.mxu0 0
        %3060 = vmatprep.subr.bf16.mxu0 0
        %3061 = vmatpush1.bf16.msra.mxu0 0
        %3062 = vmatprep.subr.bf16.mxu0 0
        %3063 = vmatpush1.bf16.msra.mxu0 0
        %3064 = vmatprep.subr.bf16.mxu0 0
        %3065 = vmatpush1.bf16.msra.mxu0 0
        %3066 = vmatprep.subr.bf16.mxu0 0
        %3067 = vmatpush1.bf16.msra.mxu0 0
        %3068 = vmatprep.subr.bf16.mxu0 0
        %3069 = vmatpush1.bf16.msra.mxu0 0
        %3070 = vmatprep.subr.bf16.mxu0 0
        %3071 = vmatpush1.bf16.msra.mxu0 0
        %3072 = vmatprep.subr.bf16.mxu0 0
        %3073 = vmatpush1.bf16.msra.mxu0 0
        %3074 = vmatprep.mubr.bf16.mxu0 0
        %3075 = vmatmul.mubr.bf16.gmra.mrb[0].mxu0 %v3040
        %v3076 = vpop.f32.mrb[0].mxu0
        %v3077 = vadd.f32 0.0, %v3076
        %v3078 = vpop.f32.mrb[0].mxu0
        %v3079 = vpop.f32.mrb[0].mxu0
        %v3080 = vadd.f32 0.0, %v3079
        %v3081 = vpop.f32.mrb[0].mxu0
        %3082 = vdwg.mxu0
        %v3084 = vsel %vm2426, %v2981, 0
        %3086 = vmatprep.subr.bf16.mxu0 0
        %3087 = vmatpush1.bf16.msra.mxu0 %v2989
        %3088 = vmatprep.subr.bf16.mxu0 0
        %3089 = vmatpush1.bf16.msra.mxu0 0
        %3090 = vmatprep.subr.bf16.mxu0 0
        %3091 = vmatpush1.bf16.msra.mxu0 0
        %3092 = vmatprep.subr.bf16.mxu0 0
        %3093 = vmatpush1.bf16.msra.mxu0 0
        %3094 = vmatprep.subr.bf16.mxu0 0
        %3095 = vmatpush1.bf16.msra.mxu0 0
        %3096 = vmatprep.subr.bf16.mxu0 0
        %3097 = vmatpush1.bf16.msra.mxu0 0
        %3098 = vmatprep.subr.bf16.mxu0 0
        %3099 = vmatpush1.bf16.msra.mxu0 0
        %3100 = vmatprep.subr.bf16.mxu0 0
        %3101 = vmatpush1.bf16.msra.mxu0 0
        %3102 = vmatprep.subr.bf16.mxu0 0
        %3103 = vmatpush1.bf16.msra.mxu0 0
        %3104 = vmatprep.subr.bf16.mxu0 0
        %3105 = vmatpush1.bf16.msra.mxu0 0
        %3106 = vmatprep.subr.bf16.mxu0 0
        %3107 = vmatpush1.bf16.msra.mxu0 0
        %3108 = vmatprep.subr.bf16.mxu0 0
        %3109 = vmatpush1.bf16.msra.mxu0 0
        %3110 = vmatprep.subr.bf16.mxu0 0
        %3111 = vmatpush1.bf16.msra.mxu0 0
        %3112 = vmatprep.subr.bf16.mxu0 0
        %3113 = vmatpush1.bf16.msra.mxu0 0
        %3114 = vmatprep.subr.bf16.mxu0 0
        %3115 = vmatpush1.bf16.msra.mxu0 0
        %3116 = vmatprep.subr.bf16.mxu0 0
        %3117 = vmatpush1.bf16.msra.mxu0 0
        %3118 = vmatprep.mubr.bf16.mxu0 0
        %3119 = vmatmul.mubr.bf16.gmra.mrb[0].mxu0 %v3084
        %v3120 = vpop.f32.mrb[0].mxu0
        %v3121 = vadd.f32 0.0, %v3120
        %v3122 = vpop.f32.mrb[0].mxu0
        %v3123 = vpop.f32.mrb[0].mxu0
        %v3124 = vadd.f32 0.0, %v3123
        %v3125 = vpop.f32.mrb[0].mxu0
        %3126 = vdwg.mxu0
        %v3128 = vsel %vm2426, %v2982, 0
        %3130 = vmatprep.subr.bf16.mxu0 0
        %3131 = vmatpush1.bf16.msra.mxu0 %v2990
        %3132 = vmatprep.subr.bf16.mxu0 0
        %3133 = vmatpush1.bf16.msra.mxu0 0
        %3134 = vmatprep.subr.bf16.mxu0 0
        %3135 = vmatpush1.bf16.msra.mxu0 0
        %3136 = vmatprep.subr.bf16.mxu0 0
        %3137 = vmatpush1.bf16.msra.mxu0 0
        %3138 = vmatprep.subr.bf16.mxu0 0
        %3139 = vmatpush1.bf16.msra.mxu0 0
        %3140 = vmatprep.subr.bf16.mxu0 0
        %3141 = vmatpush1.bf16.msra.mxu0 0
        %3142 = vmatprep.subr.bf16.mxu0 0
        %3143 = vmatpush1.bf16.msra.mxu0 0
        %3144 = vmatprep.subr.bf16.mxu0 0
        %3145 = vmatpush1.bf16.msra.mxu0 0
        %3146 = vmatprep.subr.bf16.mxu0 0
        %3147 = vmatpush1.bf16.msra.mxu0 0
        %3148 = vmatprep.subr.bf16.mxu0 0
        %3149 = vmatpush1.bf16.msra.mxu0 0
        %3150 = vmatprep.subr.bf16.mxu0 0
        %3151 = vmatpush1.bf16.msra.mxu0 0
        %3152 = vmatprep.subr.bf16.mxu0 0
        %3153 = vmatpush1.bf16.msra.mxu0 0
        %3154 = vmatprep.subr.bf16.mxu0 0
        %3155 = vmatpush1.bf16.msra.mxu0 0
        %3156 = vmatprep.subr.bf16.mxu0 0
        %3157 = vmatpush1.bf16.msra.mxu0 0
        %3158 = vmatprep.subr.bf16.mxu0 0
        %3159 = vmatpush1.bf16.msra.mxu0 0
        %3160 = vmatprep.subr.bf16.mxu0 0
        %3161 = vmatpush1.bf16.msra.mxu0 0
        %3162 = vmatprep.mubr.bf16.mxu0 0
        %3163 = vmatmul.mubr.bf16.gmra.mrb[0].mxu0 %v3128
        %v3164 = vpop.f32.mrb[0].mxu0
        %v3165 = vadd.f32 0.0, %v3164
        %v3166 = vpop.f32.mrb[0].mxu0
        %v3167 = vpop.f32.mrb[0].mxu0
        %v3168 = vadd.f32 0.0, %v3167
        %v3169 = vpop.f32.mrb[0].mxu0
        %3170 = vdwg.mxu0
        %v3172 = vsel %vm2426, %v2983, 0
        %3174 = vmatprep.subr.bf16.mxu0 0
        %3175 = vmatpush1.bf16.msra.mxu0 %v2991
        %3176 = vmatprep.subr.bf16.mxu0 0
        %3177 = vmatpush1.bf16.msra.mxu0 0
        %3178 = vmatprep.subr.bf16.mxu0 0
        %3179 = vmatpush1.bf16.msra.mxu0 0
        %3180 = vmatprep.subr.bf16.mxu0 0
        %3181 = vmatpush1.bf16.msra.mxu0 0
        %3182 = vmatprep.subr.bf16.mxu0 0
        %3183 = vmatpush1.bf16.msra.mxu0 0
        %3184 = vmatprep.subr.bf16.mxu0 0
        %3185 = vmatpush1.bf16.msra.mxu0 0
        %3186 = vmatprep.subr.bf16.mxu0 0
        %3187 = vmatpush1.bf16.msra.mxu0 0
        %3188 = vmatprep.subr.bf16.mxu0 0
        %3189 = vmatpush1.bf16.msra.mxu0 0
        %3190 = vmatprep.subr.bf16.mxu0 0
        %3191 = vmatpush1.bf16.msra.mxu0 0
        %3192 = vmatprep.subr.bf16.mxu0 0
        %3193 = vmatpush1.bf16.msra.mxu0 0
        %3194 = vmatprep.subr.bf16.mxu0 0
        %3195 = vmatpush1.bf16.msra.mxu0 0
        %3196 = vmatprep.subr.bf16.mxu0 0
        %3197 = vmatpush1.bf16.msra.mxu0 0
        %3198 = vmatprep.subr.bf16.mxu0 0
        %3199 = vmatpush1.bf16.msra.mxu0 0
        %3200 = vmatprep.subr.bf16.mxu0 0
        %3201 = vmatpush1.bf16.msra.mxu0 0
        %3202 = vmatprep.subr.bf16.mxu0 0
        %3203 = vmatpush1.bf16.msra.mxu0 0
        %3204 = vmatprep.subr.bf16.mxu0 0
        %3205 = vmatpush1.bf16.msra.mxu0 0
        %3206 = vmatprep.mubr.bf16.mxu0 0
        %3207 = vmatmul.mubr.bf16.gmra.mrb[0].mxu0 %v3172
        %v3208 = vpop.f32.mrb[0].mxu0
        %v3209 = vadd.f32 0.0, %v3208
        %v3210 = vpop.f32.mrb[0].mxu0
        %v3211 = vpop.f32.mrb[0].mxu0
        %v3212 = vadd.f32 0.0, %v3211
        %v3213 = vpop.f32.mrb[0].mxu0
        %3214 = vdwg.mxu0
        %v3216 = vsel %vm2426, %v2984, 0
        %3218 = vmatprep.subr.bf16.mxu0 0
        %3219 = vmatpush1.bf16.msra.mxu0 %v2992
        %3220 = vmatprep.subr.bf16.mxu0 0
        %3221 = vmatpush1.bf16.msra.mxu0 0
        %3222 = vmatprep.subr.bf16.mxu0 0
        %3223 = vmatpush1.bf16.msra.mxu0 0
        %3224 = vmatprep.subr.bf16.mxu0 0
        %3225 = vmatpush1.bf16.msra.mxu0 0
        %3226 = vmatprep.subr.bf16.mxu0 0
        %3227 = vmatpush1.bf16.msra.mxu0 0
        %3228 = vmatprep.subr.bf16.mxu0 0
        %3229 = vmatpush1.bf16.msra.mxu0 0
        %3230 = vmatprep.subr.bf16.mxu0 0
        %3231 = vmatpush1.bf16.msra.mxu0 0
        %3232 = vmatprep.subr.bf16.mxu0 0
        %3233 = vmatpush1.bf16.msra.mxu0 0
        %3234 = vmatprep.subr.bf16.mxu0 0
        %3235 = vmatpush1.bf16.msra.mxu0 0
        %3236 = vmatprep.subr.bf16.mxu0 0
        %3237 = vmatpush1.bf16.msra.mxu0 0
        %3238 = vmatprep.subr.bf16.mxu0 0
        %3239 = vmatpush1.bf16.msra.mxu0 0
        %3240 = vmatprep.subr.bf16.mxu0 0
        %3241 = vmatpush1.bf16.msra.mxu0 0
        %3242 = vmatprep.subr.bf16.mxu0 0
        %3243 = vmatpush1.bf16.msra.mxu0 0
        %3244 = vmatprep.subr.bf16.mxu0 0
        %3245 = vmatpush1.bf16.msra.mxu0 0
        %3246 = vmatprep.subr.bf16.mxu0 0
        %3247 = vmatpush1.bf16.msra.mxu0 0
        %3248 = vmatprep.subr.bf16.mxu0 0
        %3249 = vmatpush1.bf16.msra.mxu0 0
        %3250 = vmatprep.mubr.bf16.mxu0 0
        %3251 = vmatmul.mubr.bf16.gmra.mrb[0].mxu0 %v3216
        %v3252 = vpop.f32.mrb[0].mxu0
        %v3253 = vadd.f32 0.0, %v3252
        %v3254 = vpop.f32.mrb[0].mxu0
        %v3255 = vpop.f32.mrb[0].mxu0
        %v3256 = vadd.f32 0.0, %v3255
        %v3257 = vpop.f32.mrb[0].mxu0
        %3258 = vdwg.mxu0
        %v3260 = vsel %vm2426, %v2985, 0
        %3262 = vmatprep.subr.bf16.mxu0 0
        %3263 = vmatpush1.bf16.msra.mxu0 %v2993
        %3264 = vmatprep.subr.bf16.mxu0 0
        %3265 = vmatpush1.bf16.msra.mxu0 0
        %3266 = vmatprep.subr.bf16.mxu0 0
        %3267 = vmatpush1.bf16.msra.mxu0 0
        %3268 = vmatprep.subr.bf16.mxu0 0
        %3269 = vmatpush1.bf16.msra.mxu0 0
        %3270 = vmatprep.subr.bf16.mxu0 0
        %3271 = vmatpush1.bf16.msra.mxu0 0
        %3272 = vmatprep.subr.bf16.mxu0 0
        %3273 = vmatpush1.bf16.msra.mxu0 0
        %3274 = vmatprep.subr.bf16.mxu0 0
        %3275 = vmatpush1.bf16.msra.mxu0 0
        %3276 = vmatprep.subr.bf16.mxu0 0
        %3277 = vmatpush1.bf16.msra.mxu0 0
        %3278 = vmatprep.subr.bf16.mxu0 0
        %3279 = vmatpush1.bf16.msra.mxu0 0
        %3280 = vmatprep.subr.bf16.mxu0 0
        %3281 = vmatpush1.bf16.msra.mxu0 0
        %3282 = vmatprep.subr.bf16.mxu0 0
        %3283 = vmatpush1.bf16.msra.mxu0 0
        %3284 = vmatprep.subr.bf16.mxu0 0
        %3285 = vmatpush1.bf16.msra.mxu0 0
        %3286 = vmatprep.subr.bf16.mxu0 0
        %3287 = vmatpush1.bf16.msra.mxu0 0
        %3288 = vmatprep.subr.bf16.mxu0 0
        %3289 = vmatpush1.bf16.msra.mxu0 0
        %3290 = vmatprep.subr.bf16.mxu0 0
        %3291 = vmatpush1.bf16.msra.mxu0 0
        %3292 = vmatprep.subr.bf16.mxu0 0
        %3293 = vmatpush1.bf16.msra.mxu0 0
        %3294 = vmatprep.mubr.bf16.mxu0 0
        %3295 = vmatmul.mubr.bf16.gmra.mrb[0].mxu0 %v3260
        %v3296 = vpop.f32.mrb[0].mxu0
        %v3297 = vadd.f32 0.0, %v3296
        %v3298 = vpop.f32.mrb[0].mxu0
        %v3299 = vpop.f32.mrb[0].mxu0
        %v3300 = vadd.f32 0.0, %v3299
        %v3301 = vpop.f32.mrb[0].mxu0
        %3302 = vdwg.mxu0
        %v3304 = vsel %vm2426, %v2986, 0
        %3306 = vmatprep.subr.bf16.mxu0 0
        %3307 = vmatpush1.bf16.msra.mxu0 %v2994
        %3308 = vmatprep.subr.bf16.mxu0 0
        %3309 = vmatpush1.bf16.msra.mxu0 0
        %3310 = vmatprep.subr.bf16.mxu0 0
        %3311 = vmatpush1.bf16.msra.mxu0 0
        %3312 = vmatprep.subr.bf16.mxu0 0
        %3313 = vmatpush1.bf16.msra.mxu0 0
        %3314 = vmatprep.subr.bf16.mxu0 0
        %3315 = vmatpush1.bf16.msra.mxu0 0
        %3316 = vmatprep.subr.bf16.mxu0 0
        %3317 = vmatpush1.bf16.msra.mxu0 0
        %3318 = vmatprep.subr.bf16.mxu0 0
        %3319 = vmatpush1.bf16.msra.mxu0 0
        %3320 = vmatprep.subr.bf16.mxu0 0
        %3321 = vmatpush1.bf16.msra.mxu0 0
        %3322 = vmatprep.subr.bf16.mxu0 0
        %3323 = vmatpush1.bf16.msra.mxu0 0
        %3324 = vmatprep.subr.bf16.mxu0 0
        %3325 = vmatpush1.bf16.msra.mxu0 0
        %3326 = vmatprep.subr.bf16.mxu0 0
        %3327 = vmatpush1.bf16.msra.mxu0 0
        %3328 = vmatprep.subr.bf16.mxu0 0
        %3329 = vmatpush1.bf16.msra.mxu0 0
        %3330 = vmatprep.subr.bf16.mxu0 0
        %3331 = vmatpush1.bf16.msra.mxu0 0
        %3332 = vmatprep.subr.bf16.mxu0 0
        %3333 = vmatpush1.bf16.msra.mxu0 0
        %3334 = vmatprep.subr.bf16.mxu0 0
        %3335 = vmatpush1.bf16.msra.mxu0 0
        %3336 = vmatprep.subr.bf16.mxu0 0
        %3337 = vmatpush1.bf16.msra.mxu0 0
        %3338 = vmatprep.mubr.bf16.mxu0 0
        %3339 = vmatmul.mubr.bf16.gmra.mrb[0].mxu0 %v3304
        %v3340 = vpop.f32.mrb[0].mxu0
        %v3341 = vadd.f32 0.0, %v3340
        %v3342 = vpop.f32.mrb[0].mxu0
        %v3343 = vpop.f32.mrb[0].mxu0
        %v3344 = vadd.f32 0.0, %v3343
        %v3345 = vpop.f32.mrb[0].mxu0
        %3346 = vdwg.mxu0
        %v3347 = vcombine.low %v3033, %v3121
        %v3348 = vcombine.high %v3033, %v3121
        %v3350 = vunpack.c.l.s4 1983009808
        %v3351 = vunpack.c.0.s8 %v3350
        %v3352 = vlaneseq
        %v3353 = vshrl.u32 %v3352, 7
        %v3354 = vsub.s32 %v3351, %v3353
        %v3355 = vrot.slane %v3347, %v3354
        %v3357 = vunpack.c.l.s4 1983009808
        %v3358 = vunpack.c.0.s8 %v3357
        %v3359 = vlaneseq
        %v3360 = vshrl.u32 %v3359, 7
        %v3361 = vsub.s32 %v3358, %v3360
        %v3362 = vrot.slane %v3348, %v3361
        %v3363 = vcombine.low %v3077, %v3165
        %v3364 = vcombine.high %v3077, %v3165
        %v3366 = vunpack.c.l.s4 1983009808
        %v3367 = vunpack.c.0.s8 %v3366
        %v3368 = vlaneseq
        %v3369 = vshrl.u32 %v3368, 7
        %v3370 = vsub.s32 %v3367, %v3369
        %v3371 = vrot.slane %v3363, %v3370
        %v3373 = vunpack.c.l.s4 1983009808
        %v3374 = vunpack.c.0.s8 %v3373
        %v3375 = vlaneseq
        %v3376 = vshrl.u32 %v3375, 7
        %v3377 = vsub.s32 %v3374, %v3376
        %v3378 = vrot.slane %v3364, %v3377
        %v3379 = vcombine.low %v3209, %v3297
        %v3380 = vcombine.high %v3209, %v3297
        %v3382 = vunpack.c.l.s4 1983009808
        %v3383 = vunpack.c.0.s8 %v3382
        %v3384 = vlaneseq
        %v3385 = vshrl.u32 %v3384, 7
        %v3386 = vsub.s32 %v3383, %v3385
        %v3387 = vrot.slane %v3379, %v3386
        %v3389 = vunpack.c.l.s4 1983009808
        %v3390 = vunpack.c.0.s8 %v3389
        %v3391 = vlaneseq
        %v3392 = vshrl.u32 %v3391, 7
        %v3393 = vsub.s32 %v3390, %v3392
        %v3394 = vrot.slane %v3380, %v3393
        %v3395 = vcombine.low %v3253, %v3341
        %v3396 = vcombine.high %v3253, %v3341
        %v3398 = vunpack.c.l.s4 1983009808
        %v3399 = vunpack.c.0.s8 %v3398
        %v3400 = vlaneseq
        %v3401 = vshrl.u32 %v3400, 7
        %v3402 = vsub.s32 %v3399, %v3401
        %v3403 = vrot.slane %v3395, %v3402
        %v3405 = vunpack.c.l.s4 1983009808
        %v3406 = vunpack.c.0.s8 %v3405
        %v3407 = vlaneseq
        %v3408 = vshrl.u32 %v3407, 7
        %v3409 = vsub.s32 %v3406, %v3408
        %v3410 = vrot.slane %v3396, %v3409
        %v3411 = vcombine.low %v3355, %v3371
        %v3412 = vcombine.high %v3355, %v3371
        %v3414 = vunpack.c.l.s4 1934713408
        %v3415 = vunpack.c.0.s8 %v3414
        %v3416 = vlaneseq
        %v3417 = vshrl.u32 %v3416, 7
        %v3418 = vsub.s32 %v3415, %v3417
        %v3419 = vrot.slane %v3411, %v3418
        %v3421 = vunpack.c.l.s4 1934713408
        %v3422 = vunpack.c.0.s8 %v3421
        %v3423 = vlaneseq
        %v3424 = vshrl.u32 %v3423, 7
        %v3425 = vsub.s32 %v3422, %v3424
        %v3426 = vrot.slane %v3412, %v3425
        %v3427 = vcombine.low %v3362, %v3378
        %v3428 = vcombine.high %v3362, %v3378
        %v3430 = vunpack.c.l.s4 1934713408
        %v3431 = vunpack.c.0.s8 %v3430
        %v3432 = vlaneseq
        %v3433 = vshrl.u32 %v3432, 7
        %v3434 = vsub.s32 %v3431, %v3433
        %v3435 = vrot.slane %v3427, %v3434
        %v3437 = vunpack.c.l.s4 1934713408
        %v3438 = vunpack.c.0.s8 %v3437
        %v3439 = vlaneseq
        %v3440 = vshrl.u32 %v3439, 7
        %v3441 = vsub.s32 %v3438, %v3440
        %v3442 = vrot.slane %v3428, %v3441
        %v3443 = vcombine.low %v3387, %v3403
        %v3444 = vcombine.high %v3387, %v3403
        %v3446 = vunpack.c.l.s4 1934713408
        %v3447 = vunpack.c.0.s8 %v3446
        %v3448 = vlaneseq
        %v3449 = vshrl.u32 %v3448, 7
        %v3450 = vsub.s32 %v3447, %v3449
        %v3451 = vrot.slane %v3443, %v3450
        %v3453 = vunpack.c.l.s4 1934713408
        %v3454 = vunpack.c.0.s8 %v3453
        %v3455 = vlaneseq
        %v3456 = vshrl.u32 %v3455, 7
        %v3457 = vsub.s32 %v3454, %v3456
        %v3458 = vrot.slane %v3444, %v3457
        %v3459 = vcombine.low %v3394, %v3410
        %v3460 = vcombine.high %v3394, %v3410
        %v3462 = vunpack.c.l.s4 1934713408
        %v3463 = vunpack.c.0.s8 %v3462
        %v3464 = vlaneseq
        %v3465 = vshrl.u32 %v3464, 7
        %v3466 = vsub.s32 %v3463, %v3465
        %v3467 = vrot.slane %v3459, %v3466
        %v3469 = vunpack.c.l.s4 1934713408
        %v3470 = vunpack.c.0.s8 %v3469
        %v3471 = vlaneseq
        %v3472 = vshrl.u32 %v3471, 7
        %v3473 = vsub.s32 %v3470, %v3472
        %v3474 = vrot.slane %v3460, %v3473
        %v3475 = vcombine.low %v3419, %v3451
        %v3476 = vcombine.high %v3419, %v3451
        %v3477 = vcombine.low %v3426, %v3458
        %v3478 = vcombine.high %v3426, %v3458
        %v3479 = vcombine.low %v3435, %v3467
        %v3480 = vcombine.high %v3435, %v3467
        %v3481 = vcombine.low %v3442, %v3474
        %v3482 = vcombine.high %v3442, %v3474
        %v3483 = vcombine.low %v3036, %v3124
        %v3484 = vcombine.high %v3036, %v3124
        %v3486 = vunpack.c.l.s4 1983009808
        %v3487 = vunpack.c.0.s8 %v3486
        %v3488 = vlaneseq
        %v3489 = vshrl.u32 %v3488, 7
        %v3490 = vsub.s32 %v3487, %v3489
        %v3491 = vrot.slane %v3483, %v3490
        %v3493 = vunpack.c.l.s4 1983009808
        %v3494 = vunpack.c.0.s8 %v3493
        %v3495 = vlaneseq
        %v3496 = vshrl.u32 %v3495, 7
        %v3497 = vsub.s32 %v3494, %v3496
        %v3498 = vrot.slane %v3484, %v3497
        %v3499 = vcombine.low %v3080, %v3168
        %v3500 = vcombine.high %v3080, %v3168
        %v3502 = vunpack.c.l.s4 1983009808
        %v3503 = vunpack.c.0.s8 %v3502
        %v3504 = vlaneseq
        %v3505 = vshrl.u32 %v3504, 7
        %v3506 = vsub.s32 %v3503, %v3505
        %v3507 = vrot.slane %v3499, %v3506
        %v3509 = vunpack.c.l.s4 1983009808
        %v3510 = vunpack.c.0.s8 %v3509
        %v3511 = vlaneseq
        %v3512 = vshrl.u32 %v3511, 7
        %v3513 = vsub.s32 %v3510, %v3512
        %v3514 = vrot.slane %v3500, %v3513
        %v3515 = vcombine.low %v3212, %v3300
        %v3516 = vcombine.high %v3212, %v3300
        %v3518 = vunpack.c.l.s4 1983009808
        %v3519 = vunpack.c.0.s8 %v3518
        %v3520 = vlaneseq
        %v3521 = vshrl.u32 %v3520, 7
        %v3522 = vsub.s32 %v3519, %v3521
        %v3523 = vrot.slane %v3515, %v3522
        %v3525 = vunpack.c.l.s4 1983009808
        %v3526 = vunpack.c.0.s8 %v3525
        %v3527 = vlaneseq
        %v3528 = vshrl.u32 %v3527, 7
        %v3529 = vsub.s32 %v3526, %v3528
        %v3530 = vrot.slane %v3516, %v3529
        %v3531 = vcombine.low %v3256, %v3344
        %v3532 = vcombine.high %v3256, %v3344
        %v3534 = vunpack.c.l.s4 1983009808
        %v3535 = vunpack.c.0.s8 %v3534
        %v3536 = vlaneseq
        %v3537 = vshrl.u32 %v3536, 7
        %v3538 = vsub.s32 %v3535, %v3537
        %v3539 = vrot.slane %v3531, %v3538
        %v3541 = vunpack.c.l.s4 1983009808
        %v3542 = vunpack.c.0.s8 %v3541
        %v3543 = vlaneseq
        %v3544 = vshrl.u32 %v3543, 7
        %v3545 = vsub.s32 %v3542, %v3544
        %v3546 = vrot.slane %v3532, %v3545
        %v3547 = vcombine.low %v3491, %v3507
        %v3548 = vcombine.high %v3491, %v3507
        %v3550 = vunpack.c.l.s4 1934713408
        %v3551 = vunpack.c.0.s8 %v3550
        %v3552 = vlaneseq
        %v3553 = vshrl.u32 %v3552, 7
        %v3554 = vsub.s32 %v3551, %v3553
        %v3555 = vrot.slane %v3547, %v3554
        %v3557 = vunpack.c.l.s4 1934713408
        %v3558 = vunpack.c.0.s8 %v3557
        %v3559 = vlaneseq
        %v3560 = vshrl.u32 %v3559, 7
        %v3561 = vsub.s32 %v3558, %v3560
        %v3562 = vrot.slane %v3548, %v3561
        %v3563 = vcombine.low %v3498, %v3514
        %v3564 = vcombine.high %v3498, %v3514
        %v3566 = vunpack.c.l.s4 1934713408
        %v3567 = vunpack.c.0.s8 %v3566
        %v3568 = vlaneseq
        %v3569 = vshrl.u32 %v3568, 7
        %v3570 = vsub.s32 %v3567, %v3569
        %v3571 = vrot.slane %v3563, %v3570
        %v3573 = vunpack.c.l.s4 1934713408
        %v3574 = vunpack.c.0.s8 %v3573
        %v3575 = vlaneseq
        %v3576 = vshrl.u32 %v3575, 7
        %v3577 = vsub.s32 %v3574, %v3576
        %v3578 = vrot.slane %v3564, %v3577
        %v3579 = vcombine.low %v3523, %v3539
        %v3580 = vcombine.high %v3523, %v3539
        %v3582 = vunpack.c.l.s4 1934713408
        %v3583 = vunpack.c.0.s8 %v3582
        %v3584 = vlaneseq
        %v3585 = vshrl.u32 %v3584, 7
        %v3586 = vsub.s32 %v3583, %v3585
        %v3587 = vrot.slane %v3579, %v3586
        %v3589 = vunpack.c.l.s4 1934713408
        %v3590 = vunpack.c.0.s8 %v3589
        %v3591 = vlaneseq
        %v3592 = vshrl.u32 %v3591, 7
        %v3593 = vsub.s32 %v3590, %v3592
        %v3594 = vrot.slane %v3580, %v3593
        %v3595 = vcombine.low %v3530, %v3546
        %v3596 = vcombine.high %v3530, %v3546
        %v3598 = vunpack.c.l.s4 1934713408
        %v3599 = vunpack.c.0.s8 %v3598
        %v3600 = vlaneseq
        %v3601 = vshrl.u32 %v3600, 7
        %v3602 = vsub.s32 %v3599, %v3601
        %v3603 = vrot.slane %v3595, %v3602
        %v3605 = vunpack.c.l.s4 1934713408
        %v3606 = vunpack.c.0.s8 %v3605
        %v3607 = vlaneseq
        %v3608 = vshrl.u32 %v3607, 7
        %v3609 = vsub.s32 %v3606, %v3608
        %v3610 = vrot.slane %v3596, %v3609
        %v3611 = vcombine.low %v3555, %v3587
        %v3612 = vcombine.high %v3555, %v3587
        %v3613 = vcombine.low %v3562, %v3594
        %v3614 = vcombine.high %v3562, %v3594
        %v3615 = vcombine.low %v3571, %v3603
        %v3616 = vcombine.high %v3571, %v3603
        %v3617 = vcombine.low %v3578, %v3610
        %v3618 = vcombine.high %v3578, %v3610
        %v3619 = vcombine.low %v3475, %v3477
        %v3620 = vcombine.high %v3475, %v3477
        %v3622 = vunpack.c.l.s4 1983009808
        %v3623 = vunpack.c.0.s8 %v3622
        %v3624 = vlaneseq
        %v3625 = vshrl.u32 %v3624, 7
        %v3626 = vsub.s32 %v3623, %v3625
        %v3627 = vrot.slane %v3619, %v3626
        %v3629 = vunpack.c.l.s4 1983009808
        %v3630 = vunpack.c.0.s8 %v3629
        %v3631 = vlaneseq
        %v3632 = vshrl.u32 %v3631, 7
        %v3633 = vsub.s32 %v3630, %v3632
        %v3634 = vrot.slane %v3620, %v3633
        %v3635 = vcombine.low %v3476, %v3478
        %v3636 = vcombine.high %v3476, %v3478
        %v3638 = vunpack.c.l.s4 1983009808
        %v3639 = vunpack.c.0.s8 %v3638
        %v3640 = vlaneseq
        %v3641 = vshrl.u32 %v3640, 7
        %v3642 = vsub.s32 %v3639, %v3641
        %v3643 = vrot.slane %v3635, %v3642
        %v3645 = vunpack.c.l.s4 1983009808
        %v3646 = vunpack.c.0.s8 %v3645
        %v3647 = vlaneseq
        %v3648 = vshrl.u32 %v3647, 7
        %v3649 = vsub.s32 %v3646, %v3648
        %v3650 = vrot.slane %v3636, %v3649
        %v3651 = vcombine.low %v3479, %v3481
        %v3652 = vcombine.high %v3479, %v3481
        %v3654 = vunpack.c.l.s4 1983009808
        %v3655 = vunpack.c.0.s8 %v3654
        %v3656 = vlaneseq
        %v3657 = vshrl.u32 %v3656, 7
        %v3658 = vsub.s32 %v3655, %v3657
        %v3659 = vrot.slane %v3651, %v3658
        %v3661 = vunpack.c.l.s4 1983009808
        %v3662 = vunpack.c.0.s8 %v3661
        %v3663 = vlaneseq
        %v3664 = vshrl.u32 %v3663, 7
        %v3665 = vsub.s32 %v3662, %v3664
        %v3666 = vrot.slane %v3652, %v3665
        %v3667 = vcombine.low %v3480, %v3482
        %v3668 = vcombine.high %v3480, %v3482
        %v3670 = vunpack.c.l.s4 1983009808
        %v3671 = vunpack.c.0.s8 %v3670
        %v3672 = vlaneseq
        %v3673 = vshrl.u32 %v3672, 7
        %v3674 = vsub.s32 %v3671, %v3673
        %v3675 = vrot.slane %v3667, %v3674
        %v3677 = vunpack.c.l.s4 1983009808
        %v3678 = vunpack.c.0.s8 %v3677
        %v3679 = vlaneseq
        %v3680 = vshrl.u32 %v3679, 7
        %v3681 = vsub.s32 %v3678, %v3680
        %v3682 = vrot.slane %v3668, %v3681
        %v3683 = vcombine.low %v3627, %v3643
        %v3684 = vcombine.high %v3627, %v3643
        %v3686 = vunpack.c.l.s4 1934713408
        %v3687 = vunpack.c.0.s8 %v3686
        %v3688 = vlaneseq
        %v3689 = vshrl.u32 %v3688, 7
        %v3690 = vsub.s32 %v3687, %v3689
        %v3691 = vrot.slane %v3683, %v3690
        %v3693 = vunpack.c.l.s4 1934713408
        %v3694 = vunpack.c.0.s8 %v3693
        %v3695 = vlaneseq
        %v3696 = vshrl.u32 %v3695, 7
        %v3697 = vsub.s32 %v3694, %v3696
        %v3698 = vrot.slane %v3684, %v3697
        %v3699 = vcombine.low %v3634, %v3650
        %v3700 = vcombine.high %v3634, %v3650
        %v3702 = vunpack.c.l.s4 1934713408
        %v3703 = vunpack.c.0.s8 %v3702
        %v3704 = vlaneseq
        %v3705 = vshrl.u32 %v3704, 7
        %v3706 = vsub.s32 %v3703, %v3705
        %v3707 = vrot.slane %v3699, %v3706
        %v3709 = vunpack.c.l.s4 1934713408
        %v3710 = vunpack.c.0.s8 %v3709
        %v3711 = vlaneseq
        %v3712 = vshrl.u32 %v3711, 7
        %v3713 = vsub.s32 %v3710, %v3712
        %v3714 = vrot.slane %v3700, %v3713
        %v3715 = vcombine.low %v3659, %v3675
        %v3716 = vcombine.high %v3659, %v3675
        %v3718 = vunpack.c.l.s4 1934713408
        %v3719 = vunpack.c.0.s8 %v3718
        %v3720 = vlaneseq
        %v3721 = vshrl.u32 %v3720, 7
        %v3722 = vsub.s32 %v3719, %v3721
        %v3723 = vrot.slane %v3715, %v3722
        %v3725 = vunpack.c.l.s4 1934713408
        %v3726 = vunpack.c.0.s8 %v3725
        %v3727 = vlaneseq
        %v3728 = vshrl.u32 %v3727, 7
        %v3729 = vsub.s32 %v3726, %v3728
        %v3730 = vrot.slane %v3716, %v3729
        %v3731 = vcombine.low %v3666, %v3682
        %v3732 = vcombine.high %v3666, %v3682
        %v3734 = vunpack.c.l.s4 1934713408
        %v3735 = vunpack.c.0.s8 %v3734
        %v3736 = vlaneseq
        %v3737 = vshrl.u32 %v3736, 7
        %v3738 = vsub.s32 %v3735, %v3737
        %v3739 = vrot.slane %v3731, %v3738
        %v3741 = vunpack.c.l.s4 1934713408
        %v3742 = vunpack.c.0.s8 %v3741
        %v3743 = vlaneseq
        %v3744 = vshrl.u32 %v3743, 7
        %v3745 = vsub.s32 %v3742, %v3744
        %v3746 = vrot.slane %v3732, %v3745
        %v3747 = vcombine.low %v3691, %v3723
        %v3748 = vcombine.high %v3691, %v3723
        %v3749 = vcombine.low %v3698, %v3730
        %v3750 = vcombine.high %v3698, %v3730
        %v3751 = vcombine.low %v3707, %v3739
        %v3752 = vcombine.high %v3707, %v3739
        %v3753 = vcombine.low %v3714, %v3746
        %v3754 = vcombine.high %v3714, %v3746
        %v3755 = vcombine.low %v3611, %v3613
        %v3756 = vcombine.high %v3611, %v3613
        %v3758 = vunpack.c.l.s4 1983009808
        %v3759 = vunpack.c.0.s8 %v3758
        %v3760 = vlaneseq
        %v3761 = vshrl.u32 %v3760, 7
        %v3762 = vsub.s32 %v3759, %v3761
        %v3763 = vrot.slane %v3755, %v3762
        %v3765 = vunpack.c.l.s4 1983009808
        %v3766 = vunpack.c.0.s8 %v3765
        %v3767 = vlaneseq
        %v3768 = vshrl.u32 %v3767, 7
        %v3769 = vsub.s32 %v3766, %v3768
        %v3770 = vrot.slane %v3756, %v3769
        %v3771 = vcombine.low %v3612, %v3614
        %v3772 = vcombine.high %v3612, %v3614
        %v3774 = vunpack.c.l.s4 1983009808
        %v3775 = vunpack.c.0.s8 %v3774
        %v3776 = vlaneseq
        %v3777 = vshrl.u32 %v3776, 7
        %v3778 = vsub.s32 %v3775, %v3777
        %v3779 = vrot.slane %v3771, %v3778
        %v3781 = vunpack.c.l.s4 1983009808
        %v3782 = vunpack.c.0.s8 %v3781
        %v3783 = vlaneseq
        %v3784 = vshrl.u32 %v3783, 7
        %v3785 = vsub.s32 %v3782, %v3784
        %v3786 = vrot.slane %v3772, %v3785
        %v3787 = vcombine.low %v3615, %v3617
        %v3788 = vcombine.high %v3615, %v3617
        %v3790 = vunpack.c.l.s4 1983009808
        %v3791 = vunpack.c.0.s8 %v3790
        %v3792 = vlaneseq
        %v3793 = vshrl.u32 %v3792, 7
        %v3794 = vsub.s32 %v3791, %v3793
        %v3795 = vrot.slane %v3787, %v3794
        %v3797 = vunpack.c.l.s4 1983009808
        %v3798 = vunpack.c.0.s8 %v3797
        %v3799 = vlaneseq
        %v3800 = vshrl.u32 %v3799, 7
        %v3801 = vsub.s32 %v3798, %v3800
        %v3802 = vrot.slane %v3788, %v3801
        %v3803 = vcombine.low %v3616, %v3618
        %v3804 = vcombine.high %v3616, %v3618
        %v3806 = vunpack.c.l.s4 1983009808
        %v3807 = vunpack.c.0.s8 %v3806
        %v3808 = vlaneseq
        %v3809 = vshrl.u32 %v3808, 7
        %v3810 = vsub.s32 %v3807, %v3809
        %v3811 = vrot.slane %v3803, %v3810
        %v3813 = vunpack.c.l.s4 1983009808
        %v3814 = vunpack.c.0.s8 %v3813
        %v3815 = vlaneseq
        %v3816 = vshrl.u32 %v3815, 7
        %v3817 = vsub.s32 %v3814, %v3816
        %v3818 = vrot.slane %v3804, %v3817
        %v3819 = vcombine.low %v3763, %v3779
        %v3820 = vcombine.high %v3763, %v3779
        %v3822 = vunpack.c.l.s4 1934713408
        %v3823 = vunpack.c.0.s8 %v3822
        %v3824 = vlaneseq
        %v3825 = vshrl.u32 %v3824, 7
        %v3826 = vsub.s32 %v3823, %v3825
        %v3827 = vrot.slane %v3819, %v3826
        %v3829 = vunpack.c.l.s4 1934713408
        %v3830 = vunpack.c.0.s8 %v3829
        %v3831 = vlaneseq
        %v3832 = vshrl.u32 %v3831, 7
        %v3833 = vsub.s32 %v3830, %v3832
        %v3834 = vrot.slane %v3820, %v3833
        %v3835 = vcombine.low %v3770, %v3786
        %v3836 = vcombine.high %v3770, %v3786
        %v3838 = vunpack.c.l.s4 1934713408
        %v3839 = vunpack.c.0.s8 %v3838
        %v3840 = vlaneseq
        %v3841 = vshrl.u32 %v3840, 7
        %v3842 = vsub.s32 %v3839, %v3841
        %v3843 = vrot.slane %v3835, %v3842
        %v3845 = vunpack.c.l.s4 1934713408
        %v3846 = vunpack.c.0.s8 %v3845
        %v3847 = vlaneseq
        %v3848 = vshrl.u32 %v3847, 7
        %v3849 = vsub.s32 %v3846, %v3848
        %v3850 = vrot.slane %v3836, %v3849
        %v3851 = vcombine.low %v3795, %v3811
        %v3852 = vcombine.high %v3795, %v3811
        %v3854 = vunpack.c.l.s4 1934713408
        %v3855 = vunpack.c.0.s8 %v3854
        %v3856 = vlaneseq
        %v3857 = vshrl.u32 %v3856, 7
        %v3858 = vsub.s32 %v3855, %v3857
        %v3859 = vrot.slane %v3851, %v3858
        %v3861 = vunpack.c.l.s4 1934713408
        %v3862 = vunpack.c.0.s8 %v3861
        %v3863 = vlaneseq
        %v3864 = vshrl.u32 %v3863, 7
        %v3865 = vsub.s32 %v3862, %v3864
        %v3866 = vrot.slane %v3852, %v3865
        %v3867 = vcombine.low %v3802, %v3818
        %v3868 = vcombine.high %v3802, %v3818
        %v3870 = vunpack.c.l.s4 1934713408
        %v3871 = vunpack.c.0.s8 %v3870
        %v3872 = vlaneseq
        %v3873 = vshrl.u32 %v3872, 7
        %v3874 = vsub.s32 %v3871, %v3873
        %v3875 = vrot.slane %v3867, %v3874
        %v3877 = vunpack.c.l.s4 1934713408
        %v3878 = vunpack.c.0.s8 %v3877
        %v3879 = vlaneseq
        %v3880 = vshrl.u32 %v3879, 7
        %v3881 = vsub.s32 %v3878, %v3880
        %v3882 = vrot.slane %v3868, %v3881
        %v3883 = vcombine.low %v3827, %v3859
        %v3884 = vcombine.high %v3827, %v3859
        %v3885 = vcombine.low %v3834, %v3866
        %v3886 = vcombine.high %v3834, %v3866
        %v3887 = vcombine.low %v3843, %v3875
        %v3888 = vcombine.high %v3843, %v3875
        %v3889 = vcombine.low %v3850, %v3882
        %v3890 = vcombine.high %v3850, %v3882
        %3893 = vrot.lane.b32.xlu0 %v3748, 16
        %v3894 = vpop.permute.xlu0 %3893
        %3895 = vrot.lane.b32.xlu0 %v3884, 16
        %v3896 = vpop.permute.xlu0 %3895
        %3901 = vrot.lane.b32.xlu0 %v3749, 32
        %v3902 = vpop.permute.xlu0 %3901
        %3903 = vrot.lane.b32.xlu0 %v3885, 32
        %v3904 = vpop.permute.xlu0 %3903
        %3909 = vrot.lane.b32.xlu0 %v3750, 48
        %v3910 = vpop.permute.xlu0 %3909
        %3911 = vrot.lane.b32.xlu0 %v3886, 48
        %v3912 = vpop.permute.xlu0 %3911
        %3917 = vrot.lane.b32.xlu0 %v3751, 64
        %v3918 = vpop.permute.xlu0 %3917
        %3919 = vrot.lane.b32.xlu0 %v3887, 64
        %v3920 = vpop.permute.xlu0 %3919
        %3925 = vrot.lane.b32.xlu0 %v3752, 80
        %v3926 = vpop.permute.xlu0 %3925
        %3927 = vrot.lane.b32.xlu0 %v3888, 80
        %v3928 = vpop.permute.xlu0 %3927
        %3933 = vrot.lane.b32.xlu0 %v3753, 96
        %v3934 = vpop.permute.xlu0 %3933
        %3935 = vrot.lane.b32.xlu0 %v3889, 96
        %v3936 = vpop.permute.xlu0 %3935
        %3941 = vrot.lane.b32.xlu0 %v3754, 112
        %v3942 = vpop.permute.xlu0 %3941
        %3943 = vrot.lane.b32.xlu0 %v3890, 112
        %v3944 = vpop.permute.xlu0 %3943
        %v3947 = vsel %vm2426, %v3747, %v3894
        %v3948 = vsel %vm2426, %v3883, %v3896
        %vm3949 = vcmask 261120
        %v3950 = vsel %vm3949, %v3947, %v3902
        %v3951 = vsel %vm3949, %v3948, %v3904
        %vm3952 = vcmask 392192
        %v3953 = vsel %vm3952, %v3950, %v3910
        %v3954 = vsel %vm3952, %v3951, %v3912
        %vm3955 = vcmask 523264
        %v3956 = vsel %vm3955, %v3953, %v3918
        %v3957 = vsel %vm3955, %v3954, %v3920
        %vm3958 = vcmask 654336
        %v3959 = vsel %vm3958, %v3956, %v3926
        %v3960 = vsel %vm3958, %v3957, %v3928
        %vm3961 = vcmask 785408
        %v3962 = vsel %vm3961, %v3959, %v3934
        %v3963 = vsel %vm3961, %v3960, %v3936
        %vm3964 = vcmask 916480
        %v3965 = vsel %vm3964, %v3962, %v3942
        %v3966 = vsel %vm3964, %v3963, %v3944
        %v3967 = vpack.c.bf16 %v3966, %v3965
        %v3968 = vld [vmem:[#allocation10] sm:$0xf]
        %v3969 = vld [vmem:[#allocation10 + $0x4] sm:$0xf]
        %v3970 = vld [vmem:[#allocation10 + $0x8] sm:$0xf]
        %v3971 = vld [vmem:[#allocation10 + $0xc] sm:$0xf]
        %v3972 = vld [vmem:[#allocation10 + $0x10] sm:$0xf]
        %v3973 = vld [vmem:[#allocation10 + $0x14] sm:$0xf]
        %v3974 = vld [vmem:[#allocation10 + $0x18] sm:$0xf]
        %v3975 = vld [vmem:[#allocation10 + $0x1c] sm:$0xf]
        %v3976 = vld [vmem:[#allocation10 + $0x20] sm:$0xf]
        %v3977 = vld [vmem:[#allocation10 + $0x24] sm:$0xf]
        %v3978 = vld [vmem:[#allocation10 + $0x28] sm:$0xf]
        %v3979 = vld [vmem:[#allocation10 + $0x2c] sm:$0xf]
        %v3980 = vld [vmem:[#allocation10 + $0x30] sm:$0xf]
        %v3981 = vld [vmem:[#allocation10 + $0x34] sm:$0xf]
        %v3982 = vld [vmem:[#allocation10 + $0x38] sm:$0xf]
        %v3983 = vld [vmem:[#allocation10 + $0x3c] sm:$0xf]
        %v3984 = vld [vmem:[%s4] sm:$0x1]
        %v3986 = vlaneseq
        %v3987 = vshrl.u32 %v3986, 7
        %v3988 = vsub.s32 0, %v3987
        %v3989 = vrot.slane %v3984, %v3988
        %v4007 = vunpack.c.l.b16 %v3968
        %v4008 = vunpack.c.l.b16 %v3969
        %v4009 = vunpack.c.l.b16 %v3970
        %v4010 = vunpack.c.l.b16 %v3971
        %v4011 = vunpack.c.l.b16 %v3972
        %v4012 = vunpack.c.l.b16 %v3973
        %v4013 = vunpack.c.l.b16 %v3974
        %v4014 = vunpack.c.l.b16 %v3975
        %v4015 = vunpack.c.l.b16 %v3976
        %v4016 = vunpack.c.l.b16 %v3977
        %v4017 = vunpack.c.l.b16 %v3978
        %v4018 = vunpack.c.l.b16 %v3979
        %v4019 = vunpack.c.l.b16 %v3980
        %v4020 = vunpack.c.l.b16 %v3981
        %v4021 = vunpack.c.l.b16 %v3982
        %v4022 = vunpack.c.l.b16 %v3983
        %v4023 = vpack.c.b16 %v4008, %v4007
        %v4024 = vpack.c.b16 %v4010, %v4009
        %v4025 = vpack.c.b16 %v4012, %v4011
        %v4026 = vpack.c.b16 %v4014, %v4013
        %v4027 = vpack.c.b16 %v4016, %v4015
        %v4028 = vpack.c.b16 %v4018, %v4017
        %v4029 = vpack.c.b16 %v4020, %v4019
        %v4030 = vpack.c.b16 %v4022, %v4021
        %4039 = vmatprep.subr.bf16.mxu0 0
        %4040 = vmatpush1.bf16.msra.mxu0 %v4023
        %4041 = vmatprep.subr.bf16.mxu0 0
        %4042 = vmatpush1.bf16.msra.mxu0 %v4024
        %4043 = vmatprep.subr.bf16.mxu0 0
        %4044 = vmatpush1.bf16.msra.mxu0 %v4025
        %4045 = vmatprep.subr.bf16.mxu0 0
        %4046 = vmatpush1.bf16.msra.mxu0 %v4026
        %4047 = vmatprep.subr.bf16.mxu0 0
        %4048 = vmatpush1.bf16.msra.mxu0 %v4027
        %4049 = vmatprep.subr.bf16.mxu0 0
        %4050 = vmatpush1.bf16.msra.mxu0 %v4028
        %4051 = vmatprep.subr.bf16.mxu0 0
        %4052 = vmatpush1.bf16.msra.mxu0 %v4029
        %4053 = vmatprep.subr.bf16.mxu0 0
        %4054 = vmatpush1.bf16.msra.mxu0 %v4030
        %4055 = vmatprep.subr.bf16.mxu0 0
        %4056 = vmatpush1.bf16.msra.mxu0 0
        %4057 = vmatprep.subr.bf16.mxu0 0
        %4058 = vmatpush1.bf16.msra.mxu0 0
        %4059 = vmatprep.subr.bf16.mxu0 0
        %4060 = vmatpush1.bf16.msra.mxu0 0
        %4061 = vmatprep.subr.bf16.mxu0 0
        %4062 = vmatpush1.bf16.msra.mxu0 0
        %4063 = vmatprep.subr.bf16.mxu0 0
        %4064 = vmatpush1.bf16.msra.mxu0 0
        %4065 = vmatprep.subr.bf16.mxu0 0
        %4066 = vmatpush1.bf16.msra.mxu0 0
        %4067 = vmatprep.subr.bf16.mxu0 0
        %4068 = vmatpush1.bf16.msra.mxu0 0
        %4069 = vmatprep.subr.bf16.mxu0 0
        %4070 = vmatpush1.bf16.msra.mxu0 0
        %4071 = vmatprep.mubr.bf16.mxu0 0
        %4072 = vmatmul.mubr.bf16.gmra.mrb[0].mxu0 %v3967
        %v4073 = vpop.f32.mrb[0].mxu0
        %v4074 = vadd.f32 %v3989, %v4073
        %v4075 = vpop.f32.mrb[0].mxu0
        %v4076 = vpop.f32.mrb[0].mxu0
        %v4077 = vadd.f32 %v3989, %v4076
        %v4078 = vpop.f32.mrb[0].mxu0
        %4079 = vdwg.mxu0
        %v4080 = vadd.f32 %v1714, %v4074
        %v4081 = vadd.f32 %v1715, %v4077
        %4082 = vadd.xlane.f32.xlu0 %v4080
        %v4083 = vpop.xlane.xlu0 %4082
        %4084 = vadd.xlane.f32.xlu0 %v4081
        %v4085 = vpop.xlane.xlu0 %4084
        %v4086 = vrcp.pop 128.0
        %v4087 = vmul.f32 %v4083, %v4086
        %v4088 = vmul.f32 %v4085, %v4086
        %v4089 = vsub.f32 %v4080, %v4087
        %v4090 = vsub.f32 %v4081, %v4088
        %v4091 = vmul.f32 %v4089, %v4089
        %v4092 = vmul.f32 %v4090, %v4090
        %4093 = vadd.xlane.f32.xlu0 %v4091
        %v4094 = vpop.xlane.xlu0 %4093
        %4095 = vadd.xlane.f32.xlu0 %v4092
        %v4096 = vpop.xlane.xlu0 %4095
        %v4097 = vrcp.pop 127.0
        %v4098 = vmul.f32 %v4094, %v4097
        %v4099 = vmul.f32 %v4096, %v4097
        %v4100 = vrsqrt.pop %v4098
        %v4101 = vmul.f32 %v4098, %v4100
        %vm4102 = vcmp.eq.f32.partialorder %v4098, inf
        %v4103 = vsel %vm4102, %v4098, %v4101
        %vm4104 = vcmp.eq.f32.partialorder %v4098, 0.0
        %v4105 = vand.u32 %v4098, 2147483648
        %v4106 = vsel %vm4104, %v4105, %v4103
        %v4107 = vrsqrt.pop %v4099
        %v4108 = vmul.f32 %v4099, %v4107
        %vm4109 = vcmp.eq.f32.partialorder %v4099, inf
        %v4110 = vsel %vm4109, %v4099, %v4108
        %vm4111 = vcmp.eq.f32.partialorder %v4099, 0.0
        %v4112 = vand.u32 %v4099, 2147483648
        %v4113 = vsel %vm4111, %v4112, %v4110
        %v4114 = vadd.f32 %v4106, 1e-06
        %v4115 = vadd.f32 %v4113, 1e-06
        %v4116 = vrcp.pop %v4114
        %v4117 = vmul.f32 1.0, %v4116
        %v4118 = vrcp.pop %v4115
        %v4119 = vmul.f32 1.0, %v4118
        %v4120 = vld [vmem:[%s5] sm:$0x1]
        %v4121 = vmul.f32 %v4089, %v4117
        %v4122 = vmul.f32 %v4090, %v4119
        %v4124 = vlaneseq
        %v4125 = vshrl.u32 %v4124, 7
        %v4126 = vsub.s32 0, %v4125
        %v4127 = vrot.slane %v4120, %v4126
        %v4129 = vmul.f32 %v4127, %v4121
        %v4130 = vmul.f32 %v4127, %v4122
        %v4131 = vld [vmem:[%s6] sm:$0x1]
        %v4133 = vlaneseq
        %v4134 = vshrl.u32 %v4133, 7
        %v4135 = vsub.s32 0, %v4134
        %v4136 = vrot.slane %v4131, %v4135
        %v4138 = vadd.f32 %v4129, %v4136
        %v4139 = vadd.f32 %v4130, %v4136
        %4140 = vst [vmem:[%s354] sm:$0xff] %v4138
        %4141 = vst [vmem:[%s354 + $0x8] sm:$0xff] %v4139
        %s4142 = sand.u32 %s200, 1
        %s4143 = scalar_lea.sflag [#allocation6], %s4142
        %s4144 = sand.u32 %s200, 1
        %s4145 = smul.addr %s4144, 16
        %s4146 = scalar_lea.vmem [#allocation12], %s4145
        // Predicated region
        $region69: #{tpu_custom_call.1} parent=47 // pred_check
          %p4147 = pneg %p210
        $region70: #{tpu_custom_call.1} parent=47 // pred_check_branch
          %4149 = sbr.rel (%p4147) target = $region72
        $region71: #{tpu_custom_call.1} parent=47 // pred_region
          %s4150 = smul.u32 2, %s31
          %s4152 = ssub.s32 256, 256
          %4153 = vsyncadd %s4143, %s4152
          %s4154 = smul.addr %s30, 2
          %s4155 = sadd.s32 %s4150, %s4154
          %s4156 = smul.addr %s4155, 128
          %s4157 = scalar_lea.hbm %s7, %s4156
          %s4158 = sshll.u32 %s4146, 4
          %s4159 = int_to_ptr.vmem [resolvable:$true] %s4158
          %4164 = dma.vmem_to_hbm [thread:$0]  %s4159, 256, %s4157, %s4143, 128, 128, 8
        $region72: #{tpu_custom_call.1} parent=47 // pred_fallthru
          _
      $region48: #{tpu_custom_call.1} parent=5 // pred_fallthru
        _
      %p4165 = scmp.le.s32.totalorder 2, %s21
      // Predicated region
      $region73: #{tpu_custom_call.1} parent=5 // pred_check
        %p4166 = pneg %p4165
      $region74: #{tpu_custom_call.1} parent=5 // pred_check_branch
        %4168 = sbr.rel (%p4166) target = $region76
      $region75: #{tpu_custom_call.1} parent=5 // pred_region
        %s4169 = ssub.s32 %s21, 2
        // Predicated region
        $region77: #{tpu_custom_call.1} parent=75 // pred_check
          %p4170 = pneg %p216
        $region78: #{tpu_custom_call.1} parent=75 // pred_check_branch
          %4172 = sbr.rel (%p4170) target = $region80
        $region79: #{tpu_custom_call.1} parent=75 // pred_region
          %s4173 = sand.u32 %s201, 1
          %s4174 = scalar_lea.sflag [#allocation6], %s4173
          %s4175 = sand.u32 %s201, 1
          %s4176 = smul.addr %s4175, 16
          %s4177 = scalar_lea.vmem [#allocation12], %s4176
          %4178 = dma.done %s4174, 256
        $region80: #{tpu_custom_call.1} parent=75 // pred_fallthru
          _
      $region76: #{tpu_custom_call.1} parent=5 // pred_fallthru
        _
    $region6: #{tpu_custom_call.1} parent=1 // loop_footer
      %s25 = sadd.s32 1, %s21
    $region7: #{tpu_custom_call.1} parent=1 // loop_footer_branch
      %20 = sbr.rel target = $region3
    $region8: #{tpu_custom_call.1} parent=1 // loop_exit
      _
    %4179 = vsyncpa [#allocation5], 1
    %s4180 = scalar_lea.sflag [#allocation5], 1
    %4181 = vsyncpa %s4180, 1
    %4182 = vsyncpa [#allocation8], 1
    %4183 = vsyncpa [#allocation11], 1
    %4184 = vsyncpa [#allocation6], 1
    %s4185 = scalar_lea.sflag [#allocation6], 1
    %4186 = vsyncpa %s4185, 1

</llo_original>
